<compile_context>
chip_gen: v7x
topology: tpu7x:2x2x1
jax: 0.10.0
libtpu: 0.0.40
codegen_flags: <defaults>
</compile_context>

<pallas_src>
import functools

import jax
import jax.numpy as jnp
import numpy as np
from jax.experimental import pallas as pl
from jax.experimental.pallas import tpu as pltpu

_LANE = 128
_TARGET_BLOCK_BYTES = 4 << 20     # ~4 MiB per block (3 arrays x 2 bufs = 24 MiB VMEM)
_MIN_PALLAS_BYTES = 2 << 20       # below this, the fused XLA op is strictly faster
_VMEM_LIMIT_BYTES = 32 << 20      # explicit so v5e (16 MiB default) also compiles


def _min_sublane(dtype) -> int:
    """Minimum sublane multiple for the TPU tile of this dtype."""
    return {4: 8, 2: 16, 1: 32}.get(jnp.dtype(dtype).itemsize, 8)


def _round_up(x: int, m: int) -> int:
    return -(-x // m) * m


def _choose_tile_rows(rows: int, itemsize: int, sub: int) -> int:
    """Byte-based tile: ~_TARGET_BLOCK_BYTES per block, sublane-aligned."""
    tr = max(sub, (_TARGET_BLOCK_BYTES // (_LANE * itemsize)) // sub * sub)
    if tr >= rows:
        # Array fits in one block: split roughly in half so both v7x
        # TensorCores get work (grid >= 2).  Tiny arrays stay single-block.
        half = _round_up(-(-rows // 2), sub)
        tr = half if half < rows else rows
    return tr


def _adaptive2_kernel(w_ref, d_ref, o_ref, *, scale):
    # scale is a static Python float -> compile-time scalar constant.
    d = d_ref[...].astype(jnp.float32)
    w = w_ref[...].astype(jnp.float32)
    o_ref[...] = (w + scale * d * d).astype(o_ref.dtype)


def loss_adaptive2_forward(res_w, difference, epoch, *, lr=1e-4,
                           min_pallas_bytes=_MIN_PALLAS_BYTES):
    """Functional forward of Loss_Adaptive2.

    `epoch` must be a static Python int (it selects a code path, matching the
    PyTorch `if epoch >= 2000:`).  Returns the (possibly updated) res_w; the
    caller carries this state forward (JAX has no in-place module attribute).
    """
    res_w = jnp.asarray(res_w)
    difference = jnp.asarray(difference)

    if int(epoch) < 2000:
        # detach().clone() is a no-op functionally.
        return res_w

    total = int(difference.size)
    # Gradient of mean() folded into a single static scalar: lr / N.
    scale = float(lr) / float(total)
    itemsize = jnp.dtype(res_w.dtype).itemsize

    if total * itemsize < int(min_pallas_bytes):
        # Tiny arrays: pallas_call fixed launch/DMA-setup cost dominates.
        return res_w + scale * jnp.square(difference)

    w_flat = res_w.reshape(-1)
    d_flat = difference.reshape(-1)

    # Zero-pad to a lane multiple; pad contributes 0 to d*d so it is exact,
    # and the padded tail is sliced away below.
    pad = (-total) % _LANE
    if pad:
        w_flat = jnp.concatenate([w_flat, jnp.zeros((pad,), res_w.dtype)])
        d_flat = jnp.concatenate([d_flat, jnp.zeros((pad,), difference.dtype)])

    rows = (total + pad) // _LANE
    sub = _min_sublane(res_w.dtype)
    tile_rows = _choose_tile_rows(rows, itemsize, sub)
    grid = (pl.cdiv(rows, tile_rows),)   # ragged last block handled by Pallas

    w2d = w_flat.reshape(rows, _LANE)
    d2d = d_flat.reshape(rows, _LANE)

    kernel = functools.partial(_adaptive2_kernel, scale=scale)
    out = pl.pallas_call(
        kernel,
        out_shape=jax.ShapeDtypeStruct((rows, _LANE), res_w.dtype),
        grid=grid,
        in_specs=[
            pl.BlockSpec((tile_rows, _LANE), lambda i: (i, 0)),
            pl.BlockSpec((tile_rows, _LANE), lambda i: (i, 0)),
        ],
        out_specs=pl.BlockSpec((tile_rows, _LANE), lambda i: (i, 0)),
        input_output_aliases={0: 0},     # res_w updated "in place"
        cost_estimate=pl.CostEstimate(
            flops=2 * total,
            transcendentals=0,
            bytes_accessed=3 * total * itemsize),
        compiler_params=pltpu.CompilerParams(
            dimension_semantics=("parallel",),
            vmem_limit_bytes=_VMEM_LIMIT_BYTES),
    )(w2d, d2d)

    out_flat = out.reshape(-1)
    if pad:
        out_flat = out_flat[:total]
    return out_flat.reshape(res_w.shape)


def loss_adaptive2_ref(res_w, difference, epoch, *, lr=1e-4):
    """Pure-JAX reference matching the PyTorch module math exactly."""
    if int(epoch) < 2000:
        return res_w
    n = difference.size
    grads_res = jnp.square(difference) * (1.0 / n)   # d mean(w*d^2) / d w
    return res_w + lr * grads_res


if __name__ == "__main__":
    key = jax.random.PRNGKey(0)
    k1, k2, k3 = jax.random.split(key, 3)

    # 1) Small conv-style shape (typical module usage): hits the small-size
    #    bailout (fused XLA), plus the epoch < 2000 pass-through branch.
    shape_small = (2, 4, 16, 16)
    res_w_small = jnp.ones(shape_small, jnp.float32)
    diff_small = jax.random.normal(k1, shape_small, dtype=jnp.float32)

    out_small = jax.block_until_ready(
        loss_adaptive2_forward(res_w_small, diff_small, epoch=2500))
    np.testing.assert_allclose(
        np.asarray(out_small),
        np.asarray(loss_adaptive2_ref(res_w_small, diff_small, epoch=2500)),
        rtol=1e-5, atol=1e-6)

    out_noop = jax.block_until_ready(
        loss_adaptive2_forward(res_w_small, diff_small, epoch=100))
    np.testing.assert_allclose(np.asarray(out_noop), np.asarray(res_w_small))

    # 2) Larger residual field (4 MiB f32): the real Pallas path with a
    #    multi-block "parallel" grid (>= 2 blocks for v7x megacore).
    shape_big = (8, 32, 64, 64)
    res_w_big = jnp.ones(shape_big, jnp.float32)
    diff_big = jax.random.normal(k2, shape_big, dtype=jnp.float32)

    out_big = jax.block_until_ready(
        loss_adaptive2_forward(res_w_big, diff_big, epoch=3000))
    np.testing.assert_allclose(
        np.asarray(out_big),
        np.asarray(loss_adaptive2_ref(res_w_big, diff_big, epoch=3000)),
        rtol=1e-5, atol=1e-6)

    # 3) Non-128-divisible size (64*3*7*7 = 9408 elems, a common conv-weight
    #    shape), forced through the Pallas path to exercise zero-padding.
    shape_odd = (64, 3, 7, 7)
    res_w_odd = jnp.ones(shape_odd, jnp.float32)
    diff_odd = jax.random.normal(k3, shape_odd, dtype=jnp.float32)

    out_odd = jax.block_until_ready(
        loss_adaptive2_forward(res_w_odd, diff_odd, epoch=2000,
                               min_pallas_bytes=0))
    np.testing.assert_allclose(
        np.asarray(out_odd),
        np.asarray(loss_adaptive2_ref(res_w_odd, diff_odd, epoch=2000)),
        rtol=1e-5, atol=1e-6)

    print("KERNEL_OK")
</pallas_src>

<mosaic_0001>
module attributes {stable_mosaic.version = 11 : i64} {
  func.func @_adaptive2_kernel(%arg0: i32, %arg1: memref<4096x128xf32, #tpu.memory_space<vmem>>, %arg2: memref<4096x128xf32, #tpu.memory_space<vmem>>, %arg3: memref<4096x128xf32, #tpu.memory_space<vmem>>) attributes {dimension_semantics = [#tpu.dimension_semantics<parallel>], iteration_bounds = array<i64: 2>, scalar_prefetch = 0 : i64, scratch_operands = 0 : i64, tpu.core_type = #tpu.core_type<tc>, window_params = [{transform_indices = @transform_0, window_bounds = array<i64: 4096, 128>}, {transform_indices = @transform_1, window_bounds = array<i64: 4096, 128>}, {transform_indices = @transform_2, window_bounds = array<i64: 4096, 128>}]} {
    %c0 = arith.constant 0 : index
    %c0_0 = arith.constant 0 : index
    %0 = vector.load %arg2[%c0, %c0_0] : memref<4096x128xf32, #tpu.memory_space<vmem>>, vector<4096x128xf32>
    %c0_1 = arith.constant 0 : index
    %c0_2 = arith.constant 0 : index
    %1 = vector.load %arg1[%c0_1, %c0_2] : memref<4096x128xf32, #tpu.memory_space<vmem>>, vector<4096x128xf32>
    %cst = arith.constant 9.53674292E-11 : f32
    %2 = vector.broadcast %cst : f32 to vector<4096x128xf32>
    %3 = arith.mulf %2, %0 : vector<4096x128xf32>
    %4 = arith.mulf %3, %0 : vector<4096x128xf32>
    %5 = arith.addf %1, %4 : vector<4096x128xf32>
    %c0_3 = arith.constant 0 : index
    %c0_4 = arith.constant 0 : index
    %6 = vector.load %arg3[%c0_3, %c0_4] : memref<4096x128xf32, #tpu.memory_space<vmem>>, vector<4096x128xf32>
    tpu.vector_store %arg3[%c0_3, %c0_4], %5 {strides = array<i32>} : memref<4096x128xf32, #tpu.memory_space<vmem>>, vector<4096x128xf32>,
    return
  }
  func.func @transform_0(%arg0: i32) -> (i32, i32) {
    %c0_i32 = arith.constant 0 : i32
    %c0_i32_0 = arith.constant 0 : i32
    return %arg0, %c0_i32 : i32, i32
  }
  func.func @transform_1(%arg0: i32) -> (i32, i32) {
    %c0_i32 = arith.constant 0 : i32
    %c0_i32_0 = arith.constant 0 : i32
    return %arg0, %c0_i32 : i32, i32
  }
  func.func @transform_2(%arg0: i32) -> (i32, i32) {
    %c0_i32 = arith.constant 0 : i32
    %c0_i32_0 = arith.constant 0 : i32
    return %arg0, %c0_i32 : i32, i32
  }
}

</mosaic_0001>

<llo_original>
// kernel: tpu_custom_call.1
$region0: #{tpu_custom_call.1}
  #allocation0 [shape = 'u32[]', space=smem, size = 0x4, offset = 0x4, fixed_abs, tag = 'smem constant byte address 0x4 - core index']
  #allocation1 [shape = 'u32[144,128]{1,0:T(1,128)}', space=vmem, size = 0x12000, scoped, tag = 'internal scratch']
  %s0 = inlined_call_operand.hbm [shape: f32[8192,128], index: 0, kind: input, shape index: {}, may-alias: {0,2}]
  %s1 = inlined_call_operand.vmem [shape: f32[8192,128], index: 1, kind: input, shape index: {}]
  %s2 = inlined_call_operand.hbm [shape: f32[8192,128], index: 2, kind: output, shape index: {}, may-alias: {0,2}]
  %s3 = sld [smem:[#allocation0]]
  $region45: #{tpu_custom_call.1} parent=0
    _
  %s5 = ssub.s32 1, %s3
  %s6 = scalar_select 0, %s5, %s3
  $region1: #{tpu_custom_call.1} parent=0
    #allocation2 [shape = 'u8[4194304]{0}', space=vmem, size = 0x400000, scoped, tag = 'input window, operand 0']
    #allocation3 [shape = 's32[2]{0}', space=sflag, size = 0x8, scoped, tag = 'scoped memory for tpu_custom_call.1']
    #allocation4 [shape = 's32[2]{0}', space=sflag, size = 0x8, scoped, tag = 'scoped memory for tpu_custom_call.1']
    #allocation5 [shape = 'u8[4194304]{0}', space=vmem, size = 0x400000, scoped, tag = 'output window, operand 0']
    %7 = vsyncpa [#allocation3], 0
    %s8 = scalar_lea.sflag [#allocation3], 1
    %9 = vsyncpa %s8, 0
    %10 = vsyncpa [#allocation4], 0
    %s11 = scalar_lea.sflag [#allocation4], 1
    %12 = vsyncpa %s11, 0
    loop: start=0, step=1, limit=4
    $region2: #{tpu_custom_call.1} parent=1 // loop_pre_header
      _
    $region3: #{tpu_custom_call.1} parent=1 // loop_header
      %s14 = sphi 0, %s18
      %p15 = scmp.ge.s32.totalorder %s14, 4
      %s24 = sphi 0, %s26
      %s27 = sphi 0, %s24
      %s28 = sphi 0, %s27
      %s44 = sphi 0, %s28
      %s50 = sphi 0, %s52
      %s53 = sphi 0, %s50
      %s54 = sphi 0, %s53
      %s70 = sphi 0, %s54
      %s76 = sphi 0, %s78
      %s79 = sphi 0, %s76
      %s80 = sphi 0, %s79
      %s96 = sphi 0, %s80
    $region4: #{tpu_custom_call.1} parent=1 // loop_header_branch
      %17 = sbr.rel (%p15) target = $region8
    $region5: #{tpu_custom_call.1} parent=1 // loop_body
      %s19 = ssub.s32 %s14, 1
      %s20 = ssub.s32 %s14, 2
      %s21 = sadd.s32 %s14, 1
      %s22 = ssub.s32 %s14, %s21
      %p23 = scmp.eq.s32.totalorder %s22, 0
      %s25 = sadd.s32 %s24, 1
      %s26 = scalar_select %p23, %s24, %s25
      %p29 = pneg %p23
      %p30 = scmp.eq.s32.totalorder %s14, 1
      %p31 = por %p29, %p30
      %p32 = scmp.ne.s32.totalorder %s24, %s27
      %p33 = scmp.eq.s32.totalorder %s14, 0
      %p34 = por %p32, %p33
      %p35 = scmp.ne.s32.totalorder %s24, %s27
      %p36 = scmp.eq.s32.totalorder %s19, 1
      %p37 = por %p35, %p36
      %p38 = scmp.ne.s32.totalorder %s27, %s28
      %p39 = scmp.eq.s32.totalorder %s19, 0
      %p40 = por %p38, %p39
      %p41 = scmp.ne.s32.totalorder %s27, %s28
      %p42 = scmp.eq.s32.totalorder %s20, 1
      %p43 = por %p41, %p42
      %p45 = scmp.ne.s32.totalorder %s28, %s44
      %p46 = scmp.eq.s32.totalorder %s20, 0
      %p47 = por %p45, %p46
      %s48 = ssub.s32 %s14, %s21
      %p49 = scmp.eq.s32.totalorder %s48, 0
      %s51 = sadd.s32 %s50, 1
      %s52 = scalar_select %p49, %s50, %s51
      %p55 = pneg %p49
      %p56 = scmp.eq.s32.totalorder %s14, 1
      %p57 = por %p55, %p56
      %p58 = scmp.ne.s32.totalorder %s50, %s53
      %p59 = scmp.eq.s32.totalorder %s14, 0
      %p60 = por %p58, %p59
      %p61 = scmp.ne.s32.totalorder %s50, %s53
      %p62 = scmp.eq.s32.totalorder %s19, 1
      %p63 = por %p61, %p62
      %p64 = scmp.ne.s32.totalorder %s53, %s54
      %p65 = scmp.eq.s32.totalorder %s19, 0
      %p66 = por %p64, %p65
      %p67 = scmp.ne.s32.totalorder %s53, %s54
      %p68 = scmp.eq.s32.totalorder %s20, 1
      %p69 = por %p67, %p68
      %p71 = scmp.ne.s32.totalorder %s54, %s70
      %p72 = scmp.eq.s32.totalorder %s20, 0
      %p73 = por %p71, %p72
      %s74 = ssub.s32 %s14, %s21
      %p75 = scmp.eq.s32.totalorder %s74, 0
      %s77 = sadd.s32 %s76, 1
      %s78 = scalar_select %p75, %s76, %s77
      %p81 = pneg %p75
      %p82 = scmp.eq.s32.totalorder %s14, 1
      %p83 = por %p81, %p82
      %p84 = scmp.ne.s32.totalorder %s76, %s79
      %p85 = scmp.eq.s32.totalorder %s14, 0
      %p86 = por %p84, %p85
      %p87 = scmp.ne.s32.totalorder %s76, %s79
      %p88 = scmp.eq.s32.totalorder %s19, 1
      %p89 = por %p87, %p88
      %p90 = scmp.ne.s32.totalorder %s79, %s80
      %p91 = scmp.eq.s32.totalorder %s19, 0
      %p92 = por %p90, %p91
      %p93 = scmp.ne.s32.totalorder %s79, %s80
      %p94 = scmp.eq.s32.totalorder %s20, 1
      %p95 = por %p93, %p94
      %p97 = scmp.ne.s32.totalorder %s80, %s96
      %p98 = scmp.eq.s32.totalorder %s20, 0
      %p99 = por %p97, %p98
      %p100 = scmp.le.s32.totalorder 1, %s14
      %p101 = scmp.lt.s32.totalorder %s14, 3
      %p102 = pnand %p100, %p101
      %p103 = pneg %p102
      // Predicated region
      $region9: #{tpu_custom_call.1} parent=5 // pred_check
        _
      $region10: #{tpu_custom_call.1} parent=5 // pred_check_branch
        %105 = sbr.rel (%p102) target = $region12
      $region11: #{tpu_custom_call.1} parent=5 // pred_region
        %s106 = ssub.s32 %s14, 1
      $region12: #{tpu_custom_call.1} parent=5 // pred_fallthru
        _
      %p107 = scmp.lt.s32.totalorder %s14, 2
      // Predicated region
      $region13: #{tpu_custom_call.1} parent=5 // pred_check
        %p108 = pneg %p107
      $region14: #{tpu_custom_call.1} parent=5 // pred_check_branch
        %110 = sbr.rel (%p108) target = $region16
      $region15: #{tpu_custom_call.1} parent=5 // pred_region
        // Predicated region
        $region17: #{tpu_custom_call.1} parent=15 // pred_check
          %p111 = pneg %p34
        $region18: #{tpu_custom_call.1} parent=15 // pred_check_branch
          %113 = sbr.rel (%p111) target = $region20
        $region19: #{tpu_custom_call.1} parent=15 // pred_region
          %s114 = sand.u32 %s24, 1
          %s115 = scalar_lea.sflag [#allocation3], %s114
          %s116 = sand.u32 %s24, 1
          %s117 = smul.addr %s116, 4096
          %s118 = scalar_lea.vmem [#allocation2], %s117
          %s119 = smul.u32 512, %s14
          %s121 = ssub.s32 65536, 65536
          %122 = vsyncadd %s115, %s121
          %s123 = smul.addr %s119, 128
          %s124 = scalar_lea.hbm %s0, %s123
          %s125 = sshll.u32 %s118, 4
          %s126 = int_to_ptr.vmem [resolvable:$true] %s125
          %131 = dma.hbm_to_vmem [thread:$0]  %s124, 65536, %s126, %s115, 128, 128, 8
        $region20: #{tpu_custom_call.1} parent=15 // pred_fallthru
          _
        // Predicated region
        $region21: #{tpu_custom_call.1} parent=15 // pred_check
          %p132 = pneg %p60
        $region22: #{tpu_custom_call.1} parent=15 // pred_check_branch
          %134 = sbr.rel (%p132) target = $region24
        $region23: #{tpu_custom_call.1} parent=15 // pred_region
          %s135 = smul.u32 512, %s14
          %p136 = scmp.lt.s32.totalorder %s135, 1023
          %s137 = scalar_select %p136, %s135, 1023
          %s138 = smul.addr %s137, 8
          %s139 = scalar_lea.vmem %s1, %s138
          %s140 = smul.u32 512, %s14
        $region24: #{tpu_custom_call.1} parent=15 // pred_fallthru
          _
      $region16: #{tpu_custom_call.1} parent=5 // pred_fallthru
        _
      %p141 = scmp.le.s32.totalorder 1, %s14
      %p142 = scmp.lt.s32.totalorder %s14, 3
      %p143 = pnand %p141, %p142
      %p144 = pneg %p143
      // Predicated region
      $region25: #{tpu_custom_call.1} parent=5 // pred_check
        _
      $region26: #{tpu_custom_call.1} parent=5 // pred_check_branch
        %146 = sbr.rel (%p143) target = $region28
      $region27: #{tpu_custom_call.1} parent=5 // pred_region
        %s147 = ssub.s32 %s14, 1
        %s148 = sand.u32 %s27, 1
        %s149 = scalar_lea.sflag [#allocation3], %s148
        %s150 = sand.u32 %s27, 1
        %s151 = smul.addr %s150, 4096
        %s152 = scalar_lea.vmem [#allocation2], %s151
        // Predicated region
        $region29: #{tpu_custom_call.1} parent=27 // pred_check
          %p153 = pneg %p40
        $region30: #{tpu_custom_call.1} parent=27 // pred_check_branch
          %155 = sbr.rel (%p153) target = $region32
        $region31: #{tpu_custom_call.1} parent=27 // pred_region
          %156 = dma.done %s149, 65536
        $region32: #{tpu_custom_call.1} parent=27 // pred_fallthru
          _
        %s157 = sand.u32 %s27, 1
        %s158 = scalar_lea.sflag [#allocation3], %s157
        %s159 = sand.u32 %s27, 1
        %s160 = smul.addr %s159, 4096
        %s161 = scalar_lea.vmem [#allocation2], %s160
        %p162 = pneg %p40
        %p163 = pneg %p37
        %s164 = smul.u32 512, %s19
        %p165 = scmp.lt.s32.totalorder %s164, 1023
        %s166 = scalar_select %p165, %s164, 1023
        %s167 = smul.addr %s166, 8
        %s168 = scalar_lea.vmem %s1, %s167
        %p169 = pneg %p66
        %p170 = pneg %p63
        %p171 = pneg %p92
        %p172 = pneg %p89
        %s173 = sand.u32 %s79, 1
        %s174 = scalar_lea.sflag [#allocation4], %s173
        %s175 = sand.u32 %s79, 1
        %s176 = smul.addr %s175, 4096
        %s177 = scalar_lea.vmem [#allocation5], %s176
        %s178 = smul.u32 512, %s19
        %s179 = smul.u32 512, %s19
        %p180 = scmp.lt.s32.totalorder %s179, 1023
        %s181 = scalar_select %p180, %s179, 1023
        %s182 = smul.addr %s181, 8
        %s183 = scalar_lea.vmem %s1, %s182
        %s184 = smul.u32 512, %s19
        %s185 = smul.u32 512, %s19
        %v186 = vld [vmem:[%s183] sm:$0xff]
        %v187 = vld [vmem:[%s183 + $0x8] sm:$0xff]
        %v188 = vld [vmem:[%s183 + $0x10] sm:$0xff]
        %v189 = vld [vmem:[%s183 + $0x18] sm:$0xff]
        %v190 = vld [vmem:[%s183 + $0x20] sm:$0xff]
        %v191 = vld [vmem:[%s183 + $0x28] sm:$0xff]
        %v192 = vld [vmem:[%s183 + $0x30] sm:$0xff]
        %v193 = vld [vmem:[%s183 + $0x38] sm:$0xff]
        %v194 = vld [vmem:[%s183 + $0x40] sm:$0xff]
        %v195 = vld [vmem:[%s183 + $0x48] sm:$0xff]
        %v196 = vld [vmem:[%s183 + $0x50] sm:$0xff]
        %v197 = vld [vmem:[%s183 + $0x58] sm:$0xff]
        %v198 = vld [vmem:[%s183 + $0x60] sm:$0xff]
        %v199 = vld [vmem:[%s183 + $0x68] sm:$0xff]
        %v200 = vld [vmem:[%s183 + $0x70] sm:$0xff]
        %v201 = vld [vmem:[%s183 + $0x78] sm:$0xff]
        %v202 = vld [vmem:[%s183 + $0x80] sm:$0xff]
        %v203 = vld [vmem:[%s183 + $0x88] sm:$0xff]
        %v204 = vld [vmem:[%s183 + $0x90] sm:$0xff]
        %v205 = vld [vmem:[%s183 + $0x98] sm:$0xff]
        %v206 = vld [vmem:[%s183 + $0xa0] sm:$0xff]
        %v207 = vld [vmem:[%s183 + $0xa8] sm:$0xff]
        %v208 = vld [vmem:[%s183 + $0xb0] sm:$0xff]
        %v209 = vld [vmem:[%s183 + $0xb8] sm:$0xff]
        %v210 = vld [vmem:[%s183 + $0xc0] sm:$0xff]
        %v211 = vld [vmem:[%s183 + $0xc8] sm:$0xff]
        %v212 = vld [vmem:[%s183 + $0xd0] sm:$0xff]
        %v213 = vld [vmem:[%s183 + $0xd8] sm:$0xff]
        %v214 = vld [vmem:[%s183 + $0xe0] sm:$0xff]
        %v215 = vld [vmem:[%s183 + $0xe8] sm:$0xff]
        %v216 = vld [vmem:[%s183 + $0xf0] sm:$0xff]
        %v217 = vld [vmem:[%s183 + $0xf8] sm:$0xff]
        %v218 = vld [vmem:[%s183 + $0x100] sm:$0xff]
        %v219 = vld [vmem:[%s183 + $0x108] sm:$0xff]
        %v220 = vld [vmem:[%s183 + $0x110] sm:$0xff]
        %v221 = vld [vmem:[%s183 + $0x118] sm:$0xff]
        %v222 = vld [vmem:[%s183 + $0x120] sm:$0xff]
        %v223 = vld [vmem:[%s183 + $0x128] sm:$0xff]
        %v224 = vld [vmem:[%s183 + $0x130] sm:$0xff]
        %v225 = vld [vmem:[%s183 + $0x138] sm:$0xff]
        %v226 = vld [vmem:[%s183 + $0x140] sm:$0xff]
        %v227 = vld [vmem:[%s183 + $0x148] sm:$0xff]
        %v228 = vld [vmem:[%s183 + $0x150] sm:$0xff]
        %v229 = vld [vmem:[%s183 + $0x158] sm:$0xff]
        %v230 = vld [vmem:[%s183 + $0x160] sm:$0xff]
        %v231 = vld [vmem:[%s183 + $0x168] sm:$0xff]
        %v232 = vld [vmem:[%s183 + $0x170] sm:$0xff]
        %v233 = vld [vmem:[%s183 + $0x178] sm:$0xff]
        %v234 = vld [vmem:[%s183 + $0x180] sm:$0xff]
        %v235 = vld [vmem:[%s183 + $0x188] sm:$0xff]
        %v236 = vld [vmem:[%s183 + $0x190] sm:$0xff]
        %v237 = vld [vmem:[%s183 + $0x198] sm:$0xff]
        %v238 = vld [vmem:[%s183 + $0x1a0] sm:$0xff]
        %v239 = vld [vmem:[%s183 + $0x1a8] sm:$0xff]
        %v240 = vld [vmem:[%s183 + $0x1b0] sm:$0xff]
        %v241 = vld [vmem:[%s183 + $0x1b8] sm:$0xff]
        %v242 = vld [vmem:[%s183 + $0x1c0] sm:$0xff]
        %v243 = vld [vmem:[%s183 + $0x1c8] sm:$0xff]
        %v244 = vld [vmem:[%s183 + $0x1d0] sm:$0xff]
        %v245 = vld [vmem:[%s183 + $0x1d8] sm:$0xff]
        %v246 = vld [vmem:[%s183 + $0x1e0] sm:$0xff]
        %v247 = vld [vmem:[%s183 + $0x1e8] sm:$0xff]
        %v248 = vld [vmem:[%s183 + $0x1f0] sm:$0xff]
        %v249 = vld [vmem:[%s183 + $0x1f8] sm:$0xff]
        %v250 = vld [vmem:[%s183 + $0x200] sm:$0xff]
        %v251 = vld [vmem:[%s183 + $0x208] sm:$0xff]
        %v252 = vld [vmem:[%s183 + $0x210] sm:$0xff]
        %v253 = vld [vmem:[%s183 + $0x218] sm:$0xff]
        %v254 = vld [vmem:[%s183 + $0x220] sm:$0xff]
        %v255 = vld [vmem:[%s183 + $0x228] sm:$0xff]
        %v256 = vld [vmem:[%s183 + $0x230] sm:$0xff]
        %v257 = vld [vmem:[%s183 + $0x238] sm:$0xff]
        %v258 = vld [vmem:[%s183 + $0x240] sm:$0xff]
        %v259 = vld [vmem:[%s183 + $0x248] sm:$0xff]
        %v260 = vld [vmem:[%s183 + $0x250] sm:$0xff]
        %v261 = vld [vmem:[%s183 + $0x258] sm:$0xff]
        %v262 = vld [vmem:[%s183 + $0x260] sm:$0xff]
        %v263 = vld [vmem:[%s183 + $0x268] sm:$0xff]
        %v264 = vld [vmem:[%s183 + $0x270] sm:$0xff]
        %v265 = vld [vmem:[%s183 + $0x278] sm:$0xff]
        %v266 = vld [vmem:[%s183 + $0x280] sm:$0xff]
        %v267 = vld [vmem:[%s183 + $0x288] sm:$0xff]
        %v268 = vld [vmem:[%s183 + $0x290] sm:$0xff]
        %v269 = vld [vmem:[%s183 + $0x298] sm:$0xff]
        %v270 = vld [vmem:[%s183 + $0x2a0] sm:$0xff]
        %v271 = vld [vmem:[%s183 + $0x2a8] sm:$0xff]
        %v272 = vld [vmem:[%s183 + $0x2b0] sm:$0xff]
        %v273 = vld [vmem:[%s183 + $0x2b8] sm:$0xff]
        %v274 = vld [vmem:[%s183 + $0x2c0] sm:$0xff]
        %v275 = vld [vmem:[%s183 + $0x2c8] sm:$0xff]
        %v276 = vld [vmem:[%s183 + $0x2d0] sm:$0xff]
        %v277 = vld [vmem:[%s183 + $0x2d8] sm:$0xff]
        %v278 = vld [vmem:[%s183 + $0x2e0] sm:$0xff]
        %v279 = vld [vmem:[%s183 + $0x2e8] sm:$0xff]
        %v280 = vld [vmem:[%s183 + $0x2f0] sm:$0xff]
        %v281 = vld [vmem:[%s183 + $0x2f8] sm:$0xff]
        %v282 = vld [vmem:[%s183 + $0x300] sm:$0xff]
        %v283 = vld [vmem:[%s183 + $0x308] sm:$0xff]
        %v284 = vld [vmem:[%s183 + $0x310] sm:$0xff]
        %v285 = vld [vmem:[%s183 + $0x318] sm:$0xff]
        %v286 = vld [vmem:[%s183 + $0x320] sm:$0xff]
        %v287 = vld [vmem:[%s183 + $0x328] sm:$0xff]
        %v288 = vld [vmem:[%s183 + $0x330] sm:$0xff]
        %v289 = vld [vmem:[%s183 + $0x338] sm:$0xff]
        %v290 = vld [vmem:[%s183 + $0x340] sm:$0xff]
        %v291 = vld [vmem:[%s183 + $0x348] sm:$0xff]
        %v292 = vld [vmem:[%s183 + $0x350] sm:$0xff]
        %v293 = vld [vmem:[%s183 + $0x358] sm:$0xff]
        %v294 = vld [vmem:[%s183 + $0x360] sm:$0xff]
        %v295 = vld [vmem:[%s183 + $0x368] sm:$0xff]
        %v296 = vld [vmem:[%s183 + $0x370] sm:$0xff]
        %v297 = vld [vmem:[%s183 + $0x378] sm:$0xff]
        %v298 = vld [vmem:[%s183 + $0x380] sm:$0xff]
        %v299 = vld [vmem:[%s183 + $0x388] sm:$0xff]
        %v300 = vld [vmem:[%s183 + $0x390] sm:$0xff]
        %v301 = vld [vmem:[%s183 + $0x398] sm:$0xff]
        %v302 = vld [vmem:[%s183 + $0x3a0] sm:$0xff]
        %v303 = vld [vmem:[%s183 + $0x3a8] sm:$0xff]
        %v304 = vld [vmem:[%s183 + $0x3b0] sm:$0xff]
        %v305 = vld [vmem:[%s183 + $0x3b8] sm:$0xff]
        %v306 = vld [vmem:[%s183 + $0x3c0] sm:$0xff]
        %v307 = vld [vmem:[%s183 + $0x3c8] sm:$0xff]
        %v308 = vld [vmem:[%s183 + $0x3d0] sm:$0xff]
        %v309 = vld [vmem:[%s183 + $0x3d8] sm:$0xff]
        %v310 = vld [vmem:[%s183 + $0x3e0] sm:$0xff]
        %v311 = vld [vmem:[%s183 + $0x3e8] sm:$0xff]
        %v312 = vld [vmem:[%s183 + $0x3f0] sm:$0xff]
        %v313 = vld [vmem:[%s183 + $0x3f8] sm:$0xff]
        %v314 = vld [vmem:[%s183 + $0x400] sm:$0xff]
        %v315 = vld [vmem:[%s183 + $0x408] sm:$0xff]
        %v316 = vld [vmem:[%s183 + $0x410] sm:$0xff]
        %v317 = vld [vmem:[%s183 + $0x418] sm:$0xff]
        %v318 = vld [vmem:[%s183 + $0x420] sm:$0xff]
        %v319 = vld [vmem:[%s183 + $0x428] sm:$0xff]
        %v320 = vld [vmem:[%s183 + $0x430] sm:$0xff]
        %v321 = vld [vmem:[%s183 + $0x438] sm:$0xff]
        %v322 = vld [vmem:[%s183 + $0x440] sm:$0xff]
        %v323 = vld [vmem:[%s183 + $0x448] sm:$0xff]
        %v324 = vld [vmem:[%s183 + $0x450] sm:$0xff]
        %v325 = vld [vmem:[%s183 + $0x458] sm:$0xff]
        %v326 = vld [vmem:[%s183 + $0x460] sm:$0xff]
        %v327 = vld [vmem:[%s183 + $0x468] sm:$0xff]
        %v328 = vld [vmem:[%s183 + $0x470] sm:$0xff]
        %v329 = vld [vmem:[%s183 + $0x478] sm:$0xff]
        %v330 = vld [vmem:[%s183 + $0x480] sm:$0xff]
        %v331 = vld [vmem:[%s183 + $0x488] sm:$0xff]
        %v332 = vld [vmem:[%s183 + $0x490] sm:$0xff]
        %v333 = vld [vmem:[%s183 + $0x498] sm:$0xff]
        %v334 = vld [vmem:[%s183 + $0x4a0] sm:$0xff]
        %v335 = vld [vmem:[%s183 + $0x4a8] sm:$0xff]
        %v336 = vld [vmem:[%s183 + $0x4b0] sm:$0xff]
        %v337 = vld [vmem:[%s183 + $0x4b8] sm:$0xff]
        %v338 = vld [vmem:[%s183 + $0x4c0] sm:$0xff]
        %v339 = vld [vmem:[%s183 + $0x4c8] sm:$0xff]
        %v340 = vld [vmem:[%s183 + $0x4d0] sm:$0xff]
        %v341 = vld [vmem:[%s183 + $0x4d8] sm:$0xff]
        %v342 = vld [vmem:[%s183 + $0x4e0] sm:$0xff]
        %v343 = vld [vmem:[%s183 + $0x4e8] sm:$0xff]
        %v344 = vld [vmem:[%s183 + $0x4f0] sm:$0xff]
        %v345 = vld [vmem:[%s183 + $0x4f8] sm:$0xff]
        %v346 = vld [vmem:[%s183 + $0x500] sm:$0xff]
        %v347 = vld [vmem:[%s183 + $0x508] sm:$0xff]
        %v348 = vld [vmem:[%s183 + $0x510] sm:$0xff]
        %v349 = vld [vmem:[%s183 + $0x518] sm:$0xff]
        %v350 = vld [vmem:[%s183 + $0x520] sm:$0xff]
        %v351 = vld [vmem:[%s183 + $0x528] sm:$0xff]
        %v352 = vld [vmem:[%s183 + $0x530] sm:$0xff]
        %v353 = vld [vmem:[%s183 + $0x538] sm:$0xff]
        %v354 = vld [vmem:[%s183 + $0x540] sm:$0xff]
        %v355 = vld [vmem:[%s183 + $0x548] sm:$0xff]
        %v356 = vld [vmem:[%s183 + $0x550] sm:$0xff]
        %v357 = vld [vmem:[%s183 + $0x558] sm:$0xff]
        %v358 = vld [vmem:[%s183 + $0x560] sm:$0xff]
        %v359 = vld [vmem:[%s183 + $0x568] sm:$0xff]
        %v360 = vld [vmem:[%s183 + $0x570] sm:$0xff]
        %v361 = vld [vmem:[%s183 + $0x578] sm:$0xff]
        %v362 = vld [vmem:[%s183 + $0x580] sm:$0xff]
        %v363 = vld [vmem:[%s183 + $0x588] sm:$0xff]
        %v364 = vld [vmem:[%s183 + $0x590] sm:$0xff]
        %v365 = vld [vmem:[%s183 + $0x598] sm:$0xff]
        %v366 = vld [vmem:[%s183 + $0x5a0] sm:$0xff]
        %v367 = vld [vmem:[%s183 + $0x5a8] sm:$0xff]
        %v368 = vld [vmem:[%s183 + $0x5b0] sm:$0xff]
        %v369 = vld [vmem:[%s183 + $0x5b8] sm:$0xff]
        %v370 = vld [vmem:[%s183 + $0x5c0] sm:$0xff]
        %v371 = vld [vmem:[%s183 + $0x5c8] sm:$0xff]
        %v372 = vld [vmem:[%s183 + $0x5d0] sm:$0xff]
        %v373 = vld [vmem:[%s183 + $0x5d8] sm:$0xff]
        %v374 = vld [vmem:[%s183 + $0x5e0] sm:$0xff]
        %v375 = vld [vmem:[%s183 + $0x5e8] sm:$0xff]
        %v376 = vld [vmem:[%s183 + $0x5f0] sm:$0xff]
        %v377 = vld [vmem:[%s183 + $0x5f8] sm:$0xff]
        %v378 = vld [vmem:[%s183 + $0x600] sm:$0xff]
        %v379 = vld [vmem:[%s183 + $0x608] sm:$0xff]
        %v380 = vld [vmem:[%s183 + $0x610] sm:$0xff]
        %v381 = vld [vmem:[%s183 + $0x618] sm:$0xff]
        %v382 = vld [vmem:[%s183 + $0x620] sm:$0xff]
        %v383 = vld [vmem:[%s183 + $0x628] sm:$0xff]
        %v384 = vld [vmem:[%s183 + $0x630] sm:$0xff]
        %v385 = vld [vmem:[%s183 + $0x638] sm:$0xff]
        %v386 = vld [vmem:[%s183 + $0x640] sm:$0xff]
        %v387 = vld [vmem:[%s183 + $0x648] sm:$0xff]
        %v388 = vld [vmem:[%s183 + $0x650] sm:$0xff]
        %v389 = vld [vmem:[%s183 + $0x658] sm:$0xff]
        %v390 = vld [vmem:[%s183 + $0x660] sm:$0xff]
        %v391 = vld [vmem:[%s183 + $0x668] sm:$0xff]
        %v392 = vld [vmem:[%s183 + $0x670] sm:$0xff]
        %v393 = vld [vmem:[%s183 + $0x678] sm:$0xff]
        %v394 = vld [vmem:[%s183 + $0x680] sm:$0xff]
        %v395 = vld [vmem:[%s183 + $0x688] sm:$0xff]
        %v396 = vld [vmem:[%s183 + $0x690] sm:$0xff]
        %v397 = vld [vmem:[%s183 + $0x698] sm:$0xff]
        %v398 = vld [vmem:[%s183 + $0x6a0] sm:$0xff]
        %v399 = vld [vmem:[%s183 + $0x6a8] sm:$0xff]
        %v400 = vld [vmem:[%s183 + $0x6b0] sm:$0xff]
        %v401 = vld [vmem:[%s183 + $0x6b8] sm:$0xff]
        %v402 = vld [vmem:[%s183 + $0x6c0] sm:$0xff]
        %v403 = vld [vmem:[%s183 + $0x6c8] sm:$0xff]
        %v404 = vld [vmem:[%s183 + $0x6d0] sm:$0xff]
        %v405 = vld [vmem:[%s183 + $0x6d8] sm:$0xff]
        %v406 = vld [vmem:[%s183 + $0x6e0] sm:$0xff]
        %v407 = vld [vmem:[%s183 + $0x6e8] sm:$0xff]
        %v408 = vld [vmem:[%s183 + $0x6f0] sm:$0xff]
        %v409 = vld [vmem:[%s183 + $0x6f8] sm:$0xff]
        %v410 = vld [vmem:[%s183 + $0x700] sm:$0xff]
        %v411 = vld [vmem:[%s183 + $0x708] sm:$0xff]
        %v412 = vld [vmem:[%s183 + $0x710] sm:$0xff]
        %v413 = vld [vmem:[%s183 + $0x718] sm:$0xff]
        %v414 = vld [vmem:[%s183 + $0x720] sm:$0xff]
        %v415 = vld [vmem:[%s183 + $0x728] sm:$0xff]
        %v416 = vld [vmem:[%s183 + $0x730] sm:$0xff]
        %v417 = vld [vmem:[%s183 + $0x738] sm:$0xff]
        %v418 = vld [vmem:[%s183 + $0x740] sm:$0xff]
        %v419 = vld [vmem:[%s183 + $0x748] sm:$0xff]
        %v420 = vld [vmem:[%s183 + $0x750] sm:$0xff]
        %v421 = vld [vmem:[%s183 + $0x758] sm:$0xff]
        %v422 = vld [vmem:[%s183 + $0x760] sm:$0xff]
        %v423 = vld [vmem:[%s183 + $0x768] sm:$0xff]
        %v424 = vld [vmem:[%s183 + $0x770] sm:$0xff]
        %v425 = vld [vmem:[%s183 + $0x778] sm:$0xff]
        %v426 = vld [vmem:[%s183 + $0x780] sm:$0xff]
        %v427 = vld [vmem:[%s183 + $0x788] sm:$0xff]
        %v428 = vld [vmem:[%s183 + $0x790] sm:$0xff]
        %v429 = vld [vmem:[%s183 + $0x798] sm:$0xff]
        %v430 = vld [vmem:[%s183 + $0x7a0] sm:$0xff]
        %v431 = vld [vmem:[%s183 + $0x7a8] sm:$0xff]
        %v432 = vld [vmem:[%s183 + $0x7b0] sm:$0xff]
        %v433 = vld [vmem:[%s183 + $0x7b8] sm:$0xff]
        %v434 = vld [vmem:[%s183 + $0x7c0] sm:$0xff]
        %v435 = vld [vmem:[%s183 + $0x7c8] sm:$0xff]
        %v436 = vld [vmem:[%s183 + $0x7d0] sm:$0xff]
        %v437 = vld [vmem:[%s183 + $0x7d8] sm:$0xff]
        %v438 = vld [vmem:[%s183 + $0x7e0] sm:$0xff]
        %v439 = vld [vmem:[%s183 + $0x7e8] sm:$0xff]
        %v440 = vld [vmem:[%s183 + $0x7f0] sm:$0xff]
        %v441 = vld [vmem:[%s183 + $0x7f8] sm:$0xff]
        %v442 = vld [vmem:[%s183 + $0x800] sm:$0xff]
        %v443 = vld [vmem:[%s183 + $0x808] sm:$0xff]
        %v444 = vld [vmem:[%s183 + $0x810] sm:$0xff]
        %v445 = vld [vmem:[%s183 + $0x818] sm:$0xff]
        %v446 = vld [vmem:[%s183 + $0x820] sm:$0xff]
        %v447 = vld [vmem:[%s183 + $0x828] sm:$0xff]
        %v448 = vld [vmem:[%s183 + $0x830] sm:$0xff]
        %v449 = vld [vmem:[%s183 + $0x838] sm:$0xff]
        %v450 = vld [vmem:[%s183 + $0x840] sm:$0xff]
        %v451 = vld [vmem:[%s183 + $0x848] sm:$0xff]
        %v452 = vld [vmem:[%s183 + $0x850] sm:$0xff]
        %v453 = vld [vmem:[%s183 + $0x858] sm:$0xff]
        %v454 = vld [vmem:[%s183 + $0x860] sm:$0xff]
        %v455 = vld [vmem:[%s183 + $0x868] sm:$0xff]
        %v456 = vld [vmem:[%s183 + $0x870] sm:$0xff]
        %v457 = vld [vmem:[%s183 + $0x878] sm:$0xff]
        %v458 = vld [vmem:[%s183 + $0x880] sm:$0xff]
        %v459 = vld [vmem:[%s183 + $0x888] sm:$0xff]
        %v460 = vld [vmem:[%s183 + $0x890] sm:$0xff]
        %v461 = vld [vmem:[%s183 + $0x898] sm:$0xff]
        %v462 = vld [vmem:[%s183 + $0x8a0] sm:$0xff]
        %v463 = vld [vmem:[%s183 + $0x8a8] sm:$0xff]
        %v464 = vld [vmem:[%s183 + $0x8b0] sm:$0xff]
        %v465 = vld [vmem:[%s183 + $0x8b8] sm:$0xff]
        %v466 = vld [vmem:[%s183 + $0x8c0] sm:$0xff]
        %v467 = vld [vmem:[%s183 + $0x8c8] sm:$0xff]
        %v468 = vld [vmem:[%s183 + $0x8d0] sm:$0xff]
        %v469 = vld [vmem:[%s183 + $0x8d8] sm:$0xff]
        %v470 = vld [vmem:[%s183 + $0x8e0] sm:$0xff]
        %v471 = vld [vmem:[%s183 + $0x8e8] sm:$0xff]
        %v472 = vld [vmem:[%s183 + $0x8f0] sm:$0xff]
        %v473 = vld [vmem:[%s183 + $0x8f8] sm:$0xff]
        %v474 = vld [vmem:[%s183 + $0x900] sm:$0xff]
        %v475 = vld [vmem:[%s183 + $0x908] sm:$0xff]
        %v476 = vld [vmem:[%s183 + $0x910] sm:$0xff]
        %v477 = vld [vmem:[%s183 + $0x918] sm:$0xff]
        %v478 = vld [vmem:[%s183 + $0x920] sm:$0xff]
        %v479 = vld [vmem:[%s183 + $0x928] sm:$0xff]
        %v480 = vld [vmem:[%s183 + $0x930] sm:$0xff]
        %v481 = vld [vmem:[%s183 + $0x938] sm:$0xff]
        %v482 = vld [vmem:[%s183 + $0x940] sm:$0xff]
        %v483 = vld [vmem:[%s183 + $0x948] sm:$0xff]
        %v484 = vld [vmem:[%s183 + $0x950] sm:$0xff]
        %v485 = vld [vmem:[%s183 + $0x958] sm:$0xff]
        %v486 = vld [vmem:[%s183 + $0x960] sm:$0xff]
        %v487 = vld [vmem:[%s183 + $0x968] sm:$0xff]
        %v488 = vld [vmem:[%s183 + $0x970] sm:$0xff]
        %v489 = vld [vmem:[%s183 + $0x978] sm:$0xff]
        %v490 = vld [vmem:[%s183 + $0x980] sm:$0xff]
        %v491 = vld [vmem:[%s183 + $0x988] sm:$0xff]
        %v492 = vld [vmem:[%s183 + $0x990] sm:$0xff]
        %v493 = vld [vmem:[%s183 + $0x998] sm:$0xff]
        %v494 = vld [vmem:[%s183 + $0x9a0] sm:$0xff]
        %v495 = vld [vmem:[%s183 + $0x9a8] sm:$0xff]
        %v496 = vld [vmem:[%s183 + $0x9b0] sm:$0xff]
        %v497 = vld [vmem:[%s183 + $0x9b8] sm:$0xff]
        %v498 = vld [vmem:[%s183 + $0x9c0] sm:$0xff]
        %v499 = vld [vmem:[%s183 + $0x9c8] sm:$0xff]
        %v500 = vld [vmem:[%s183 + $0x9d0] sm:$0xff]
        %v501 = vld [vmem:[%s183 + $0x9d8] sm:$0xff]
        %v502 = vld [vmem:[%s183 + $0x9e0] sm:$0xff]
        %v503 = vld [vmem:[%s183 + $0x9e8] sm:$0xff]
        %v504 = vld [vmem:[%s183 + $0x9f0] sm:$0xff]
        %v505 = vld [vmem:[%s183 + $0x9f8] sm:$0xff]
        %v506 = vld [vmem:[%s183 + $0xa00] sm:$0xff]
        %v507 = vld [vmem:[%s183 + $0xa08] sm:$0xff]
        %v508 = vld [vmem:[%s183 + $0xa10] sm:$0xff]
        %v509 = vld [vmem:[%s183 + $0xa18] sm:$0xff]
        %v510 = vld [vmem:[%s183 + $0xa20] sm:$0xff]
        %v511 = vld [vmem:[%s183 + $0xa28] sm:$0xff]
        %v512 = vld [vmem:[%s183 + $0xa30] sm:$0xff]
        %v513 = vld [vmem:[%s183 + $0xa38] sm:$0xff]
        %v514 = vld [vmem:[%s183 + $0xa40] sm:$0xff]
        %v515 = vld [vmem:[%s183 + $0xa48] sm:$0xff]
        %v516 = vld [vmem:[%s183 + $0xa50] sm:$0xff]
        %v517 = vld [vmem:[%s183 + $0xa58] sm:$0xff]
        %v518 = vld [vmem:[%s183 + $0xa60] sm:$0xff]
        %v519 = vld [vmem:[%s183 + $0xa68] sm:$0xff]
        %v520 = vld [vmem:[%s183 + $0xa70] sm:$0xff]
        %v521 = vld [vmem:[%s183 + $0xa78] sm:$0xff]
        %v522 = vld [vmem:[%s183 + $0xa80] sm:$0xff]
        %v523 = vld [vmem:[%s183 + $0xa88] sm:$0xff]
        %v524 = vld [vmem:[%s183 + $0xa90] sm:$0xff]
        %v525 = vld [vmem:[%s183 + $0xa98] sm:$0xff]
        %v526 = vld [vmem:[%s183 + $0xaa0] sm:$0xff]
        %v527 = vld [vmem:[%s183 + $0xaa8] sm:$0xff]
        %v528 = vld [vmem:[%s183 + $0xab0] sm:$0xff]
        %v529 = vld [vmem:[%s183 + $0xab8] sm:$0xff]
        %v530 = vld [vmem:[%s183 + $0xac0] sm:$0xff]
        %v531 = vld [vmem:[%s183 + $0xac8] sm:$0xff]
        %v532 = vld [vmem:[%s183 + $0xad0] sm:$0xff]
        %v533 = vld [vmem:[%s183 + $0xad8] sm:$0xff]
        %v534 = vld [vmem:[%s183 + $0xae0] sm:$0xff]
        %v535 = vld [vmem:[%s183 + $0xae8] sm:$0xff]
        %v536 = vld [vmem:[%s183 + $0xaf0] sm:$0xff]
        %v537 = vld [vmem:[%s183 + $0xaf8] sm:$0xff]
        %v538 = vld [vmem:[%s183 + $0xb00] sm:$0xff]
        %v539 = vld [vmem:[%s183 + $0xb08] sm:$0xff]
        %v540 = vld [vmem:[%s183 + $0xb10] sm:$0xff]
        %v541 = vld [vmem:[%s183 + $0xb18] sm:$0xff]
        %v542 = vld [vmem:[%s183 + $0xb20] sm:$0xff]
        %v543 = vld [vmem:[%s183 + $0xb28] sm:$0xff]
        %v544 = vld [vmem:[%s183 + $0xb30] sm:$0xff]
        %v545 = vld [vmem:[%s183 + $0xb38] sm:$0xff]
        %v546 = vld [vmem:[%s183 + $0xb40] sm:$0xff]
        %v547 = vld [vmem:[%s183 + $0xb48] sm:$0xff]
        %v548 = vld [vmem:[%s183 + $0xb50] sm:$0xff]
        %v549 = vld [vmem:[%s183 + $0xb58] sm:$0xff]
        %v550 = vld [vmem:[%s183 + $0xb60] sm:$0xff]
        %v551 = vld [vmem:[%s183 + $0xb68] sm:$0xff]
        %v552 = vld [vmem:[%s183 + $0xb70] sm:$0xff]
        %v553 = vld [vmem:[%s183 + $0xb78] sm:$0xff]
        %v554 = vld [vmem:[%s183 + $0xb80] sm:$0xff]
        %v555 = vld [vmem:[%s183 + $0xb88] sm:$0xff]
        %v556 = vld [vmem:[%s183 + $0xb90] sm:$0xff]
        %v557 = vld [vmem:[%s183 + $0xb98] sm:$0xff]
        %v558 = vld [vmem:[%s183 + $0xba0] sm:$0xff]
        %v559 = vld [vmem:[%s183 + $0xba8] sm:$0xff]
        %v560 = vld [vmem:[%s183 + $0xbb0] sm:$0xff]
        %v561 = vld [vmem:[%s183 + $0xbb8] sm:$0xff]
        %v562 = vld [vmem:[%s183 + $0xbc0] sm:$0xff]
        %v563 = vld [vmem:[%s183 + $0xbc8] sm:$0xff]
        %v564 = vld [vmem:[%s183 + $0xbd0] sm:$0xff]
        %v565 = vld [vmem:[%s183 + $0xbd8] sm:$0xff]
        %v566 = vld [vmem:[%s183 + $0xbe0] sm:$0xff]
        %v567 = vld [vmem:[%s183 + $0xbe8] sm:$0xff]
        %v568 = vld [vmem:[%s183 + $0xbf0] sm:$0xff]
        %v569 = vld [vmem:[%s183 + $0xbf8] sm:$0xff]
        %v570 = vld [vmem:[%s183 + $0xc00] sm:$0xff]
        %v571 = vld [vmem:[%s183 + $0xc08] sm:$0xff]
        %v572 = vld [vmem:[%s183 + $0xc10] sm:$0xff]
        %v573 = vld [vmem:[%s183 + $0xc18] sm:$0xff]
        %v574 = vld [vmem:[%s183 + $0xc20] sm:$0xff]
        %v575 = vld [vmem:[%s183 + $0xc28] sm:$0xff]
        %v576 = vld [vmem:[%s183 + $0xc30] sm:$0xff]
        %v577 = vld [vmem:[%s183 + $0xc38] sm:$0xff]
        %v578 = vld [vmem:[%s183 + $0xc40] sm:$0xff]
        %v579 = vld [vmem:[%s183 + $0xc48] sm:$0xff]
        %v580 = vld [vmem:[%s183 + $0xc50] sm:$0xff]
        %v581 = vld [vmem:[%s183 + $0xc58] sm:$0xff]
        %v582 = vld [vmem:[%s183 + $0xc60] sm:$0xff]
        %v583 = vld [vmem:[%s183 + $0xc68] sm:$0xff]
        %v584 = vld [vmem:[%s183 + $0xc70] sm:$0xff]
        %v585 = vld [vmem:[%s183 + $0xc78] sm:$0xff]
        %v586 = vld [vmem:[%s183 + $0xc80] sm:$0xff]
        %v587 = vld [vmem:[%s183 + $0xc88] sm:$0xff]
        %v588 = vld [vmem:[%s183 + $0xc90] sm:$0xff]
        %v589 = vld [vmem:[%s183 + $0xc98] sm:$0xff]
        %v590 = vld [vmem:[%s183 + $0xca0] sm:$0xff]
        %v591 = vld [vmem:[%s183 + $0xca8] sm:$0xff]
        %v592 = vld [vmem:[%s183 + $0xcb0] sm:$0xff]
        %v593 = vld [vmem:[%s183 + $0xcb8] sm:$0xff]
        %v594 = vld [vmem:[%s183 + $0xcc0] sm:$0xff]
        %v595 = vld [vmem:[%s183 + $0xcc8] sm:$0xff]
        %v596 = vld [vmem:[%s183 + $0xcd0] sm:$0xff]
        %v597 = vld [vmem:[%s183 + $0xcd8] sm:$0xff]
        %v598 = vld [vmem:[%s183 + $0xce0] sm:$0xff]
        %v599 = vld [vmem:[%s183 + $0xce8] sm:$0xff]
        %v600 = vld [vmem:[%s183 + $0xcf0] sm:$0xff]
        %v601 = vld [vmem:[%s183 + $0xcf8] sm:$0xff]
        %v602 = vld [vmem:[%s183 + $0xd00] sm:$0xff]
        %v603 = vld [vmem:[%s183 + $0xd08] sm:$0xff]
        %v604 = vld [vmem:[%s183 + $0xd10] sm:$0xff]
        %v605 = vld [vmem:[%s183 + $0xd18] sm:$0xff]
        %v606 = vld [vmem:[%s183 + $0xd20] sm:$0xff]
        %v607 = vld [vmem:[%s183 + $0xd28] sm:$0xff]
        %v608 = vld [vmem:[%s183 + $0xd30] sm:$0xff]
        %v609 = vld [vmem:[%s183 + $0xd38] sm:$0xff]
        %v610 = vld [vmem:[%s183 + $0xd40] sm:$0xff]
        %v611 = vld [vmem:[%s183 + $0xd48] sm:$0xff]
        %v612 = vld [vmem:[%s183 + $0xd50] sm:$0xff]
        %v613 = vld [vmem:[%s183 + $0xd58] sm:$0xff]
        %v614 = vld [vmem:[%s183 + $0xd60] sm:$0xff]
        %v615 = vld [vmem:[%s183 + $0xd68] sm:$0xff]
        %v616 = vld [vmem:[%s183 + $0xd70] sm:$0xff]
        %v617 = vld [vmem:[%s183 + $0xd78] sm:$0xff]
        %v618 = vld [vmem:[%s183 + $0xd80] sm:$0xff]
        %v619 = vld [vmem:[%s183 + $0xd88] sm:$0xff]
        %v620 = vld [vmem:[%s183 + $0xd90] sm:$0xff]
        %v621 = vld [vmem:[%s183 + $0xd98] sm:$0xff]
        %v622 = vld [vmem:[%s183 + $0xda0] sm:$0xff]
        %v623 = vld [vmem:[%s183 + $0xda8] sm:$0xff]
        %v624 = vld [vmem:[%s183 + $0xdb0] sm:$0xff]
        %v625 = vld [vmem:[%s183 + $0xdb8] sm:$0xff]
        %v626 = vld [vmem:[%s183 + $0xdc0] sm:$0xff]
        %v627 = vld [vmem:[%s183 + $0xdc8] sm:$0xff]
        %v628 = vld [vmem:[%s183 + $0xdd0] sm:$0xff]
        %v629 = vld [vmem:[%s183 + $0xdd8] sm:$0xff]
        %v630 = vld [vmem:[%s183 + $0xde0] sm:$0xff]
        %v631 = vld [vmem:[%s183 + $0xde8] sm:$0xff]
        %v632 = vld [vmem:[%s183 + $0xdf0] sm:$0xff]
        %v633 = vld [vmem:[%s183 + $0xdf8] sm:$0xff]
        %v634 = vld [vmem:[%s183 + $0xe00] sm:$0xff]
        %v635 = vld [vmem:[%s183 + $0xe08] sm:$0xff]
        %v636 = vld [vmem:[%s183 + $0xe10] sm:$0xff]
        %v637 = vld [vmem:[%s183 + $0xe18] sm:$0xff]
        %v638 = vld [vmem:[%s183 + $0xe20] sm:$0xff]
        %v639 = vld [vmem:[%s183 + $0xe28] sm:$0xff]
        %v640 = vld [vmem:[%s183 + $0xe30] sm:$0xff]
        %v641 = vld [vmem:[%s183 + $0xe38] sm:$0xff]
        %v642 = vld [vmem:[%s183 + $0xe40] sm:$0xff]
        %v643 = vld [vmem:[%s183 + $0xe48] sm:$0xff]
        %v644 = vld [vmem:[%s183 + $0xe50] sm:$0xff]
        %v645 = vld [vmem:[%s183 + $0xe58] sm:$0xff]
        %v646 = vld [vmem:[%s183 + $0xe60] sm:$0xff]
        %v647 = vld [vmem:[%s183 + $0xe68] sm:$0xff]
        %v648 = vld [vmem:[%s183 + $0xe70] sm:$0xff]
        %v649 = vld [vmem:[%s183 + $0xe78] sm:$0xff]
        %v650 = vld [vmem:[%s183 + $0xe80] sm:$0xff]
        %v651 = vld [vmem:[%s183 + $0xe88] sm:$0xff]
        %v652 = vld [vmem:[%s183 + $0xe90] sm:$0xff]
        %v653 = vld [vmem:[%s183 + $0xe98] sm:$0xff]
        %v654 = vld [vmem:[%s183 + $0xea0] sm:$0xff]
        %v655 = vld [vmem:[%s183 + $0xea8] sm:$0xff]
        %v656 = vld [vmem:[%s183 + $0xeb0] sm:$0xff]
        %v657 = vld [vmem:[%s183 + $0xeb8] sm:$0xff]
        %v658 = vld [vmem:[%s183 + $0xec0] sm:$0xff]
        %v659 = vld [vmem:[%s183 + $0xec8] sm:$0xff]
        %v660 = vld [vmem:[%s183 + $0xed0] sm:$0xff]
        %v661 = vld [vmem:[%s183 + $0xed8] sm:$0xff]
        %v662 = vld [vmem:[%s183 + $0xee0] sm:$0xff]
        %v663 = vld [vmem:[%s183 + $0xee8] sm:$0xff]
        %v664 = vld [vmem:[%s183 + $0xef0] sm:$0xff]
        %v665 = vld [vmem:[%s183 + $0xef8] sm:$0xff]
        %v666 = vld [vmem:[%s183 + $0xf00] sm:$0xff]
        %v667 = vld [vmem:[%s183 + $0xf08] sm:$0xff]
        %v668 = vld [vmem:[%s183 + $0xf10] sm:$0xff]
        %v669 = vld [vmem:[%s183 + $0xf18] sm:$0xff]
        %v670 = vld [vmem:[%s183 + $0xf20] sm:$0xff]
        %v671 = vld [vmem:[%s183 + $0xf28] sm:$0xff]
        %v672 = vld [vmem:[%s183 + $0xf30] sm:$0xff]
        %v673 = vld [vmem:[%s183 + $0xf38] sm:$0xff]
        %v674 = vld [vmem:[%s183 + $0xf40] sm:$0xff]
        %v675 = vld [vmem:[%s183 + $0xf48] sm:$0xff]
        %v676 = vld [vmem:[%s183 + $0xf50] sm:$0xff]
        %v677 = vld [vmem:[%s183 + $0xf58] sm:$0xff]
        %v678 = vld [vmem:[%s183 + $0xf60] sm:$0xff]
        %v679 = vld [vmem:[%s183 + $0xf68] sm:$0xff]
        %v680 = vld [vmem:[%s183 + $0xf70] sm:$0xff]
        %v681 = vld [vmem:[%s183 + $0xf78] sm:$0xff]
        %v682 = vld [vmem:[%s183 + $0xf80] sm:$0xff]
        %v683 = vld [vmem:[%s183 + $0xf88] sm:$0xff]
        %v684 = vld [vmem:[%s183 + $0xf90] sm:$0xff]
        %v685 = vld [vmem:[%s183 + $0xf98] sm:$0xff]
        %v686 = vld [vmem:[%s183 + $0xfa0] sm:$0xff]
        %v687 = vld [vmem:[%s183 + $0xfa8] sm:$0xff]
        %v688 = vld [vmem:[%s183 + $0xfb0] sm:$0xff]
        %v689 = vld [vmem:[%s183 + $0xfb8] sm:$0xff]
        %v690 = vld [vmem:[%s183 + $0xfc0] sm:$0xff]
        %v691 = vld [vmem:[%s183 + $0xfc8] sm:$0xff]
        %v692 = vld [vmem:[%s183 + $0xfd0] sm:$0xff]
        %v693 = vld [vmem:[%s183 + $0xfd8] sm:$0xff]
        %v694 = vld [vmem:[%s183 + $0xfe0] sm:$0xff]
        %v695 = vld [vmem:[%s183 + $0xfe8] sm:$0xff]
        %v696 = vld [vmem:[%s183 + $0xff0] sm:$0xff]
        %v697 = vld [vmem:[%s183 + $0xff8] sm:$0xff]
        %v698 = vld [vmem:[%s152] sm:$0xff]
        %v699 = vld [vmem:[%s152 + $0x8] sm:$0xff]
        %v700 = vld [vmem:[%s152 + $0x10] sm:$0xff]
        %v701 = vld [vmem:[%s152 + $0x18] sm:$0xff]
        %v702 = vld [vmem:[%s152 + $0x20] sm:$0xff]
        %v703 = vld [vmem:[%s152 + $0x28] sm:$0xff]
        %v704 = vld [vmem:[%s152 + $0x30] sm:$0xff]
        %v705 = vld [vmem:[%s152 + $0x38] sm:$0xff]
        %v706 = vld [vmem:[%s152 + $0x40] sm:$0xff]
        %v707 = vld [vmem:[%s152 + $0x48] sm:$0xff]
        %v708 = vld [vmem:[%s152 + $0x50] sm:$0xff]
        %v709 = vld [vmem:[%s152 + $0x58] sm:$0xff]
        %v710 = vld [vmem:[%s152 + $0x60] sm:$0xff]
        %v711 = vld [vmem:[%s152 + $0x68] sm:$0xff]
        %v712 = vld [vmem:[%s152 + $0x70] sm:$0xff]
        %v713 = vld [vmem:[%s152 + $0x78] sm:$0xff]
        %v714 = vld [vmem:[%s152 + $0x80] sm:$0xff]
        %v715 = vld [vmem:[%s152 + $0x88] sm:$0xff]
        %v716 = vld [vmem:[%s152 + $0x90] sm:$0xff]
        %v717 = vld [vmem:[%s152 + $0x98] sm:$0xff]
        %v718 = vld [vmem:[%s152 + $0xa0] sm:$0xff]
        %v719 = vld [vmem:[%s152 + $0xa8] sm:$0xff]
        %v720 = vld [vmem:[%s152 + $0xb0] sm:$0xff]
        %v721 = vld [vmem:[%s152 + $0xb8] sm:$0xff]
        %v722 = vld [vmem:[%s152 + $0xc0] sm:$0xff]
        %v723 = vld [vmem:[%s152 + $0xc8] sm:$0xff]
        %v724 = vld [vmem:[%s152 + $0xd0] sm:$0xff]
        %v725 = vld [vmem:[%s152 + $0xd8] sm:$0xff]
        %v726 = vld [vmem:[%s152 + $0xe0] sm:$0xff]
        %v727 = vld [vmem:[%s152 + $0xe8] sm:$0xff]
        %v728 = vld [vmem:[%s152 + $0xf0] sm:$0xff]
        %v729 = vld [vmem:[%s152 + $0xf8] sm:$0xff]
        %v730 = vld [vmem:[%s152 + $0x100] sm:$0xff]
        %v731 = vld [vmem:[%s152 + $0x108] sm:$0xff]
        %v732 = vld [vmem:[%s152 + $0x110] sm:$0xff]
        %v733 = vld [vmem:[%s152 + $0x118] sm:$0xff]
        %v734 = vld [vmem:[%s152 + $0x120] sm:$0xff]
        %v735 = vld [vmem:[%s152 + $0x128] sm:$0xff]
        %v736 = vld [vmem:[%s152 + $0x130] sm:$0xff]
        %v737 = vld [vmem:[%s152 + $0x138] sm:$0xff]
        %v738 = vld [vmem:[%s152 + $0x140] sm:$0xff]
        %v739 = vld [vmem:[%s152 + $0x148] sm:$0xff]
        %v740 = vld [vmem:[%s152 + $0x150] sm:$0xff]
        %v741 = vld [vmem:[%s152 + $0x158] sm:$0xff]
        %v742 = vld [vmem:[%s152 + $0x160] sm:$0xff]
        %v743 = vld [vmem:[%s152 + $0x168] sm:$0xff]
        %v744 = vld [vmem:[%s152 + $0x170] sm:$0xff]
        %v745 = vld [vmem:[%s152 + $0x178] sm:$0xff]
        %v746 = vld [vmem:[%s152 + $0x180] sm:$0xff]
        %v747 = vld [vmem:[%s152 + $0x188] sm:$0xff]
        %v748 = vld [vmem:[%s152 + $0x190] sm:$0xff]
        %v749 = vld [vmem:[%s152 + $0x198] sm:$0xff]
        %v750 = vld [vmem:[%s152 + $0x1a0] sm:$0xff]
        %v751 = vld [vmem:[%s152 + $0x1a8] sm:$0xff]
        %v752 = vld [vmem:[%s152 + $0x1b0] sm:$0xff]
        %v753 = vld [vmem:[%s152 + $0x1b8] sm:$0xff]
        %v754 = vld [vmem:[%s152 + $0x1c0] sm:$0xff]
        %v755 = vld [vmem:[%s152 + $0x1c8] sm:$0xff]
        %v756 = vld [vmem:[%s152 + $0x1d0] sm:$0xff]
        %v757 = vld [vmem:[%s152 + $0x1d8] sm:$0xff]
        %v758 = vld [vmem:[%s152 + $0x1e0] sm:$0xff]
        %v759 = vld [vmem:[%s152 + $0x1e8] sm:$0xff]
        %v760 = vld [vmem:[%s152 + $0x1f0] sm:$0xff]
        %v761 = vld [vmem:[%s152 + $0x1f8] sm:$0xff]
        %v762 = vld [vmem:[%s152 + $0x200] sm:$0xff]
        %v763 = vld [vmem:[%s152 + $0x208] sm:$0xff]
        %v764 = vld [vmem:[%s152 + $0x210] sm:$0xff]
        %v765 = vld [vmem:[%s152 + $0x218] sm:$0xff]
        %v766 = vld [vmem:[%s152 + $0x220] sm:$0xff]
        %v767 = vld [vmem:[%s152 + $0x228] sm:$0xff]
        %v768 = vld [vmem:[%s152 + $0x230] sm:$0xff]
        %v769 = vld [vmem:[%s152 + $0x238] sm:$0xff]
        %v770 = vld [vmem:[%s152 + $0x240] sm:$0xff]
        %v771 = vld [vmem:[%s152 + $0x248] sm:$0xff]
        %v772 = vld [vmem:[%s152 + $0x250] sm:$0xff]
        %v773 = vld [vmem:[%s152 + $0x258] sm:$0xff]
        %v774 = vld [vmem:[%s152 + $0x260] sm:$0xff]
        %v775 = vld [vmem:[%s152 + $0x268] sm:$0xff]
        %v776 = vld [vmem:[%s152 + $0x270] sm:$0xff]
        %v777 = vld [vmem:[%s152 + $0x278] sm:$0xff]
        %v778 = vld [vmem:[%s152 + $0x280] sm:$0xff]
        %v779 = vld [vmem:[%s152 + $0x288] sm:$0xff]
        %v780 = vld [vmem:[%s152 + $0x290] sm:$0xff]
        %v781 = vld [vmem:[%s152 + $0x298] sm:$0xff]
        %v782 = vld [vmem:[%s152 + $0x2a0] sm:$0xff]
        %v783 = vld [vmem:[%s152 + $0x2a8] sm:$0xff]
        %v784 = vld [vmem:[%s152 + $0x2b0] sm:$0xff]
        %v785 = vld [vmem:[%s152 + $0x2b8] sm:$0xff]
        %v786 = vld [vmem:[%s152 + $0x2c0] sm:$0xff]
        %v787 = vld [vmem:[%s152 + $0x2c8] sm:$0xff]
        %v788 = vld [vmem:[%s152 + $0x2d0] sm:$0xff]
        %v789 = vld [vmem:[%s152 + $0x2d8] sm:$0xff]
        %v790 = vld [vmem:[%s152 + $0x2e0] sm:$0xff]
        %v791 = vld [vmem:[%s152 + $0x2e8] sm:$0xff]
        %v792 = vld [vmem:[%s152 + $0x2f0] sm:$0xff]
        %v793 = vld [vmem:[%s152 + $0x2f8] sm:$0xff]
        %v794 = vld [vmem:[%s152 + $0x300] sm:$0xff]
        %v795 = vld [vmem:[%s152 + $0x308] sm:$0xff]
        %v796 = vld [vmem:[%s152 + $0x310] sm:$0xff]
        %v797 = vld [vmem:[%s152 + $0x318] sm:$0xff]
        %v798 = vld [vmem:[%s152 + $0x320] sm:$0xff]
        %v799 = vld [vmem:[%s152 + $0x328] sm:$0xff]
        %v800 = vld [vmem:[%s152 + $0x330] sm:$0xff]
        %v801 = vld [vmem:[%s152 + $0x338] sm:$0xff]
        %v802 = vld [vmem:[%s152 + $0x340] sm:$0xff]
        %v803 = vld [vmem:[%s152 + $0x348] sm:$0xff]
        %v804 = vld [vmem:[%s152 + $0x350] sm:$0xff]
        %v805 = vld [vmem:[%s152 + $0x358] sm:$0xff]
        %v806 = vld [vmem:[%s152 + $0x360] sm:$0xff]
        %v807 = vld [vmem:[%s152 + $0x368] sm:$0xff]
        %v808 = vld [vmem:[%s152 + $0x370] sm:$0xff]
        %v809 = vld [vmem:[%s152 + $0x378] sm:$0xff]
        %v810 = vld [vmem:[%s152 + $0x380] sm:$0xff]
        %v811 = vld [vmem:[%s152 + $0x388] sm:$0xff]
        %v812 = vld [vmem:[%s152 + $0x390] sm:$0xff]
        %v813 = vld [vmem:[%s152 + $0x398] sm:$0xff]
        %v814 = vld [vmem:[%s152 + $0x3a0] sm:$0xff]
        %v815 = vld [vmem:[%s152 + $0x3a8] sm:$0xff]
        %v816 = vld [vmem:[%s152 + $0x3b0] sm:$0xff]
        %v817 = vld [vmem:[%s152 + $0x3b8] sm:$0xff]
        %v818 = vld [vmem:[%s152 + $0x3c0] sm:$0xff]
        %v819 = vld [vmem:[%s152 + $0x3c8] sm:$0xff]
        %v820 = vld [vmem:[%s152 + $0x3d0] sm:$0xff]
        %v821 = vld [vmem:[%s152 + $0x3d8] sm:$0xff]
        %v822 = vld [vmem:[%s152 + $0x3e0] sm:$0xff]
        %v823 = vld [vmem:[%s152 + $0x3e8] sm:$0xff]
        %v824 = vld [vmem:[%s152 + $0x3f0] sm:$0xff]
        %v825 = vld [vmem:[%s152 + $0x3f8] sm:$0xff]
        %v826 = vld [vmem:[%s152 + $0x400] sm:$0xff]
        %v827 = vld [vmem:[%s152 + $0x408] sm:$0xff]
        %v828 = vld [vmem:[%s152 + $0x410] sm:$0xff]
        %v829 = vld [vmem:[%s152 + $0x418] sm:$0xff]
        %v830 = vld [vmem:[%s152 + $0x420] sm:$0xff]
        %v831 = vld [vmem:[%s152 + $0x428] sm:$0xff]
        %v832 = vld [vmem:[%s152 + $0x430] sm:$0xff]
        %v833 = vld [vmem:[%s152 + $0x438] sm:$0xff]
        %v834 = vld [vmem:[%s152 + $0x440] sm:$0xff]
        %v835 = vld [vmem:[%s152 + $0x448] sm:$0xff]
        %v836 = vld [vmem:[%s152 + $0x450] sm:$0xff]
        %v837 = vld [vmem:[%s152 + $0x458] sm:$0xff]
        %v838 = vld [vmem:[%s152 + $0x460] sm:$0xff]
        %v839 = vld [vmem:[%s152 + $0x468] sm:$0xff]
        %v840 = vld [vmem:[%s152 + $0x470] sm:$0xff]
        %v841 = vld [vmem:[%s152 + $0x478] sm:$0xff]
        %v842 = vld [vmem:[%s152 + $0x480] sm:$0xff]
        %v843 = vld [vmem:[%s152 + $0x488] sm:$0xff]
        %v844 = vld [vmem:[%s152 + $0x490] sm:$0xff]
        %v845 = vld [vmem:[%s152 + $0x498] sm:$0xff]
        %v846 = vld [vmem:[%s152 + $0x4a0] sm:$0xff]
        %v847 = vld [vmem:[%s152 + $0x4a8] sm:$0xff]
        %v848 = vld [vmem:[%s152 + $0x4b0] sm:$0xff]
        %v849 = vld [vmem:[%s152 + $0x4b8] sm:$0xff]
        %v850 = vld [vmem:[%s152 + $0x4c0] sm:$0xff]
        %v851 = vld [vmem:[%s152 + $0x4c8] sm:$0xff]
        %v852 = vld [vmem:[%s152 + $0x4d0] sm:$0xff]
        %v853 = vld [vmem:[%s152 + $0x4d8] sm:$0xff]
        %v854 = vld [vmem:[%s152 + $0x4e0] sm:$0xff]
        %v855 = vld [vmem:[%s152 + $0x4e8] sm:$0xff]
        %v856 = vld [vmem:[%s152 + $0x4f0] sm:$0xff]
        %v857 = vld [vmem:[%s152 + $0x4f8] sm:$0xff]
        %v858 = vld [vmem:[%s152 + $0x500] sm:$0xff]
        %v859 = vld [vmem:[%s152 + $0x508] sm:$0xff]
        %v860 = vld [vmem:[%s152 + $0x510] sm:$0xff]
        %v861 = vld [vmem:[%s152 + $0x518] sm:$0xff]
        %v862 = vld [vmem:[%s152 + $0x520] sm:$0xff]
        %v863 = vld [vmem:[%s152 + $0x528] sm:$0xff]
        %v864 = vld [vmem:[%s152 + $0x530] sm:$0xff]
        %v865 = vld [vmem:[%s152 + $0x538] sm:$0xff]
        %v866 = vld [vmem:[%s152 + $0x540] sm:$0xff]
        %v867 = vld [vmem:[%s152 + $0x548] sm:$0xff]
        %v868 = vld [vmem:[%s152 + $0x550] sm:$0xff]
        %v869 = vld [vmem:[%s152 + $0x558] sm:$0xff]
        %v870 = vld [vmem:[%s152 + $0x560] sm:$0xff]
        %v871 = vld [vmem:[%s152 + $0x568] sm:$0xff]
        %v872 = vld [vmem:[%s152 + $0x570] sm:$0xff]
        %v873 = vld [vmem:[%s152 + $0x578] sm:$0xff]
        %v874 = vld [vmem:[%s152 + $0x580] sm:$0xff]
        %v875 = vld [vmem:[%s152 + $0x588] sm:$0xff]
        %v876 = vld [vmem:[%s152 + $0x590] sm:$0xff]
        %v877 = vld [vmem:[%s152 + $0x598] sm:$0xff]
        %v878 = vld [vmem:[%s152 + $0x5a0] sm:$0xff]
        %v879 = vld [vmem:[%s152 + $0x5a8] sm:$0xff]
        %v880 = vld [vmem:[%s152 + $0x5b0] sm:$0xff]
        %v881 = vld [vmem:[%s152 + $0x5b8] sm:$0xff]
        %v882 = vld [vmem:[%s152 + $0x5c0] sm:$0xff]
        %v883 = vld [vmem:[%s152 + $0x5c8] sm:$0xff]
        %v884 = vld [vmem:[%s152 + $0x5d0] sm:$0xff]
        %v885 = vld [vmem:[%s152 + $0x5d8] sm:$0xff]
        %v886 = vld [vmem:[%s152 + $0x5e0] sm:$0xff]
        %v887 = vld [vmem:[%s152 + $0x5e8] sm:$0xff]
        %v888 = vld [vmem:[%s152 + $0x5f0] sm:$0xff]
        %v889 = vld [vmem:[%s152 + $0x5f8] sm:$0xff]
        %v890 = vld [vmem:[%s152 + $0x600] sm:$0xff]
        %v891 = vld [vmem:[%s152 + $0x608] sm:$0xff]
        %v892 = vld [vmem:[%s152 + $0x610] sm:$0xff]
        %v893 = vld [vmem:[%s152 + $0x618] sm:$0xff]
        %v894 = vld [vmem:[%s152 + $0x620] sm:$0xff]
        %v895 = vld [vmem:[%s152 + $0x628] sm:$0xff]
        %v896 = vld [vmem:[%s152 + $0x630] sm:$0xff]
        %v897 = vld [vmem:[%s152 + $0x638] sm:$0xff]
        %v898 = vld [vmem:[%s152 + $0x640] sm:$0xff]
        %v899 = vld [vmem:[%s152 + $0x648] sm:$0xff]
        %v900 = vld [vmem:[%s152 + $0x650] sm:$0xff]
        %v901 = vld [vmem:[%s152 + $0x658] sm:$0xff]
        %v902 = vld [vmem:[%s152 + $0x660] sm:$0xff]
        %v903 = vld [vmem:[%s152 + $0x668] sm:$0xff]
        %v904 = vld [vmem:[%s152 + $0x670] sm:$0xff]
        %v905 = vld [vmem:[%s152 + $0x678] sm:$0xff]
        %v906 = vld [vmem:[%s152 + $0x680] sm:$0xff]
        %v907 = vld [vmem:[%s152 + $0x688] sm:$0xff]
        %v908 = vld [vmem:[%s152 + $0x690] sm:$0xff]
        %v909 = vld [vmem:[%s152 + $0x698] sm:$0xff]
        %v910 = vld [vmem:[%s152 + $0x6a0] sm:$0xff]
        %v911 = vld [vmem:[%s152 + $0x6a8] sm:$0xff]
        %v912 = vld [vmem:[%s152 + $0x6b0] sm:$0xff]
        %v913 = vld [vmem:[%s152 + $0x6b8] sm:$0xff]
        %v914 = vld [vmem:[%s152 + $0x6c0] sm:$0xff]
        %v915 = vld [vmem:[%s152 + $0x6c8] sm:$0xff]
        %v916 = vld [vmem:[%s152 + $0x6d0] sm:$0xff]
        %v917 = vld [vmem:[%s152 + $0x6d8] sm:$0xff]
        %v918 = vld [vmem:[%s152 + $0x6e0] sm:$0xff]
        %v919 = vld [vmem:[%s152 + $0x6e8] sm:$0xff]
        %v920 = vld [vmem:[%s152 + $0x6f0] sm:$0xff]
        %v921 = vld [vmem:[%s152 + $0x6f8] sm:$0xff]
        %v922 = vld [vmem:[%s152 + $0x700] sm:$0xff]
        %v923 = vld [vmem:[%s152 + $0x708] sm:$0xff]
        %v924 = vld [vmem:[%s152 + $0x710] sm:$0xff]
        %v925 = vld [vmem:[%s152 + $0x718] sm:$0xff]
        %v926 = vld [vmem:[%s152 + $0x720] sm:$0xff]
        %v927 = vld [vmem:[%s152 + $0x728] sm:$0xff]
        %v928 = vld [vmem:[%s152 + $0x730] sm:$0xff]
        %v929 = vld [vmem:[%s152 + $0x738] sm:$0xff]
        %v930 = vld [vmem:[%s152 + $0x740] sm:$0xff]
        %v931 = vld [vmem:[%s152 + $0x748] sm:$0xff]
        %v932 = vld [vmem:[%s152 + $0x750] sm:$0xff]
        %v933 = vld [vmem:[%s152 + $0x758] sm:$0xff]
        %v934 = vld [vmem:[%s152 + $0x760] sm:$0xff]
        %v935 = vld [vmem:[%s152 + $0x768] sm:$0xff]
        %v936 = vld [vmem:[%s152 + $0x770] sm:$0xff]
        %v937 = vld [vmem:[%s152 + $0x778] sm:$0xff]
        %v938 = vld [vmem:[%s152 + $0x780] sm:$0xff]
        %v939 = vld [vmem:[%s152 + $0x788] sm:$0xff]
        %v940 = vld [vmem:[%s152 + $0x790] sm:$0xff]
        %v941 = vld [vmem:[%s152 + $0x798] sm:$0xff]
        %v942 = vld [vmem:[%s152 + $0x7a0] sm:$0xff]
        %v943 = vld [vmem:[%s152 + $0x7a8] sm:$0xff]
        %v944 = vld [vmem:[%s152 + $0x7b0] sm:$0xff]
        %v945 = vld [vmem:[%s152 + $0x7b8] sm:$0xff]
        %v946 = vld [vmem:[%s152 + $0x7c0] sm:$0xff]
        %v947 = vld [vmem:[%s152 + $0x7c8] sm:$0xff]
        %v948 = vld [vmem:[%s152 + $0x7d0] sm:$0xff]
        %v949 = vld [vmem:[%s152 + $0x7d8] sm:$0xff]
        %v950 = vld [vmem:[%s152 + $0x7e0] sm:$0xff]
        %v951 = vld [vmem:[%s152 + $0x7e8] sm:$0xff]
        %v952 = vld [vmem:[%s152 + $0x7f0] sm:$0xff]
        %v953 = vld [vmem:[%s152 + $0x7f8] sm:$0xff]
        %v954 = vld [vmem:[%s152 + $0x800] sm:$0xff]
        %v955 = vld [vmem:[%s152 + $0x808] sm:$0xff]
        %v956 = vld [vmem:[%s152 + $0x810] sm:$0xff]
        %v957 = vld [vmem:[%s152 + $0x818] sm:$0xff]
        %v958 = vld [vmem:[%s152 + $0x820] sm:$0xff]
        %v959 = vld [vmem:[%s152 + $0x828] sm:$0xff]
        %v960 = vld [vmem:[%s152 + $0x830] sm:$0xff]
        %v961 = vld [vmem:[%s152 + $0x838] sm:$0xff]
        %v962 = vld [vmem:[%s152 + $0x840] sm:$0xff]
        %v963 = vld [vmem:[%s152 + $0x848] sm:$0xff]
        %v964 = vld [vmem:[%s152 + $0x850] sm:$0xff]
        %v965 = vld [vmem:[%s152 + $0x858] sm:$0xff]
        %v966 = vld [vmem:[%s152 + $0x860] sm:$0xff]
        %v967 = vld [vmem:[%s152 + $0x868] sm:$0xff]
        %v968 = vld [vmem:[%s152 + $0x870] sm:$0xff]
        %v969 = vld [vmem:[%s152 + $0x878] sm:$0xff]
        %v970 = vld [vmem:[%s152 + $0x880] sm:$0xff]
        %v971 = vld [vmem:[%s152 + $0x888] sm:$0xff]
        %v972 = vld [vmem:[%s152 + $0x890] sm:$0xff]
        %v973 = vld [vmem:[%s152 + $0x898] sm:$0xff]
        %v974 = vld [vmem:[%s152 + $0x8a0] sm:$0xff]
        %v975 = vld [vmem:[%s152 + $0x8a8] sm:$0xff]
        %v976 = vld [vmem:[%s152 + $0x8b0] sm:$0xff]
        %v977 = vld [vmem:[%s152 + $0x8b8] sm:$0xff]
        %v978 = vld [vmem:[%s152 + $0x8c0] sm:$0xff]
        %v979 = vld [vmem:[%s152 + $0x8c8] sm:$0xff]
        %v980 = vld [vmem:[%s152 + $0x8d0] sm:$0xff]
        %v981 = vld [vmem:[%s152 + $0x8d8] sm:$0xff]
        %v982 = vld [vmem:[%s152 + $0x8e0] sm:$0xff]
        %v983 = vld [vmem:[%s152 + $0x8e8] sm:$0xff]
        %v984 = vld [vmem:[%s152 + $0x8f0] sm:$0xff]
        %v985 = vld [vmem:[%s152 + $0x8f8] sm:$0xff]
        %v986 = vld [vmem:[%s152 + $0x900] sm:$0xff]
        %v987 = vld [vmem:[%s152 + $0x908] sm:$0xff]
        %v988 = vld [vmem:[%s152 + $0x910] sm:$0xff]
        %v989 = vld [vmem:[%s152 + $0x918] sm:$0xff]
        %v990 = vld [vmem:[%s152 + $0x920] sm:$0xff]
        %v991 = vld [vmem:[%s152 + $0x928] sm:$0xff]
        %v992 = vld [vmem:[%s152 + $0x930] sm:$0xff]
        %v993 = vld [vmem:[%s152 + $0x938] sm:$0xff]
        %v994 = vld [vmem:[%s152 + $0x940] sm:$0xff]
        %v995 = vld [vmem:[%s152 + $0x948] sm:$0xff]
        %v996 = vld [vmem:[%s152 + $0x950] sm:$0xff]
        %v997 = vld [vmem:[%s152 + $0x958] sm:$0xff]
        %v998 = vld [vmem:[%s152 + $0x960] sm:$0xff]
        %v999 = vld [vmem:[%s152 + $0x968] sm:$0xff]
        %v1000 = vld [vmem:[%s152 + $0x970] sm:$0xff]
        %v1001 = vld [vmem:[%s152 + $0x978] sm:$0xff]
        %v1002 = vld [vmem:[%s152 + $0x980] sm:$0xff]
        %v1003 = vld [vmem:[%s152 + $0x988] sm:$0xff]
        %v1004 = vld [vmem:[%s152 + $0x990] sm:$0xff]
        %v1005 = vld [vmem:[%s152 + $0x998] sm:$0xff]
        %v1006 = vld [vmem:[%s152 + $0x9a0] sm:$0xff]
        %v1007 = vld [vmem:[%s152 + $0x9a8] sm:$0xff]
        %v1008 = vld [vmem:[%s152 + $0x9b0] sm:$0xff]
        %v1009 = vld [vmem:[%s152 + $0x9b8] sm:$0xff]
        %v1010 = vld [vmem:[%s152 + $0x9c0] sm:$0xff]
        %v1011 = vld [vmem:[%s152 + $0x9c8] sm:$0xff]
        %v1012 = vld [vmem:[%s152 + $0x9d0] sm:$0xff]
        %v1013 = vld [vmem:[%s152 + $0x9d8] sm:$0xff]
        %v1014 = vld [vmem:[%s152 + $0x9e0] sm:$0xff]
        %v1015 = vld [vmem:[%s152 + $0x9e8] sm:$0xff]
        %v1016 = vld [vmem:[%s152 + $0x9f0] sm:$0xff]
        %v1017 = vld [vmem:[%s152 + $0x9f8] sm:$0xff]
        %v1018 = vld [vmem:[%s152 + $0xa00] sm:$0xff]
        %v1019 = vld [vmem:[%s152 + $0xa08] sm:$0xff]
        %v1020 = vld [vmem:[%s152 + $0xa10] sm:$0xff]
        %v1021 = vld [vmem:[%s152 + $0xa18] sm:$0xff]
        %v1022 = vld [vmem:[%s152 + $0xa20] sm:$0xff]
        %v1023 = vld [vmem:[%s152 + $0xa28] sm:$0xff]
        %v1024 = vld [vmem:[%s152 + $0xa30] sm:$0xff]
        %v1025 = vld [vmem:[%s152 + $0xa38] sm:$0xff]
        %v1026 = vld [vmem:[%s152 + $0xa40] sm:$0xff]
        %v1027 = vld [vmem:[%s152 + $0xa48] sm:$0xff]
        %v1028 = vld [vmem:[%s152 + $0xa50] sm:$0xff]
        %v1029 = vld [vmem:[%s152 + $0xa58] sm:$0xff]
        %v1030 = vld [vmem:[%s152 + $0xa60] sm:$0xff]
        %v1031 = vld [vmem:[%s152 + $0xa68] sm:$0xff]
        %v1032 = vld [vmem:[%s152 + $0xa70] sm:$0xff]
        %v1033 = vld [vmem:[%s152 + $0xa78] sm:$0xff]
        %v1034 = vld [vmem:[%s152 + $0xa80] sm:$0xff]
        %v1035 = vld [vmem:[%s152 + $0xa88] sm:$0xff]
        %v1036 = vld [vmem:[%s152 + $0xa90] sm:$0xff]
        %v1037 = vld [vmem:[%s152 + $0xa98] sm:$0xff]
        %v1038 = vld [vmem:[%s152 + $0xaa0] sm:$0xff]
        %v1039 = vld [vmem:[%s152 + $0xaa8] sm:$0xff]
        %v1040 = vld [vmem:[%s152 + $0xab0] sm:$0xff]
        %v1041 = vld [vmem:[%s152 + $0xab8] sm:$0xff]
        %v1042 = vld [vmem:[%s152 + $0xac0] sm:$0xff]
        %v1043 = vld [vmem:[%s152 + $0xac8] sm:$0xff]
        %v1044 = vld [vmem:[%s152 + $0xad0] sm:$0xff]
        %v1045 = vld [vmem:[%s152 + $0xad8] sm:$0xff]
        %v1046 = vld [vmem:[%s152 + $0xae0] sm:$0xff]
        %v1047 = vld [vmem:[%s152 + $0xae8] sm:$0xff]
        %v1048 = vld [vmem:[%s152 + $0xaf0] sm:$0xff]
        %v1049 = vld [vmem:[%s152 + $0xaf8] sm:$0xff]
        %v1050 = vld [vmem:[%s152 + $0xb00] sm:$0xff]
        %v1051 = vld [vmem:[%s152 + $0xb08] sm:$0xff]
        %v1052 = vld [vmem:[%s152 + $0xb10] sm:$0xff]
        %v1053 = vld [vmem:[%s152 + $0xb18] sm:$0xff]
        %v1054 = vld [vmem:[%s152 + $0xb20] sm:$0xff]
        %v1055 = vld [vmem:[%s152 + $0xb28] sm:$0xff]
        %v1056 = vld [vmem:[%s152 + $0xb30] sm:$0xff]
        %v1057 = vld [vmem:[%s152 + $0xb38] sm:$0xff]
        %v1058 = vld [vmem:[%s152 + $0xb40] sm:$0xff]
        %v1059 = vld [vmem:[%s152 + $0xb48] sm:$0xff]
        %v1060 = vld [vmem:[%s152 + $0xb50] sm:$0xff]
        %v1061 = vld [vmem:[%s152 + $0xb58] sm:$0xff]
        %v1062 = vld [vmem:[%s152 + $0xb60] sm:$0xff]
        %v1063 = vld [vmem:[%s152 + $0xb68] sm:$0xff]
        %v1064 = vld [vmem:[%s152 + $0xb70] sm:$0xff]
        %v1065 = vld [vmem:[%s152 + $0xb78] sm:$0xff]
        %v1066 = vld [vmem:[%s152 + $0xb80] sm:$0xff]
        %v1067 = vld [vmem:[%s152 + $0xb88] sm:$0xff]
        %v1068 = vld [vmem:[%s152 + $0xb90] sm:$0xff]
        %v1069 = vld [vmem:[%s152 + $0xb98] sm:$0xff]
        %v1070 = vld [vmem:[%s152 + $0xba0] sm:$0xff]
        %v1071 = vld [vmem:[%s152 + $0xba8] sm:$0xff]
        %v1072 = vld [vmem:[%s152 + $0xbb0] sm:$0xff]
        %v1073 = vld [vmem:[%s152 + $0xbb8] sm:$0xff]
        %v1074 = vld [vmem:[%s152 + $0xbc0] sm:$0xff]
        %v1075 = vld [vmem:[%s152 + $0xbc8] sm:$0xff]
        %v1076 = vld [vmem:[%s152 + $0xbd0] sm:$0xff]
        %v1077 = vld [vmem:[%s152 + $0xbd8] sm:$0xff]
        %v1078 = vld [vmem:[%s152 + $0xbe0] sm:$0xff]
        %v1079 = vld [vmem:[%s152 + $0xbe8] sm:$0xff]
        %v1080 = vld [vmem:[%s152 + $0xbf0] sm:$0xff]
        %v1081 = vld [vmem:[%s152 + $0xbf8] sm:$0xff]
        %v1082 = vld [vmem:[%s152 + $0xc00] sm:$0xff]
        %v1083 = vld [vmem:[%s152 + $0xc08] sm:$0xff]
        %v1084 = vld [vmem:[%s152 + $0xc10] sm:$0xff]
        %v1085 = vld [vmem:[%s152 + $0xc18] sm:$0xff]
        %v1086 = vld [vmem:[%s152 + $0xc20] sm:$0xff]
        %v1087 = vld [vmem:[%s152 + $0xc28] sm:$0xff]
        %v1088 = vld [vmem:[%s152 + $0xc30] sm:$0xff]
        %v1089 = vld [vmem:[%s152 + $0xc38] sm:$0xff]
        %v1090 = vld [vmem:[%s152 + $0xc40] sm:$0xff]
        %v1091 = vld [vmem:[%s152 + $0xc48] sm:$0xff]
        %v1092 = vld [vmem:[%s152 + $0xc50] sm:$0xff]
        %v1093 = vld [vmem:[%s152 + $0xc58] sm:$0xff]
        %v1094 = vld [vmem:[%s152 + $0xc60] sm:$0xff]
        %v1095 = vld [vmem:[%s152 + $0xc68] sm:$0xff]
        %v1096 = vld [vmem:[%s152 + $0xc70] sm:$0xff]
        %v1097 = vld [vmem:[%s152 + $0xc78] sm:$0xff]
        %v1098 = vld [vmem:[%s152 + $0xc80] sm:$0xff]
        %v1099 = vld [vmem:[%s152 + $0xc88] sm:$0xff]
        %v1100 = vld [vmem:[%s152 + $0xc90] sm:$0xff]
        %v1101 = vld [vmem:[%s152 + $0xc98] sm:$0xff]
        %v1102 = vld [vmem:[%s152 + $0xca0] sm:$0xff]
        %v1103 = vld [vmem:[%s152 + $0xca8] sm:$0xff]
        %v1104 = vld [vmem:[%s152 + $0xcb0] sm:$0xff]
        %v1105 = vld [vmem:[%s152 + $0xcb8] sm:$0xff]
        %v1106 = vld [vmem:[%s152 + $0xcc0] sm:$0xff]
        %v1107 = vld [vmem:[%s152 + $0xcc8] sm:$0xff]
        %v1108 = vld [vmem:[%s152 + $0xcd0] sm:$0xff]
        %v1109 = vld [vmem:[%s152 + $0xcd8] sm:$0xff]
        %v1110 = vld [vmem:[%s152 + $0xce0] sm:$0xff]
        %v1111 = vld [vmem:[%s152 + $0xce8] sm:$0xff]
        %v1112 = vld [vmem:[%s152 + $0xcf0] sm:$0xff]
        %v1113 = vld [vmem:[%s152 + $0xcf8] sm:$0xff]
        %v1114 = vld [vmem:[%s152 + $0xd00] sm:$0xff]
        %v1115 = vld [vmem:[%s152 + $0xd08] sm:$0xff]
        %v1116 = vld [vmem:[%s152 + $0xd10] sm:$0xff]
        %v1117 = vld [vmem:[%s152 + $0xd18] sm:$0xff]
        %v1118 = vld [vmem:[%s152 + $0xd20] sm:$0xff]
        %v1119 = vld [vmem:[%s152 + $0xd28] sm:$0xff]
        %v1120 = vld [vmem:[%s152 + $0xd30] sm:$0xff]
        %v1121 = vld [vmem:[%s152 + $0xd38] sm:$0xff]
        %v1122 = vld [vmem:[%s152 + $0xd40] sm:$0xff]
        %v1123 = vld [vmem:[%s152 + $0xd48] sm:$0xff]
        %v1124 = vld [vmem:[%s152 + $0xd50] sm:$0xff]
        %v1125 = vld [vmem:[%s152 + $0xd58] sm:$0xff]
        %v1126 = vld [vmem:[%s152 + $0xd60] sm:$0xff]
        %v1127 = vld [vmem:[%s152 + $0xd68] sm:$0xff]
        %v1128 = vld [vmem:[%s152 + $0xd70] sm:$0xff]
        %v1129 = vld [vmem:[%s152 + $0xd78] sm:$0xff]
        %v1130 = vld [vmem:[%s152 + $0xd80] sm:$0xff]
        %v1131 = vld [vmem:[%s152 + $0xd88] sm:$0xff]
        %v1132 = vld [vmem:[%s152 + $0xd90] sm:$0xff]
        %v1133 = vld [vmem:[%s152 + $0xd98] sm:$0xff]
        %v1134 = vld [vmem:[%s152 + $0xda0] sm:$0xff]
        %v1135 = vld [vmem:[%s152 + $0xda8] sm:$0xff]
        %v1136 = vld [vmem:[%s152 + $0xdb0] sm:$0xff]
        %v1137 = vld [vmem:[%s152 + $0xdb8] sm:$0xff]
        %v1138 = vld [vmem:[%s152 + $0xdc0] sm:$0xff]
        %v1139 = vld [vmem:[%s152 + $0xdc8] sm:$0xff]
        %v1140 = vld [vmem:[%s152 + $0xdd0] sm:$0xff]
        %v1141 = vld [vmem:[%s152 + $0xdd8] sm:$0xff]
        %v1142 = vld [vmem:[%s152 + $0xde0] sm:$0xff]
        %v1143 = vld [vmem:[%s152 + $0xde8] sm:$0xff]
        %v1144 = vld [vmem:[%s152 + $0xdf0] sm:$0xff]
        %v1145 = vld [vmem:[%s152 + $0xdf8] sm:$0xff]
        %v1146 = vld [vmem:[%s152 + $0xe00] sm:$0xff]
        %v1147 = vld [vmem:[%s152 + $0xe08] sm:$0xff]
        %v1148 = vld [vmem:[%s152 + $0xe10] sm:$0xff]
        %v1149 = vld [vmem:[%s152 + $0xe18] sm:$0xff]
        %v1150 = vld [vmem:[%s152 + $0xe20] sm:$0xff]
        %v1151 = vld [vmem:[%s152 + $0xe28] sm:$0xff]
        %v1152 = vld [vmem:[%s152 + $0xe30] sm:$0xff]
        %v1153 = vld [vmem:[%s152 + $0xe38] sm:$0xff]
        %v1154 = vld [vmem:[%s152 + $0xe40] sm:$0xff]
        %v1155 = vld [vmem:[%s152 + $0xe48] sm:$0xff]
        %v1156 = vld [vmem:[%s152 + $0xe50] sm:$0xff]
        %v1157 = vld [vmem:[%s152 + $0xe58] sm:$0xff]
        %v1158 = vld [vmem:[%s152 + $0xe60] sm:$0xff]
        %v1159 = vld [vmem:[%s152 + $0xe68] sm:$0xff]
        %v1160 = vld [vmem:[%s152 + $0xe70] sm:$0xff]
        %v1161 = vld [vmem:[%s152 + $0xe78] sm:$0xff]
        %v1162 = vld [vmem:[%s152 + $0xe80] sm:$0xff]
        %v1163 = vld [vmem:[%s152 + $0xe88] sm:$0xff]
        %v1164 = vld [vmem:[%s152 + $0xe90] sm:$0xff]
        %v1165 = vld [vmem:[%s152 + $0xe98] sm:$0xff]
        %v1166 = vld [vmem:[%s152 + $0xea0] sm:$0xff]
        %v1167 = vld [vmem:[%s152 + $0xea8] sm:$0xff]
        %v1168 = vld [vmem:[%s152 + $0xeb0] sm:$0xff]
        %v1169 = vld [vmem:[%s152 + $0xeb8] sm:$0xff]
        %v1170 = vld [vmem:[%s152 + $0xec0] sm:$0xff]
        %v1171 = vld [vmem:[%s152 + $0xec8] sm:$0xff]
        %v1172 = vld [vmem:[%s152 + $0xed0] sm:$0xff]
        %v1173 = vld [vmem:[%s152 + $0xed8] sm:$0xff]
        %v1174 = vld [vmem:[%s152 + $0xee0] sm:$0xff]
        %v1175 = vld [vmem:[%s152 + $0xee8] sm:$0xff]
        %v1176 = vld [vmem:[%s152 + $0xef0] sm:$0xff]
        %v1177 = vld [vmem:[%s152 + $0xef8] sm:$0xff]
        %v1178 = vld [vmem:[%s152 + $0xf00] sm:$0xff]
        %v1179 = vld [vmem:[%s152 + $0xf08] sm:$0xff]
        %v1180 = vld [vmem:[%s152 + $0xf10] sm:$0xff]
        %v1181 = vld [vmem:[%s152 + $0xf18] sm:$0xff]
        %v1182 = vld [vmem:[%s152 + $0xf20] sm:$0xff]
        %v1183 = vld [vmem:[%s152 + $0xf28] sm:$0xff]
        %v1184 = vld [vmem:[%s152 + $0xf30] sm:$0xff]
        %v1185 = vld [vmem:[%s152 + $0xf38] sm:$0xff]
        %v1186 = vld [vmem:[%s152 + $0xf40] sm:$0xff]
        %v1187 = vld [vmem:[%s152 + $0xf48] sm:$0xff]
        %v1188 = vld [vmem:[%s152 + $0xf50] sm:$0xff]
        %v1189 = vld [vmem:[%s152 + $0xf58] sm:$0xff]
        %v1190 = vld [vmem:[%s152 + $0xf60] sm:$0xff]
        %v1191 = vld [vmem:[%s152 + $0xf68] sm:$0xff]
        %v1192 = vld [vmem:[%s152 + $0xf70] sm:$0xff]
        %v1193 = vld [vmem:[%s152 + $0xf78] sm:$0xff]
        %v1194 = vld [vmem:[%s152 + $0xf80] sm:$0xff]
        %v1195 = vld [vmem:[%s152 + $0xf88] sm:$0xff]
        %v1196 = vld [vmem:[%s152 + $0xf90] sm:$0xff]
        %v1197 = vld [vmem:[%s152 + $0xf98] sm:$0xff]
        %v1198 = vld [vmem:[%s152 + $0xfa0] sm:$0xff]
        %v1199 = vld [vmem:[%s152 + $0xfa8] sm:$0xff]
        %v1200 = vld [vmem:[%s152 + $0xfb0] sm:$0xff]
        %v1201 = vld [vmem:[%s152 + $0xfb8] sm:$0xff]
        %v1202 = vld [vmem:[%s152 + $0xfc0] sm:$0xff]
        %v1203 = vld [vmem:[%s152 + $0xfc8] sm:$0xff]
        %v1204 = vld [vmem:[%s152 + $0xfd0] sm:$0xff]
        %v1205 = vld [vmem:[%s152 + $0xfd8] sm:$0xff]
        %v1206 = vld [vmem:[%s152 + $0xfe0] sm:$0xff]
        %v1207 = vld [vmem:[%s152 + $0xfe8] sm:$0xff]
        %v1208 = vld [vmem:[%s152 + $0xff0] sm:$0xff]
        %v1209 = vld [vmem:[%s152 + $0xff8] sm:$0xff]
        %v1210 = vmul.f32 %v186, 9.536743e-11
        %v1211 = vmul.f32 %v187, 9.536743e-11
        %v1212 = vmul.f32 %v188, 9.536743e-11
        %v1213 = vmul.f32 %v189, 9.536743e-11
        %v1214 = vmul.f32 %v190, 9.536743e-11
        %v1215 = vmul.f32 %v191, 9.536743e-11
        %v1216 = vmul.f32 %v192, 9.536743e-11
        %v1217 = vmul.f32 %v193, 9.536743e-11
        %v1218 = vmul.f32 %v194, 9.536743e-11
        %v1219 = vmul.f32 %v195, 9.536743e-11
        %v1220 = vmul.f32 %v196, 9.536743e-11
        %v1221 = vmul.f32 %v197, 9.536743e-11
        %v1222 = vmul.f32 %v198, 9.536743e-11
        %v1223 = vmul.f32 %v199, 9.536743e-11
        %v1224 = vmul.f32 %v200, 9.536743e-11
        %v1225 = vmul.f32 %v201, 9.536743e-11
        %v1226 = vmul.f32 %v202, 9.536743e-11
        %v1227 = vmul.f32 %v203, 9.536743e-11
        %v1228 = vmul.f32 %v204, 9.536743e-11
        %v1229 = vmul.f32 %v205, 9.536743e-11
        %v1230 = vmul.f32 %v206, 9.536743e-11
        %v1231 = vmul.f32 %v207, 9.536743e-11
        %v1232 = vmul.f32 %v208, 9.536743e-11
        %v1233 = vmul.f32 %v209, 9.536743e-11
        %v1234 = vmul.f32 %v210, 9.536743e-11
        %v1235 = vmul.f32 %v211, 9.536743e-11
        %v1236 = vmul.f32 %v212, 9.536743e-11
        %v1237 = vmul.f32 %v213, 9.536743e-11
        %v1238 = vmul.f32 %v214, 9.536743e-11
        %v1239 = vmul.f32 %v215, 9.536743e-11
        %v1240 = vmul.f32 %v216, 9.536743e-11
        %v1241 = vmul.f32 %v217, 9.536743e-11
        %v1242 = vmul.f32 %v218, 9.536743e-11
        %v1243 = vmul.f32 %v219, 9.536743e-11
        %v1244 = vmul.f32 %v220, 9.536743e-11
        %v1245 = vmul.f32 %v221, 9.536743e-11
        %v1246 = vmul.f32 %v222, 9.536743e-11
        %v1247 = vmul.f32 %v223, 9.536743e-11
        %v1248 = vmul.f32 %v224, 9.536743e-11
        %v1249 = vmul.f32 %v225, 9.536743e-11
        %v1250 = vmul.f32 %v226, 9.536743e-11
        %v1251 = vmul.f32 %v227, 9.536743e-11
        %v1252 = vmul.f32 %v228, 9.536743e-11
        %v1253 = vmul.f32 %v229, 9.536743e-11
        %v1254 = vmul.f32 %v230, 9.536743e-11
        %v1255 = vmul.f32 %v231, 9.536743e-11
        %v1256 = vmul.f32 %v232, 9.536743e-11
        %v1257 = vmul.f32 %v233, 9.536743e-11
        %v1258 = vmul.f32 %v234, 9.536743e-11
        %v1259 = vmul.f32 %v235, 9.536743e-11
        %v1260 = vmul.f32 %v236, 9.536743e-11
        %v1261 = vmul.f32 %v237, 9.536743e-11
        %v1262 = vmul.f32 %v238, 9.536743e-11
        %v1263 = vmul.f32 %v239, 9.536743e-11
        %v1264 = vmul.f32 %v240, 9.536743e-11
        %v1265 = vmul.f32 %v241, 9.536743e-11
        %v1266 = vmul.f32 %v242, 9.536743e-11
        %v1267 = vmul.f32 %v243, 9.536743e-11
        %v1268 = vmul.f32 %v244, 9.536743e-11
        %v1269 = vmul.f32 %v245, 9.536743e-11
        %v1270 = vmul.f32 %v246, 9.536743e-11
        %v1271 = vmul.f32 %v247, 9.536743e-11
        %v1272 = vmul.f32 %v248, 9.536743e-11
        %v1273 = vmul.f32 %v249, 9.536743e-11
        %v1274 = vmul.f32 %v250, 9.536743e-11
        %v1275 = vmul.f32 %v251, 9.536743e-11
        %v1276 = vmul.f32 %v252, 9.536743e-11
        %v1277 = vmul.f32 %v253, 9.536743e-11
        %v1278 = vmul.f32 %v254, 9.536743e-11
        %v1279 = vmul.f32 %v255, 9.536743e-11
        %v1280 = vmul.f32 %v256, 9.536743e-11
        %v1281 = vmul.f32 %v257, 9.536743e-11
        %v1282 = vmul.f32 %v258, 9.536743e-11
        %v1283 = vmul.f32 %v259, 9.536743e-11
        %v1284 = vmul.f32 %v260, 9.536743e-11
        %v1285 = vmul.f32 %v261, 9.536743e-11
        %v1286 = vmul.f32 %v262, 9.536743e-11
        %v1287 = vmul.f32 %v263, 9.536743e-11
        %v1288 = vmul.f32 %v264, 9.536743e-11
        %v1289 = vmul.f32 %v265, 9.536743e-11
        %v1290 = vmul.f32 %v266, 9.536743e-11
        %v1291 = vmul.f32 %v267, 9.536743e-11
        %v1292 = vmul.f32 %v268, 9.536743e-11
        %v1293 = vmul.f32 %v269, 9.536743e-11
        %v1294 = vmul.f32 %v270, 9.536743e-11
        %v1295 = vmul.f32 %v271, 9.536743e-11
        %v1296 = vmul.f32 %v272, 9.536743e-11
        %v1297 = vmul.f32 %v273, 9.536743e-11
        %v1298 = vmul.f32 %v274, 9.536743e-11
        %v1299 = vmul.f32 %v275, 9.536743e-11
        %v1300 = vmul.f32 %v276, 9.536743e-11
        %v1301 = vmul.f32 %v277, 9.536743e-11
        %v1302 = vmul.f32 %v278, 9.536743e-11
        %v1303 = vmul.f32 %v279, 9.536743e-11
        %v1304 = vmul.f32 %v280, 9.536743e-11
        %v1305 = vmul.f32 %v281, 9.536743e-11
        %v1306 = vmul.f32 %v282, 9.536743e-11
        %v1307 = vmul.f32 %v283, 9.536743e-11
        %v1308 = vmul.f32 %v284, 9.536743e-11
        %v1309 = vmul.f32 %v285, 9.536743e-11
        %v1310 = vmul.f32 %v286, 9.536743e-11
        %v1311 = vmul.f32 %v287, 9.536743e-11
        %v1312 = vmul.f32 %v288, 9.536743e-11
        %v1313 = vmul.f32 %v289, 9.536743e-11
        %v1314 = vmul.f32 %v290, 9.536743e-11
        %v1315 = vmul.f32 %v291, 9.536743e-11
        %v1316 = vmul.f32 %v292, 9.536743e-11
        %v1317 = vmul.f32 %v293, 9.536743e-11
        %v1318 = vmul.f32 %v294, 9.536743e-11
        %v1319 = vmul.f32 %v295, 9.536743e-11
        %v1320 = vmul.f32 %v296, 9.536743e-11
        %v1321 = vmul.f32 %v297, 9.536743e-11
        %v1322 = vmul.f32 %v298, 9.536743e-11
        %v1323 = vmul.f32 %v299, 9.536743e-11
        %v1324 = vmul.f32 %v300, 9.536743e-11
        %v1325 = vmul.f32 %v301, 9.536743e-11
        %v1326 = vmul.f32 %v302, 9.536743e-11
        %v1327 = vmul.f32 %v303, 9.536743e-11
        %v1328 = vmul.f32 %v304, 9.536743e-11
        %v1329 = vmul.f32 %v305, 9.536743e-11
        %v1330 = vmul.f32 %v306, 9.536743e-11
        %v1331 = vmul.f32 %v307, 9.536743e-11
        %v1332 = vmul.f32 %v308, 9.536743e-11
        %v1333 = vmul.f32 %v309, 9.536743e-11
        %v1334 = vmul.f32 %v310, 9.536743e-11
        %v1335 = vmul.f32 %v311, 9.536743e-11
        %v1336 = vmul.f32 %v312, 9.536743e-11
        %v1337 = vmul.f32 %v313, 9.536743e-11
        %v1338 = vmul.f32 %v314, 9.536743e-11
        %v1339 = vmul.f32 %v315, 9.536743e-11
        %v1340 = vmul.f32 %v316, 9.536743e-11
        %v1341 = vmul.f32 %v317, 9.536743e-11
        %v1342 = vmul.f32 %v318, 9.536743e-11
        %v1343 = vmul.f32 %v319, 9.536743e-11
        %v1344 = vmul.f32 %v320, 9.536743e-11
        %v1345 = vmul.f32 %v321, 9.536743e-11
        %v1346 = vmul.f32 %v322, 9.536743e-11
        %v1347 = vmul.f32 %v323, 9.536743e-11
        %v1348 = vmul.f32 %v324, 9.536743e-11
        %v1349 = vmul.f32 %v325, 9.536743e-11
        %v1350 = vmul.f32 %v326, 9.536743e-11
        %v1351 = vmul.f32 %v327, 9.536743e-11
        %v1352 = vmul.f32 %v328, 9.536743e-11
        %v1353 = vmul.f32 %v329, 9.536743e-11
        %v1354 = vmul.f32 %v330, 9.536743e-11
        %v1355 = vmul.f32 %v331, 9.536743e-11
        %v1356 = vmul.f32 %v332, 9.536743e-11
        %v1357 = vmul.f32 %v333, 9.536743e-11
        %v1358 = vmul.f32 %v334, 9.536743e-11
        %v1359 = vmul.f32 %v335, 9.536743e-11
        %v1360 = vmul.f32 %v336, 9.536743e-11
        %v1361 = vmul.f32 %v337, 9.536743e-11
        %v1362 = vmul.f32 %v338, 9.536743e-11
        %v1363 = vmul.f32 %v339, 9.536743e-11
        %v1364 = vmul.f32 %v340, 9.536743e-11
        %v1365 = vmul.f32 %v341, 9.536743e-11
        %v1366 = vmul.f32 %v342, 9.536743e-11
        %v1367 = vmul.f32 %v343, 9.536743e-11
        %v1368 = vmul.f32 %v344, 9.536743e-11
        %v1369 = vmul.f32 %v345, 9.536743e-11
        %v1370 = vmul.f32 %v346, 9.536743e-11
        %v1371 = vmul.f32 %v347, 9.536743e-11
        %v1372 = vmul.f32 %v348, 9.536743e-11
        %v1373 = vmul.f32 %v349, 9.536743e-11
        %v1374 = vmul.f32 %v350, 9.536743e-11
        %v1375 = vmul.f32 %v351, 9.536743e-11
        %v1376 = vmul.f32 %v352, 9.536743e-11
        %v1377 = vmul.f32 %v353, 9.536743e-11
        %v1378 = vmul.f32 %v354, 9.536743e-11
        %v1379 = vmul.f32 %v355, 9.536743e-11
        %v1380 = vmul.f32 %v356, 9.536743e-11
        %v1381 = vmul.f32 %v357, 9.536743e-11
        %v1382 = vmul.f32 %v358, 9.536743e-11
        %v1383 = vmul.f32 %v359, 9.536743e-11
        %v1384 = vmul.f32 %v360, 9.536743e-11
        %v1385 = vmul.f32 %v361, 9.536743e-11
        %v1386 = vmul.f32 %v362, 9.536743e-11
        %v1387 = vmul.f32 %v363, 9.536743e-11
        %v1388 = vmul.f32 %v364, 9.536743e-11
        %v1389 = vmul.f32 %v365, 9.536743e-11
        %v1390 = vmul.f32 %v366, 9.536743e-11
        %v1391 = vmul.f32 %v367, 9.536743e-11
        %v1392 = vmul.f32 %v368, 9.536743e-11
        %v1393 = vmul.f32 %v369, 9.536743e-11
        %v1394 = vmul.f32 %v370, 9.536743e-11
        %v1395 = vmul.f32 %v371, 9.536743e-11
        %v1396 = vmul.f32 %v372, 9.536743e-11
        %v1397 = vmul.f32 %v373, 9.536743e-11
        %v1398 = vmul.f32 %v374, 9.536743e-11
        %v1399 = vmul.f32 %v375, 9.536743e-11
        %v1400 = vmul.f32 %v376, 9.536743e-11
        %v1401 = vmul.f32 %v377, 9.536743e-11
        %v1402 = vmul.f32 %v378, 9.536743e-11
        %v1403 = vmul.f32 %v379, 9.536743e-11
        %v1404 = vmul.f32 %v380, 9.536743e-11
        %v1405 = vmul.f32 %v381, 9.536743e-11
        %v1406 = vmul.f32 %v382, 9.536743e-11
        %v1407 = vmul.f32 %v383, 9.536743e-11
        %v1408 = vmul.f32 %v384, 9.536743e-11
        %v1409 = vmul.f32 %v385, 9.536743e-11
        %v1410 = vmul.f32 %v386, 9.536743e-11
        %v1411 = vmul.f32 %v387, 9.536743e-11
        %v1412 = vmul.f32 %v388, 9.536743e-11
        %v1413 = vmul.f32 %v389, 9.536743e-11
        %v1414 = vmul.f32 %v390, 9.536743e-11
        %v1415 = vmul.f32 %v391, 9.536743e-11
        %v1416 = vmul.f32 %v392, 9.536743e-11
        %v1417 = vmul.f32 %v393, 9.536743e-11
        %v1418 = vmul.f32 %v394, 9.536743e-11
        %v1419 = vmul.f32 %v395, 9.536743e-11
        %v1420 = vmul.f32 %v396, 9.536743e-11
        %v1421 = vmul.f32 %v397, 9.536743e-11
        %v1422 = vmul.f32 %v398, 9.536743e-11
        %v1423 = vmul.f32 %v399, 9.536743e-11
        %v1424 = vmul.f32 %v400, 9.536743e-11
        %v1425 = vmul.f32 %v401, 9.536743e-11
        %v1426 = vmul.f32 %v402, 9.536743e-11
        %v1427 = vmul.f32 %v403, 9.536743e-11
        %v1428 = vmul.f32 %v404, 9.536743e-11
        %v1429 = vmul.f32 %v405, 9.536743e-11
        %v1430 = vmul.f32 %v406, 9.536743e-11
        %v1431 = vmul.f32 %v407, 9.536743e-11
        %v1432 = vmul.f32 %v408, 9.536743e-11
        %v1433 = vmul.f32 %v409, 9.536743e-11
        %v1434 = vmul.f32 %v410, 9.536743e-11
        %v1435 = vmul.f32 %v411, 9.536743e-11
        %v1436 = vmul.f32 %v412, 9.536743e-11
        %v1437 = vmul.f32 %v413, 9.536743e-11
        %v1438 = vmul.f32 %v414, 9.536743e-11
        %v1439 = vmul.f32 %v415, 9.536743e-11
        %v1440 = vmul.f32 %v416, 9.536743e-11
        %v1441 = vmul.f32 %v417, 9.536743e-11
        %v1442 = vmul.f32 %v418, 9.536743e-11
        %v1443 = vmul.f32 %v419, 9.536743e-11
        %v1444 = vmul.f32 %v420, 9.536743e-11
        %v1445 = vmul.f32 %v421, 9.536743e-11
        %v1446 = vmul.f32 %v422, 9.536743e-11
        %v1447 = vmul.f32 %v423, 9.536743e-11
        %v1448 = vmul.f32 %v424, 9.536743e-11
        %v1449 = vmul.f32 %v425, 9.536743e-11
        %v1450 = vmul.f32 %v426, 9.536743e-11
        %v1451 = vmul.f32 %v427, 9.536743e-11
        %v1452 = vmul.f32 %v428, 9.536743e-11
        %v1453 = vmul.f32 %v429, 9.536743e-11
        %v1454 = vmul.f32 %v430, 9.536743e-11
        %v1455 = vmul.f32 %v431, 9.536743e-11
        %v1456 = vmul.f32 %v432, 9.536743e-11
        %v1457 = vmul.f32 %v433, 9.536743e-11
        %v1458 = vmul.f32 %v434, 9.536743e-11
        %v1459 = vmul.f32 %v435, 9.536743e-11
        %v1460 = vmul.f32 %v436, 9.536743e-11
        %v1461 = vmul.f32 %v437, 9.536743e-11
        %v1462 = vmul.f32 %v438, 9.536743e-11
        %v1463 = vmul.f32 %v439, 9.536743e-11
        %v1464 = vmul.f32 %v440, 9.536743e-11
        %v1465 = vmul.f32 %v441, 9.536743e-11
        %v1466 = vmul.f32 %v442, 9.536743e-11
        %v1467 = vmul.f32 %v443, 9.536743e-11
        %v1468 = vmul.f32 %v444, 9.536743e-11
        %v1469 = vmul.f32 %v445, 9.536743e-11
        %v1470 = vmul.f32 %v446, 9.536743e-11
        %v1471 = vmul.f32 %v447, 9.536743e-11
        %v1472 = vmul.f32 %v448, 9.536743e-11
        %v1473 = vmul.f32 %v449, 9.536743e-11
        %v1474 = vmul.f32 %v450, 9.536743e-11
        %v1475 = vmul.f32 %v451, 9.536743e-11
        %v1476 = vmul.f32 %v452, 9.536743e-11
        %v1477 = vmul.f32 %v453, 9.536743e-11
        %v1478 = vmul.f32 %v454, 9.536743e-11
        %v1479 = vmul.f32 %v455, 9.536743e-11
        %v1480 = vmul.f32 %v456, 9.536743e-11
        %v1481 = vmul.f32 %v457, 9.536743e-11
        %v1482 = vmul.f32 %v458, 9.536743e-11
        %v1483 = vmul.f32 %v459, 9.536743e-11
        %v1484 = vmul.f32 %v460, 9.536743e-11
        %v1485 = vmul.f32 %v461, 9.536743e-11
        %v1486 = vmul.f32 %v462, 9.536743e-11
        %v1487 = vmul.f32 %v463, 9.536743e-11
        %v1488 = vmul.f32 %v464, 9.536743e-11
        %v1489 = vmul.f32 %v465, 9.536743e-11
        %v1490 = vmul.f32 %v466, 9.536743e-11
        %v1491 = vmul.f32 %v467, 9.536743e-11
        %v1492 = vmul.f32 %v468, 9.536743e-11
        %v1493 = vmul.f32 %v469, 9.536743e-11
        %v1494 = vmul.f32 %v470, 9.536743e-11
        %v1495 = vmul.f32 %v471, 9.536743e-11
        %v1496 = vmul.f32 %v472, 9.536743e-11
        %v1497 = vmul.f32 %v473, 9.536743e-11
        %v1498 = vmul.f32 %v474, 9.536743e-11
        %v1499 = vmul.f32 %v475, 9.536743e-11
        %v1500 = vmul.f32 %v476, 9.536743e-11
        %v1501 = vmul.f32 %v477, 9.536743e-11
        %v1502 = vmul.f32 %v478, 9.536743e-11
        %v1503 = vmul.f32 %v479, 9.536743e-11
        %v1504 = vmul.f32 %v480, 9.536743e-11
        %v1505 = vmul.f32 %v481, 9.536743e-11
        %v1506 = vmul.f32 %v482, 9.536743e-11
        %v1507 = vmul.f32 %v483, 9.536743e-11
        %v1508 = vmul.f32 %v484, 9.536743e-11
        %v1509 = vmul.f32 %v485, 9.536743e-11
        %v1510 = vmul.f32 %v486, 9.536743e-11
        %v1511 = vmul.f32 %v487, 9.536743e-11
        %v1512 = vmul.f32 %v488, 9.536743e-11
        %v1513 = vmul.f32 %v489, 9.536743e-11
        %v1514 = vmul.f32 %v490, 9.536743e-11
        %v1515 = vmul.f32 %v491, 9.536743e-11
        %v1516 = vmul.f32 %v492, 9.536743e-11
        %v1517 = vmul.f32 %v493, 9.536743e-11
        %v1518 = vmul.f32 %v494, 9.536743e-11
        %v1519 = vmul.f32 %v495, 9.536743e-11
        %v1520 = vmul.f32 %v496, 9.536743e-11
        %v1521 = vmul.f32 %v497, 9.536743e-11
        %v1522 = vmul.f32 %v498, 9.536743e-11
        %v1523 = vmul.f32 %v499, 9.536743e-11
        %v1524 = vmul.f32 %v500, 9.536743e-11
        %v1525 = vmul.f32 %v501, 9.536743e-11
        %v1526 = vmul.f32 %v502, 9.536743e-11
        %v1527 = vmul.f32 %v503, 9.536743e-11
        %v1528 = vmul.f32 %v504, 9.536743e-11
        %v1529 = vmul.f32 %v505, 9.536743e-11
        %v1530 = vmul.f32 %v506, 9.536743e-11
        %v1531 = vmul.f32 %v507, 9.536743e-11
        %v1532 = vmul.f32 %v508, 9.536743e-11
        %v1533 = vmul.f32 %v509, 9.536743e-11
        %v1534 = vmul.f32 %v510, 9.536743e-11
        %v1535 = vmul.f32 %v511, 9.536743e-11
        %v1536 = vmul.f32 %v512, 9.536743e-11
        %v1537 = vmul.f32 %v513, 9.536743e-11
        %v1538 = vmul.f32 %v514, 9.536743e-11
        %v1539 = vmul.f32 %v515, 9.536743e-11
        %v1540 = vmul.f32 %v516, 9.536743e-11
        %v1541 = vmul.f32 %v517, 9.536743e-11
        %v1542 = vmul.f32 %v518, 9.536743e-11
        %v1543 = vmul.f32 %v519, 9.536743e-11
        %v1544 = vmul.f32 %v520, 9.536743e-11
        %v1545 = vmul.f32 %v521, 9.536743e-11
        %v1546 = vmul.f32 %v522, 9.536743e-11
        %v1547 = vmul.f32 %v523, 9.536743e-11
        %v1548 = vmul.f32 %v524, 9.536743e-11
        %v1549 = vmul.f32 %v525, 9.536743e-11
        %v1550 = vmul.f32 %v526, 9.536743e-11
        %v1551 = vmul.f32 %v527, 9.536743e-11
        %v1552 = vmul.f32 %v528, 9.536743e-11
        %v1553 = vmul.f32 %v529, 9.536743e-11
        %v1554 = vmul.f32 %v530, 9.536743e-11
        %v1555 = vmul.f32 %v531, 9.536743e-11
        %v1556 = vmul.f32 %v532, 9.536743e-11
        %v1557 = vmul.f32 %v533, 9.536743e-11
        %v1558 = vmul.f32 %v534, 9.536743e-11
        %v1559 = vmul.f32 %v535, 9.536743e-11
        %v1560 = vmul.f32 %v536, 9.536743e-11
        %v1561 = vmul.f32 %v537, 9.536743e-11
        %v1562 = vmul.f32 %v538, 9.536743e-11
        %v1563 = vmul.f32 %v539, 9.536743e-11
        %v1564 = vmul.f32 %v540, 9.536743e-11
        %v1565 = vmul.f32 %v541, 9.536743e-11
        %v1566 = vmul.f32 %v542, 9.536743e-11
        %v1567 = vmul.f32 %v543, 9.536743e-11
        %v1568 = vmul.f32 %v544, 9.536743e-11
        %v1569 = vmul.f32 %v545, 9.536743e-11
        %v1570 = vmul.f32 %v546, 9.536743e-11
        %v1571 = vmul.f32 %v547, 9.536743e-11
        %v1572 = vmul.f32 %v548, 9.536743e-11
        %v1573 = vmul.f32 %v549, 9.536743e-11
        %v1574 = vmul.f32 %v550, 9.536743e-11
        %v1575 = vmul.f32 %v551, 9.536743e-11
        %v1576 = vmul.f32 %v552, 9.536743e-11
        %v1577 = vmul.f32 %v553, 9.536743e-11
        %v1578 = vmul.f32 %v554, 9.536743e-11
        %v1579 = vmul.f32 %v555, 9.536743e-11
        %v1580 = vmul.f32 %v556, 9.536743e-11
        %v1581 = vmul.f32 %v557, 9.536743e-11
        %v1582 = vmul.f32 %v558, 9.536743e-11
        %v1583 = vmul.f32 %v559, 9.536743e-11
        %v1584 = vmul.f32 %v560, 9.536743e-11
        %v1585 = vmul.f32 %v561, 9.536743e-11
        %v1586 = vmul.f32 %v562, 9.536743e-11
        %v1587 = vmul.f32 %v563, 9.536743e-11
        %v1588 = vmul.f32 %v564, 9.536743e-11
        %v1589 = vmul.f32 %v565, 9.536743e-11
        %v1590 = vmul.f32 %v566, 9.536743e-11
        %v1591 = vmul.f32 %v567, 9.536743e-11
        %v1592 = vmul.f32 %v568, 9.536743e-11
        %v1593 = vmul.f32 %v569, 9.536743e-11
        %v1594 = vmul.f32 %v570, 9.536743e-11
        %v1595 = vmul.f32 %v571, 9.536743e-11
        %v1596 = vmul.f32 %v572, 9.536743e-11
        %v1597 = vmul.f32 %v573, 9.536743e-11
        %v1598 = vmul.f32 %v574, 9.536743e-11
        %v1599 = vmul.f32 %v575, 9.536743e-11
        %v1600 = vmul.f32 %v576, 9.536743e-11
        %v1601 = vmul.f32 %v577, 9.536743e-11
        %v1602 = vmul.f32 %v578, 9.536743e-11
        %v1603 = vmul.f32 %v579, 9.536743e-11
        %v1604 = vmul.f32 %v580, 9.536743e-11
        %v1605 = vmul.f32 %v581, 9.536743e-11
        %v1606 = vmul.f32 %v582, 9.536743e-11
        %v1607 = vmul.f32 %v583, 9.536743e-11
        %v1608 = vmul.f32 %v584, 9.536743e-11
        %v1609 = vmul.f32 %v585, 9.536743e-11
        %v1610 = vmul.f32 %v586, 9.536743e-11
        %v1611 = vmul.f32 %v587, 9.536743e-11
        %v1612 = vmul.f32 %v588, 9.536743e-11
        %v1613 = vmul.f32 %v589, 9.536743e-11
        %v1614 = vmul.f32 %v590, 9.536743e-11
        %v1615 = vmul.f32 %v591, 9.536743e-11
        %v1616 = vmul.f32 %v592, 9.536743e-11
        %v1617 = vmul.f32 %v593, 9.536743e-11
        %v1618 = vmul.f32 %v594, 9.536743e-11
        %v1619 = vmul.f32 %v595, 9.536743e-11
        %v1620 = vmul.f32 %v596, 9.536743e-11
        %v1621 = vmul.f32 %v597, 9.536743e-11
        %v1622 = vmul.f32 %v598, 9.536743e-11
        %v1623 = vmul.f32 %v599, 9.536743e-11
        %v1624 = vmul.f32 %v600, 9.536743e-11
        %v1625 = vmul.f32 %v601, 9.536743e-11
        %v1626 = vmul.f32 %v602, 9.536743e-11
        %v1627 = vmul.f32 %v603, 9.536743e-11
        %v1628 = vmul.f32 %v604, 9.536743e-11
        %v1629 = vmul.f32 %v605, 9.536743e-11
        %v1630 = vmul.f32 %v606, 9.536743e-11
        %v1631 = vmul.f32 %v607, 9.536743e-11
        %v1632 = vmul.f32 %v608, 9.536743e-11
        %v1633 = vmul.f32 %v609, 9.536743e-11
        %v1634 = vmul.f32 %v610, 9.536743e-11
        %v1635 = vmul.f32 %v611, 9.536743e-11
        %v1636 = vmul.f32 %v612, 9.536743e-11
        %v1637 = vmul.f32 %v613, 9.536743e-11
        %v1638 = vmul.f32 %v614, 9.536743e-11
        %v1639 = vmul.f32 %v615, 9.536743e-11
        %v1640 = vmul.f32 %v616, 9.536743e-11
        %v1641 = vmul.f32 %v617, 9.536743e-11
        %v1642 = vmul.f32 %v618, 9.536743e-11
        %v1643 = vmul.f32 %v619, 9.536743e-11
        %v1644 = vmul.f32 %v620, 9.536743e-11
        %v1645 = vmul.f32 %v621, 9.536743e-11
        %v1646 = vmul.f32 %v622, 9.536743e-11
        %v1647 = vmul.f32 %v623, 9.536743e-11
        %v1648 = vmul.f32 %v624, 9.536743e-11
        %v1649 = vmul.f32 %v625, 9.536743e-11
        %v1650 = vmul.f32 %v626, 9.536743e-11
        %v1651 = vmul.f32 %v627, 9.536743e-11
        %v1652 = vmul.f32 %v628, 9.536743e-11
        %v1653 = vmul.f32 %v629, 9.536743e-11
        %v1654 = vmul.f32 %v630, 9.536743e-11
        %v1655 = vmul.f32 %v631, 9.536743e-11
        %v1656 = vmul.f32 %v632, 9.536743e-11
        %v1657 = vmul.f32 %v633, 9.536743e-11
        %v1658 = vmul.f32 %v634, 9.536743e-11
        %v1659 = vmul.f32 %v635, 9.536743e-11
        %v1660 = vmul.f32 %v636, 9.536743e-11
        %v1661 = vmul.f32 %v637, 9.536743e-11
        %v1662 = vmul.f32 %v638, 9.536743e-11
        %v1663 = vmul.f32 %v639, 9.536743e-11
        %v1664 = vmul.f32 %v640, 9.536743e-11
        %v1665 = vmul.f32 %v641, 9.536743e-11
        %v1666 = vmul.f32 %v642, 9.536743e-11
        %v1667 = vmul.f32 %v643, 9.536743e-11
        %v1668 = vmul.f32 %v644, 9.536743e-11
        %v1669 = vmul.f32 %v645, 9.536743e-11
        %v1670 = vmul.f32 %v646, 9.536743e-11
        %v1671 = vmul.f32 %v647, 9.536743e-11
        %v1672 = vmul.f32 %v648, 9.536743e-11
        %v1673 = vmul.f32 %v649, 9.536743e-11
        %v1674 = vmul.f32 %v650, 9.536743e-11
        %v1675 = vmul.f32 %v651, 9.536743e-11
        %v1676 = vmul.f32 %v652, 9.536743e-11
        %v1677 = vmul.f32 %v653, 9.536743e-11
        %v1678 = vmul.f32 %v654, 9.536743e-11
        %v1679 = vmul.f32 %v655, 9.536743e-11
        %v1680 = vmul.f32 %v656, 9.536743e-11
        %v1681 = vmul.f32 %v657, 9.536743e-11
        %v1682 = vmul.f32 %v658, 9.536743e-11
        %v1683 = vmul.f32 %v659, 9.536743e-11
        %v1684 = vmul.f32 %v660, 9.536743e-11
        %v1685 = vmul.f32 %v661, 9.536743e-11
        %v1686 = vmul.f32 %v662, 9.536743e-11
        %v1687 = vmul.f32 %v663, 9.536743e-11
        %v1688 = vmul.f32 %v664, 9.536743e-11
        %v1689 = vmul.f32 %v665, 9.536743e-11
        %v1690 = vmul.f32 %v666, 9.536743e-11
        %v1691 = vmul.f32 %v667, 9.536743e-11
        %v1692 = vmul.f32 %v668, 9.536743e-11
        %v1693 = vmul.f32 %v669, 9.536743e-11
        %v1694 = vmul.f32 %v670, 9.536743e-11
        %v1695 = vmul.f32 %v671, 9.536743e-11
        %v1696 = vmul.f32 %v672, 9.536743e-11
        %v1697 = vmul.f32 %v673, 9.536743e-11
        %v1698 = vmul.f32 %v674, 9.536743e-11
        %v1699 = vmul.f32 %v675, 9.536743e-11
        %v1700 = vmul.f32 %v676, 9.536743e-11
        %v1701 = vmul.f32 %v677, 9.536743e-11
        %v1702 = vmul.f32 %v678, 9.536743e-11
        %v1703 = vmul.f32 %v679, 9.536743e-11
        %v1704 = vmul.f32 %v680, 9.536743e-11
        %v1705 = vmul.f32 %v681, 9.536743e-11
        %v1706 = vmul.f32 %v682, 9.536743e-11
        %v1707 = vmul.f32 %v683, 9.536743e-11
        %v1708 = vmul.f32 %v684, 9.536743e-11
        %v1709 = vmul.f32 %v685, 9.536743e-11
        %v1710 = vmul.f32 %v686, 9.536743e-11
        %v1711 = vmul.f32 %v687, 9.536743e-11
        %v1712 = vmul.f32 %v688, 9.536743e-11
        %v1713 = vmul.f32 %v689, 9.536743e-11
        %v1714 = vmul.f32 %v690, 9.536743e-11
        %v1715 = vmul.f32 %v691, 9.536743e-11
        %v1716 = vmul.f32 %v692, 9.536743e-11
        %v1717 = vmul.f32 %v693, 9.536743e-11
        %v1718 = vmul.f32 %v694, 9.536743e-11
        %v1719 = vmul.f32 %v695, 9.536743e-11
        %v1720 = vmul.f32 %v696, 9.536743e-11
        %v1721 = vmul.f32 %v697, 9.536743e-11
        %v1722 = vmul.f32 %v1210, %v186
        %v1723 = vmul.f32 %v1211, %v187
        %v1724 = vmul.f32 %v1212, %v188
        %v1725 = vmul.f32 %v1213, %v189
        %v1726 = vmul.f32 %v1214, %v190
        %v1727 = vmul.f32 %v1215, %v191
        %v1728 = vmul.f32 %v1216, %v192
        %v1729 = vmul.f32 %v1217, %v193
        %v1730 = vmul.f32 %v1218, %v194
        %v1731 = vmul.f32 %v1219, %v195
        %v1732 = vmul.f32 %v1220, %v196
        %v1733 = vmul.f32 %v1221, %v197
        %v1734 = vmul.f32 %v1222, %v198
        %v1735 = vmul.f32 %v1223, %v199
        %v1736 = vmul.f32 %v1224, %v200
        %v1737 = vmul.f32 %v1225, %v201
        %v1738 = vmul.f32 %v1226, %v202
        %v1739 = vmul.f32 %v1227, %v203
        %v1740 = vmul.f32 %v1228, %v204
        %v1741 = vmul.f32 %v1229, %v205
        %v1742 = vmul.f32 %v1230, %v206
        %v1743 = vmul.f32 %v1231, %v207
        %v1744 = vmul.f32 %v1232, %v208
        %v1745 = vmul.f32 %v1233, %v209
        %v1746 = vmul.f32 %v1234, %v210
        %v1747 = vmul.f32 %v1235, %v211
        %v1748 = vmul.f32 %v1236, %v212
        %v1749 = vmul.f32 %v1237, %v213
        %v1750 = vmul.f32 %v1238, %v214
        %v1751 = vmul.f32 %v1239, %v215
        %v1752 = vmul.f32 %v1240, %v216
        %v1753 = vmul.f32 %v1241, %v217
        %v1754 = vmul.f32 %v1242, %v218
        %v1755 = vmul.f32 %v1243, %v219
        %v1756 = vmul.f32 %v1244, %v220
        %v1757 = vmul.f32 %v1245, %v221
        %v1758 = vmul.f32 %v1246, %v222
        %v1759 = vmul.f32 %v1247, %v223
        %v1760 = vmul.f32 %v1248, %v224
        %v1761 = vmul.f32 %v1249, %v225
        %v1762 = vmul.f32 %v1250, %v226
        %v1763 = vmul.f32 %v1251, %v227
        %v1764 = vmul.f32 %v1252, %v228
        %v1765 = vmul.f32 %v1253, %v229
        %v1766 = vmul.f32 %v1254, %v230
        %v1767 = vmul.f32 %v1255, %v231
        %v1768 = vmul.f32 %v1256, %v232
        %v1769 = vmul.f32 %v1257, %v233
        %v1770 = vmul.f32 %v1258, %v234
        %v1771 = vmul.f32 %v1259, %v235
        %v1772 = vmul.f32 %v1260, %v236
        %v1773 = vmul.f32 %v1261, %v237
        %v1774 = vmul.f32 %v1262, %v238
        %v1775 = vmul.f32 %v1263, %v239
        %v1776 = vmul.f32 %v1264, %v240
        %v1777 = vmul.f32 %v1265, %v241
        %v1778 = vmul.f32 %v1266, %v242
        %v1779 = vmul.f32 %v1267, %v243
        %v1780 = vmul.f32 %v1268, %v244
        %v1781 = vmul.f32 %v1269, %v245
        %v1782 = vmul.f32 %v1270, %v246
        %v1783 = vmul.f32 %v1271, %v247
        %v1784 = vmul.f32 %v1272, %v248
        %v1785 = vmul.f32 %v1273, %v249
        %v1786 = vmul.f32 %v1274, %v250
        %v1787 = vmul.f32 %v1275, %v251
        %v1788 = vmul.f32 %v1276, %v252
        %v1789 = vmul.f32 %v1277, %v253
        %v1790 = vmul.f32 %v1278, %v254
        %v1791 = vmul.f32 %v1279, %v255
        %v1792 = vmul.f32 %v1280, %v256
        %v1793 = vmul.f32 %v1281, %v257
        %v1794 = vmul.f32 %v1282, %v258
        %v1795 = vmul.f32 %v1283, %v259
        %v1796 = vmul.f32 %v1284, %v260
        %v1797 = vmul.f32 %v1285, %v261
        %v1798 = vmul.f32 %v1286, %v262
        %v1799 = vmul.f32 %v1287, %v263
        %v1800 = vmul.f32 %v1288, %v264
        %v1801 = vmul.f32 %v1289, %v265
        %v1802 = vmul.f32 %v1290, %v266
        %v1803 = vmul.f32 %v1291, %v267
        %v1804 = vmul.f32 %v1292, %v268
        %v1805 = vmul.f32 %v1293, %v269
        %v1806 = vmul.f32 %v1294, %v270
        %v1807 = vmul.f32 %v1295, %v271
        %v1808 = vmul.f32 %v1296, %v272
        %v1809 = vmul.f32 %v1297, %v273
        %v1810 = vmul.f32 %v1298, %v274
        %v1811 = vmul.f32 %v1299, %v275
        %v1812 = vmul.f32 %v1300, %v276
        %v1813 = vmul.f32 %v1301, %v277
        %v1814 = vmul.f32 %v1302, %v278
        %v1815 = vmul.f32 %v1303, %v279
        %v1816 = vmul.f32 %v1304, %v280
        %v1817 = vmul.f32 %v1305, %v281
        %v1818 = vmul.f32 %v1306, %v282
        %v1819 = vmul.f32 %v1307, %v283
        %v1820 = vmul.f32 %v1308, %v284
        %v1821 = vmul.f32 %v1309, %v285
        %v1822 = vmul.f32 %v1310, %v286
        %v1823 = vmul.f32 %v1311, %v287
        %v1824 = vmul.f32 %v1312, %v288
        %v1825 = vmul.f32 %v1313, %v289
        %v1826 = vmul.f32 %v1314, %v290
        %v1827 = vmul.f32 %v1315, %v291
        %v1828 = vmul.f32 %v1316, %v292
        %v1829 = vmul.f32 %v1317, %v293
        %v1830 = vmul.f32 %v1318, %v294
        %v1831 = vmul.f32 %v1319, %v295
        %v1832 = vmul.f32 %v1320, %v296
        %v1833 = vmul.f32 %v1321, %v297
        %v1834 = vmul.f32 %v1322, %v298
        %v1835 = vmul.f32 %v1323, %v299
        %v1836 = vmul.f32 %v1324, %v300
        %v1837 = vmul.f32 %v1325, %v301
        %v1838 = vmul.f32 %v1326, %v302
        %v1839 = vmul.f32 %v1327, %v303
        %v1840 = vmul.f32 %v1328, %v304
        %v1841 = vmul.f32 %v1329, %v305
        %v1842 = vmul.f32 %v1330, %v306
        %v1843 = vmul.f32 %v1331, %v307
        %v1844 = vmul.f32 %v1332, %v308
        %v1845 = vmul.f32 %v1333, %v309
        %v1846 = vmul.f32 %v1334, %v310
        %v1847 = vmul.f32 %v1335, %v311
        %v1848 = vmul.f32 %v1336, %v312
        %v1849 = vmul.f32 %v1337, %v313
        %v1850 = vmul.f32 %v1338, %v314
        %v1851 = vmul.f32 %v1339, %v315
        %v1852 = vmul.f32 %v1340, %v316
        %v1853 = vmul.f32 %v1341, %v317
        %v1854 = vmul.f32 %v1342, %v318
        %v1855 = vmul.f32 %v1343, %v319
        %v1856 = vmul.f32 %v1344, %v320
        %v1857 = vmul.f32 %v1345, %v321
        %v1858 = vmul.f32 %v1346, %v322
        %v1859 = vmul.f32 %v1347, %v323
        %v1860 = vmul.f32 %v1348, %v324
        %v1861 = vmul.f32 %v1349, %v325
        %v1862 = vmul.f32 %v1350, %v326
        %v1863 = vmul.f32 %v1351, %v327
        %v1864 = vmul.f32 %v1352, %v328
        %v1865 = vmul.f32 %v1353, %v329
        %v1866 = vmul.f32 %v1354, %v330
        %v1867 = vmul.f32 %v1355, %v331
        %v1868 = vmul.f32 %v1356, %v332
        %v1869 = vmul.f32 %v1357, %v333
        %v1870 = vmul.f32 %v1358, %v334
        %v1871 = vmul.f32 %v1359, %v335
        %v1872 = vmul.f32 %v1360, %v336
        %v1873 = vmul.f32 %v1361, %v337
        %v1874 = vmul.f32 %v1362, %v338
        %v1875 = vmul.f32 %v1363, %v339
        %v1876 = vmul.f32 %v1364, %v340
        %v1877 = vmul.f32 %v1365, %v341
        %v1878 = vmul.f32 %v1366, %v342
        %v1879 = vmul.f32 %v1367, %v343
        %v1880 = vmul.f32 %v1368, %v344
        %v1881 = vmul.f32 %v1369, %v345
        %v1882 = vmul.f32 %v1370, %v346
        %v1883 = vmul.f32 %v1371, %v347
        %v1884 = vmul.f32 %v1372, %v348
        %v1885 = vmul.f32 %v1373, %v349
        %v1886 = vmul.f32 %v1374, %v350
        %v1887 = vmul.f32 %v1375, %v351
        %v1888 = vmul.f32 %v1376, %v352
        %v1889 = vmul.f32 %v1377, %v353
        %v1890 = vmul.f32 %v1378, %v354
        %v1891 = vmul.f32 %v1379, %v355
        %v1892 = vmul.f32 %v1380, %v356
        %v1893 = vmul.f32 %v1381, %v357
        %v1894 = vmul.f32 %v1382, %v358
        %v1895 = vmul.f32 %v1383, %v359
        %v1896 = vmul.f32 %v1384, %v360
        %v1897 = vmul.f32 %v1385, %v361
        %v1898 = vmul.f32 %v1386, %v362
        %v1899 = vmul.f32 %v1387, %v363
        %v1900 = vmul.f32 %v1388, %v364
        %v1901 = vmul.f32 %v1389, %v365
        %v1902 = vmul.f32 %v1390, %v366
        %v1903 = vmul.f32 %v1391, %v367
        %v1904 = vmul.f32 %v1392, %v368
        %v1905 = vmul.f32 %v1393, %v369
        %v1906 = vmul.f32 %v1394, %v370
        %v1907 = vmul.f32 %v1395, %v371
        %v1908 = vmul.f32 %v1396, %v372
        %v1909 = vmul.f32 %v1397, %v373
        %v1910 = vmul.f32 %v1398, %v374
        %v1911 = vmul.f32 %v1399, %v375
        %v1912 = vmul.f32 %v1400, %v376
        %v1913 = vmul.f32 %v1401, %v377
        %v1914 = vmul.f32 %v1402, %v378
        %v1915 = vmul.f32 %v1403, %v379
        %v1916 = vmul.f32 %v1404, %v380
        %v1917 = vmul.f32 %v1405, %v381
        %v1918 = vmul.f32 %v1406, %v382
        %v1919 = vmul.f32 %v1407, %v383
        %v1920 = vmul.f32 %v1408, %v384
        %v1921 = vmul.f32 %v1409, %v385
        %v1922 = vmul.f32 %v1410, %v386
        %v1923 = vmul.f32 %v1411, %v387
        %v1924 = vmul.f32 %v1412, %v388
        %v1925 = vmul.f32 %v1413, %v389
        %v1926 = vmul.f32 %v1414, %v390
        %v1927 = vmul.f32 %v1415, %v391
        %v1928 = vmul.f32 %v1416, %v392
        %v1929 = vmul.f32 %v1417, %v393
        %v1930 = vmul.f32 %v1418, %v394
        %v1931 = vmul.f32 %v1419, %v395
        %v1932 = vmul.f32 %v1420, %v396
        %v1933 = vmul.f32 %v1421, %v397
        %v1934 = vmul.f32 %v1422, %v398
        %v1935 = vmul.f32 %v1423, %v399
        %v1936 = vmul.f32 %v1424, %v400
        %v1937 = vmul.f32 %v1425, %v401
        %v1938 = vmul.f32 %v1426, %v402
        %v1939 = vmul.f32 %v1427, %v403
        %v1940 = vmul.f32 %v1428, %v404
        %v1941 = vmul.f32 %v1429, %v405
        %v1942 = vmul.f32 %v1430, %v406
        %v1943 = vmul.f32 %v1431, %v407
        %v1944 = vmul.f32 %v1432, %v408
        %v1945 = vmul.f32 %v1433, %v409
        %v1946 = vmul.f32 %v1434, %v410
        %v1947 = vmul.f32 %v1435, %v411
        %v1948 = vmul.f32 %v1436, %v412
        %v1949 = vmul.f32 %v1437, %v413
        %v1950 = vmul.f32 %v1438, %v414
        %v1951 = vmul.f32 %v1439, %v415
        %v1952 = vmul.f32 %v1440, %v416
        %v1953 = vmul.f32 %v1441, %v417
        %v1954 = vmul.f32 %v1442, %v418
        %v1955 = vmul.f32 %v1443, %v419
        %v1956 = vmul.f32 %v1444, %v420
        %v1957 = vmul.f32 %v1445, %v421
        %v1958 = vmul.f32 %v1446, %v422
        %v1959 = vmul.f32 %v1447, %v423
        %v1960 = vmul.f32 %v1448, %v424
        %v1961 = vmul.f32 %v1449, %v425
        %v1962 = vmul.f32 %v1450, %v426
        %v1963 = vmul.f32 %v1451, %v427
        %v1964 = vmul.f32 %v1452, %v428
        %v1965 = vmul.f32 %v1453, %v429
        %v1966 = vmul.f32 %v1454, %v430
        %v1967 = vmul.f32 %v1455, %v431
        %v1968 = vmul.f32 %v1456, %v432
        %v1969 = vmul.f32 %v1457, %v433
        %v1970 = vmul.f32 %v1458, %v434
        %v1971 = vmul.f32 %v1459, %v435
        %v1972 = vmul.f32 %v1460, %v436
        %v1973 = vmul.f32 %v1461, %v437
        %v1974 = vmul.f32 %v1462, %v438
        %v1975 = vmul.f32 %v1463, %v439
        %v1976 = vmul.f32 %v1464, %v440
        %v1977 = vmul.f32 %v1465, %v441
        %v1978 = vmul.f32 %v1466, %v442
        %v1979 = vmul.f32 %v1467, %v443
        %v1980 = vmul.f32 %v1468, %v444
        %v1981 = vmul.f32 %v1469, %v445
        %v1982 = vmul.f32 %v1470, %v446
        %v1983 = vmul.f32 %v1471, %v447
        %v1984 = vmul.f32 %v1472, %v448
        %v1985 = vmul.f32 %v1473, %v449
        %v1986 = vmul.f32 %v1474, %v450
        %v1987 = vmul.f32 %v1475, %v451
        %v1988 = vmul.f32 %v1476, %v452
        %v1989 = vmul.f32 %v1477, %v453
        %v1990 = vmul.f32 %v1478, %v454
        %v1991 = vmul.f32 %v1479, %v455
        %v1992 = vmul.f32 %v1480, %v456
        %v1993 = vmul.f32 %v1481, %v457
        %v1994 = vmul.f32 %v1482, %v458
        %v1995 = vmul.f32 %v1483, %v459
        %v1996 = vmul.f32 %v1484, %v460
        %v1997 = vmul.f32 %v1485, %v461
        %v1998 = vmul.f32 %v1486, %v462
        %v1999 = vmul.f32 %v1487, %v463
        %v2000 = vmul.f32 %v1488, %v464
        %v2001 = vmul.f32 %v1489, %v465
        %v2002 = vmul.f32 %v1490, %v466
        %v2003 = vmul.f32 %v1491, %v467
        %v2004 = vmul.f32 %v1492, %v468
        %v2005 = vmul.f32 %v1493, %v469
        %v2006 = vmul.f32 %v1494, %v470
        %v2007 = vmul.f32 %v1495, %v471
        %v2008 = vmul.f32 %v1496, %v472
        %v2009 = vmul.f32 %v1497, %v473
        %v2010 = vmul.f32 %v1498, %v474
        %v2011 = vmul.f32 %v1499, %v475
        %v2012 = vmul.f32 %v1500, %v476
        %v2013 = vmul.f32 %v1501, %v477
        %v2014 = vmul.f32 %v1502, %v478
        %v2015 = vmul.f32 %v1503, %v479
        %v2016 = vmul.f32 %v1504, %v480
        %v2017 = vmul.f32 %v1505, %v481
        %v2018 = vmul.f32 %v1506, %v482
        %v2019 = vmul.f32 %v1507, %v483
        %v2020 = vmul.f32 %v1508, %v484
        %v2021 = vmul.f32 %v1509, %v485
        %v2022 = vmul.f32 %v1510, %v486
        %v2023 = vmul.f32 %v1511, %v487
        %v2024 = vmul.f32 %v1512, %v488
        %v2025 = vmul.f32 %v1513, %v489
        %v2026 = vmul.f32 %v1514, %v490
        %v2027 = vmul.f32 %v1515, %v491
        %v2028 = vmul.f32 %v1516, %v492
        %v2029 = vmul.f32 %v1517, %v493
        %v2030 = vmul.f32 %v1518, %v494
        %v2031 = vmul.f32 %v1519, %v495
        %v2032 = vmul.f32 %v1520, %v496
        %v2033 = vmul.f32 %v1521, %v497
        %v2034 = vmul.f32 %v1522, %v498
        %v2035 = vmul.f32 %v1523, %v499
        %v2036 = vmul.f32 %v1524, %v500
        %v2037 = vmul.f32 %v1525, %v501
        %v2038 = vmul.f32 %v1526, %v502
        %v2039 = vmul.f32 %v1527, %v503
        %v2040 = vmul.f32 %v1528, %v504
        %v2041 = vmul.f32 %v1529, %v505
        %v2042 = vmul.f32 %v1530, %v506
        %v2043 = vmul.f32 %v1531, %v507
        %v2044 = vmul.f32 %v1532, %v508
        %v2045 = vmul.f32 %v1533, %v509
        %v2046 = vmul.f32 %v1534, %v510
        %v2047 = vmul.f32 %v1535, %v511
        %v2048 = vmul.f32 %v1536, %v512
        %v2049 = vmul.f32 %v1537, %v513
        %v2050 = vmul.f32 %v1538, %v514
        %v2051 = vmul.f32 %v1539, %v515
        %v2052 = vmul.f32 %v1540, %v516
        %v2053 = vmul.f32 %v1541, %v517
        %v2054 = vmul.f32 %v1542, %v518
        %v2055 = vmul.f32 %v1543, %v519
        %v2056 = vmul.f32 %v1544, %v520
        %v2057 = vmul.f32 %v1545, %v521
        %v2058 = vmul.f32 %v1546, %v522
        %v2059 = vmul.f32 %v1547, %v523
        %v2060 = vmul.f32 %v1548, %v524
        %v2061 = vmul.f32 %v1549, %v525
        %v2062 = vmul.f32 %v1550, %v526
        %v2063 = vmul.f32 %v1551, %v527
        %v2064 = vmul.f32 %v1552, %v528
        %v2065 = vmul.f32 %v1553, %v529
        %v2066 = vmul.f32 %v1554, %v530
        %v2067 = vmul.f32 %v1555, %v531
        %v2068 = vmul.f32 %v1556, %v532
        %v2069 = vmul.f32 %v1557, %v533
        %v2070 = vmul.f32 %v1558, %v534
        %v2071 = vmul.f32 %v1559, %v535
        %v2072 = vmul.f32 %v1560, %v536
        %v2073 = vmul.f32 %v1561, %v537
        %v2074 = vmul.f32 %v1562, %v538
        %v2075 = vmul.f32 %v1563, %v539
        %v2076 = vmul.f32 %v1564, %v540
        %v2077 = vmul.f32 %v1565, %v541
        %v2078 = vmul.f32 %v1566, %v542
        %v2079 = vmul.f32 %v1567, %v543
        %v2080 = vmul.f32 %v1568, %v544
        %v2081 = vmul.f32 %v1569, %v545
        %v2082 = vmul.f32 %v1570, %v546
        %v2083 = vmul.f32 %v1571, %v547
        %v2084 = vmul.f32 %v1572, %v548
        %v2085 = vmul.f32 %v1573, %v549
        %v2086 = vmul.f32 %v1574, %v550
        %v2087 = vmul.f32 %v1575, %v551
        %v2088 = vmul.f32 %v1576, %v552
        %v2089 = vmul.f32 %v1577, %v553
        %v2090 = vmul.f32 %v1578, %v554
        %v2091 = vmul.f32 %v1579, %v555
        %v2092 = vmul.f32 %v1580, %v556
        %v2093 = vmul.f32 %v1581, %v557
        %v2094 = vmul.f32 %v1582, %v558
        %v2095 = vmul.f32 %v1583, %v559
        %v2096 = vmul.f32 %v1584, %v560
        %v2097 = vmul.f32 %v1585, %v561
        %v2098 = vmul.f32 %v1586, %v562
        %v2099 = vmul.f32 %v1587, %v563
        %v2100 = vmul.f32 %v1588, %v564
        %v2101 = vmul.f32 %v1589, %v565
        %v2102 = vmul.f32 %v1590, %v566
        %v2103 = vmul.f32 %v1591, %v567
        %v2104 = vmul.f32 %v1592, %v568
        %v2105 = vmul.f32 %v1593, %v569
        %v2106 = vmul.f32 %v1594, %v570
        %v2107 = vmul.f32 %v1595, %v571
        %v2108 = vmul.f32 %v1596, %v572
        %v2109 = vmul.f32 %v1597, %v573
        %v2110 = vmul.f32 %v1598, %v574
        %v2111 = vmul.f32 %v1599, %v575
        %v2112 = vmul.f32 %v1600, %v576
        %v2113 = vmul.f32 %v1601, %v577
        %v2114 = vmul.f32 %v1602, %v578
        %v2115 = vmul.f32 %v1603, %v579
        %v2116 = vmul.f32 %v1604, %v580
        %v2117 = vmul.f32 %v1605, %v581
        %v2118 = vmul.f32 %v1606, %v582
        %v2119 = vmul.f32 %v1607, %v583
        %v2120 = vmul.f32 %v1608, %v584
        %v2121 = vmul.f32 %v1609, %v585
        %v2122 = vmul.f32 %v1610, %v586
        %v2123 = vmul.f32 %v1611, %v587
        %v2124 = vmul.f32 %v1612, %v588
        %v2125 = vmul.f32 %v1613, %v589
        %v2126 = vmul.f32 %v1614, %v590
        %v2127 = vmul.f32 %v1615, %v591
        %v2128 = vmul.f32 %v1616, %v592
        %v2129 = vmul.f32 %v1617, %v593
        %v2130 = vmul.f32 %v1618, %v594
        %v2131 = vmul.f32 %v1619, %v595
        %v2132 = vmul.f32 %v1620, %v596
        %v2133 = vmul.f32 %v1621, %v597
        %v2134 = vmul.f32 %v1622, %v598
        %v2135 = vmul.f32 %v1623, %v599
        %v2136 = vmul.f32 %v1624, %v600
        %v2137 = vmul.f32 %v1625, %v601
        %v2138 = vmul.f32 %v1626, %v602
        %v2139 = vmul.f32 %v1627, %v603
        %v2140 = vmul.f32 %v1628, %v604
        %v2141 = vmul.f32 %v1629, %v605
        %v2142 = vmul.f32 %v1630, %v606
        %v2143 = vmul.f32 %v1631, %v607
        %v2144 = vmul.f32 %v1632, %v608
        %v2145 = vmul.f32 %v1633, %v609
        %v2146 = vmul.f32 %v1634, %v610
        %v2147 = vmul.f32 %v1635, %v611
        %v2148 = vmul.f32 %v1636, %v612
        %v2149 = vmul.f32 %v1637, %v613
        %v2150 = vmul.f32 %v1638, %v614
        %v2151 = vmul.f32 %v1639, %v615
        %v2152 = vmul.f32 %v1640, %v616
        %v2153 = vmul.f32 %v1641, %v617
        %v2154 = vmul.f32 %v1642, %v618
        %v2155 = vmul.f32 %v1643, %v619
        %v2156 = vmul.f32 %v1644, %v620
        %v2157 = vmul.f32 %v1645, %v621
        %v2158 = vmul.f32 %v1646, %v622
        %v2159 = vmul.f32 %v1647, %v623
        %v2160 = vmul.f32 %v1648, %v624
        %v2161 = vmul.f32 %v1649, %v625
        %v2162 = vmul.f32 %v1650, %v626
        %v2163 = vmul.f32 %v1651, %v627
        %v2164 = vmul.f32 %v1652, %v628
        %v2165 = vmul.f32 %v1653, %v629
        %v2166 = vmul.f32 %v1654, %v630
        %v2167 = vmul.f32 %v1655, %v631
        %v2168 = vmul.f32 %v1656, %v632
        %v2169 = vmul.f32 %v1657, %v633
        %v2170 = vmul.f32 %v1658, %v634
        %v2171 = vmul.f32 %v1659, %v635
        %v2172 = vmul.f32 %v1660, %v636
        %v2173 = vmul.f32 %v1661, %v637
        %v2174 = vmul.f32 %v1662, %v638
        %v2175 = vmul.f32 %v1663, %v639
        %v2176 = vmul.f32 %v1664, %v640
        %v2177 = vmul.f32 %v1665, %v641
        %v2178 = vmul.f32 %v1666, %v642
        %v2179 = vmul.f32 %v1667, %v643
        %v2180 = vmul.f32 %v1668, %v644
        %v2181 = vmul.f32 %v1669, %v645
        %v2182 = vmul.f32 %v1670, %v646
        %v2183 = vmul.f32 %v1671, %v647
        %v2184 = vmul.f32 %v1672, %v648
        %v2185 = vmul.f32 %v1673, %v649
        %v2186 = vmul.f32 %v1674, %v650
        %v2187 = vmul.f32 %v1675, %v651
        %v2188 = vmul.f32 %v1676, %v652
        %v2189 = vmul.f32 %v1677, %v653
        %v2190 = vmul.f32 %v1678, %v654
        %v2191 = vmul.f32 %v1679, %v655
        %v2192 = vmul.f32 %v1680, %v656
        %v2193 = vmul.f32 %v1681, %v657
        %v2194 = vmul.f32 %v1682, %v658
        %v2195 = vmul.f32 %v1683, %v659
        %v2196 = vmul.f32 %v1684, %v660
        %v2197 = vmul.f32 %v1685, %v661
        %v2198 = vmul.f32 %v1686, %v662
        %v2199 = vmul.f32 %v1687, %v663
        %v2200 = vmul.f32 %v1688, %v664
        %v2201 = vmul.f32 %v1689, %v665
        %v2202 = vmul.f32 %v1690, %v666
        %v2203 = vmul.f32 %v1691, %v667
        %v2204 = vmul.f32 %v1692, %v668
        %v2205 = vmul.f32 %v1693, %v669
        %v2206 = vmul.f32 %v1694, %v670
        %v2207 = vmul.f32 %v1695, %v671
        %v2208 = vmul.f32 %v1696, %v672
        %v2209 = vmul.f32 %v1697, %v673
        %v2210 = vmul.f32 %v1698, %v674
        %v2211 = vmul.f32 %v1699, %v675
        %v2212 = vmul.f32 %v1700, %v676
        %v2213 = vmul.f32 %v1701, %v677
        %v2214 = vmul.f32 %v1702, %v678
        %v2215 = vmul.f32 %v1703, %v679
        %v2216 = vmul.f32 %v1704, %v680
        %v2217 = vmul.f32 %v1705, %v681
        %v2218 = vmul.f32 %v1706, %v682
        %v2219 = vmul.f32 %v1707, %v683
        %v2220 = vmul.f32 %v1708, %v684
        %v2221 = vmul.f32 %v1709, %v685
        %v2222 = vmul.f32 %v1710, %v686
        %v2223 = vmul.f32 %v1711, %v687
        %v2224 = vmul.f32 %v1712, %v688
        %v2225 = vmul.f32 %v1713, %v689
        %v2226 = vmul.f32 %v1714, %v690
        %v2227 = vmul.f32 %v1715, %v691
        %v2228 = vmul.f32 %v1716, %v692
        %v2229 = vmul.f32 %v1717, %v693
        %v2230 = vmul.f32 %v1718, %v694
        %v2231 = vmul.f32 %v1719, %v695
        %v2232 = vmul.f32 %v1720, %v696
        %v2233 = vmul.f32 %v1721, %v697
        %v2234 = vadd.f32 %v698, %v1722
        %v2235 = vadd.f32 %v699, %v1723
        %v2236 = vadd.f32 %v700, %v1724
        %v2237 = vadd.f32 %v701, %v1725
        %v2238 = vadd.f32 %v702, %v1726
        %v2239 = vadd.f32 %v703, %v1727
        %v2240 = vadd.f32 %v704, %v1728
        %v2241 = vadd.f32 %v705, %v1729
        %v2242 = vadd.f32 %v706, %v1730
        %v2243 = vadd.f32 %v707, %v1731
        %v2244 = vadd.f32 %v708, %v1732
        %v2245 = vadd.f32 %v709, %v1733
        %v2246 = vadd.f32 %v710, %v1734
        %v2247 = vadd.f32 %v711, %v1735
        %v2248 = vadd.f32 %v712, %v1736
        %v2249 = vadd.f32 %v713, %v1737
        %v2250 = vadd.f32 %v714, %v1738
        %v2251 = vadd.f32 %v715, %v1739
        %v2252 = vadd.f32 %v716, %v1740
        %v2253 = vadd.f32 %v717, %v1741
        %v2254 = vadd.f32 %v718, %v1742
        %v2255 = vadd.f32 %v719, %v1743
        %v2256 = vadd.f32 %v720, %v1744
        %v2257 = vadd.f32 %v721, %v1745
        %v2258 = vadd.f32 %v722, %v1746
        %v2259 = vadd.f32 %v723, %v1747
        %v2260 = vadd.f32 %v724, %v1748
        %v2261 = vadd.f32 %v725, %v1749
        %v2262 = vadd.f32 %v726, %v1750
        %v2263 = vadd.f32 %v727, %v1751
        %v2264 = vadd.f32 %v728, %v1752
        %v2265 = vadd.f32 %v729, %v1753
        %v2266 = vadd.f32 %v730, %v1754
        %v2267 = vadd.f32 %v731, %v1755
        %v2268 = vadd.f32 %v732, %v1756
        %v2269 = vadd.f32 %v733, %v1757
        %v2270 = vadd.f32 %v734, %v1758
        %v2271 = vadd.f32 %v735, %v1759
        %v2272 = vadd.f32 %v736, %v1760
        %v2273 = vadd.f32 %v737, %v1761
        %v2274 = vadd.f32 %v738, %v1762
        %v2275 = vadd.f32 %v739, %v1763
        %v2276 = vadd.f32 %v740, %v1764
        %v2277 = vadd.f32 %v741, %v1765
        %v2278 = vadd.f32 %v742, %v1766
        %v2279 = vadd.f32 %v743, %v1767
        %v2280 = vadd.f32 %v744, %v1768
        %v2281 = vadd.f32 %v745, %v1769
        %v2282 = vadd.f32 %v746, %v1770
        %v2283 = vadd.f32 %v747, %v1771
        %v2284 = vadd.f32 %v748, %v1772
        %v2285 = vadd.f32 %v749, %v1773
        %v2286 = vadd.f32 %v750, %v1774
        %v2287 = vadd.f32 %v751, %v1775
        %v2288 = vadd.f32 %v752, %v1776
        %v2289 = vadd.f32 %v753, %v1777
        %v2290 = vadd.f32 %v754, %v1778
        %v2291 = vadd.f32 %v755, %v1779
        %v2292 = vadd.f32 %v756, %v1780
        %v2293 = vadd.f32 %v757, %v1781
        %v2294 = vadd.f32 %v758, %v1782
        %v2295 = vadd.f32 %v759, %v1783
        %v2296 = vadd.f32 %v760, %v1784
        %v2297 = vadd.f32 %v761, %v1785
        %v2298 = vadd.f32 %v762, %v1786
        %v2299 = vadd.f32 %v763, %v1787
        %v2300 = vadd.f32 %v764, %v1788
        %v2301 = vadd.f32 %v765, %v1789
        %v2302 = vadd.f32 %v766, %v1790
        %v2303 = vadd.f32 %v767, %v1791
        %v2304 = vadd.f32 %v768, %v1792
        %v2305 = vadd.f32 %v769, %v1793
        %v2306 = vadd.f32 %v770, %v1794
        %v2307 = vadd.f32 %v771, %v1795
        %v2308 = vadd.f32 %v772, %v1796
        %v2309 = vadd.f32 %v773, %v1797
        %v2310 = vadd.f32 %v774, %v1798
        %v2311 = vadd.f32 %v775, %v1799
        %v2312 = vadd.f32 %v776, %v1800
        %v2313 = vadd.f32 %v777, %v1801
        %v2314 = vadd.f32 %v778, %v1802
        %v2315 = vadd.f32 %v779, %v1803
        %v2316 = vadd.f32 %v780, %v1804
        %v2317 = vadd.f32 %v781, %v1805
        %v2318 = vadd.f32 %v782, %v1806
        %v2319 = vadd.f32 %v783, %v1807
        %v2320 = vadd.f32 %v784, %v1808
        %v2321 = vadd.f32 %v785, %v1809
        %v2322 = vadd.f32 %v786, %v1810
        %v2323 = vadd.f32 %v787, %v1811
        %v2324 = vadd.f32 %v788, %v1812
        %v2325 = vadd.f32 %v789, %v1813
        %v2326 = vadd.f32 %v790, %v1814
        %v2327 = vadd.f32 %v791, %v1815
        %v2328 = vadd.f32 %v792, %v1816
        %v2329 = vadd.f32 %v793, %v1817
        %v2330 = vadd.f32 %v794, %v1818
        %v2331 = vadd.f32 %v795, %v1819
        %v2332 = vadd.f32 %v796, %v1820
        %v2333 = vadd.f32 %v797, %v1821
        %v2334 = vadd.f32 %v798, %v1822
        %v2335 = vadd.f32 %v799, %v1823
        %v2336 = vadd.f32 %v800, %v1824
        %v2337 = vadd.f32 %v801, %v1825
        %v2338 = vadd.f32 %v802, %v1826
        %v2339 = vadd.f32 %v803, %v1827
        %v2340 = vadd.f32 %v804, %v1828
        %v2341 = vadd.f32 %v805, %v1829
        %v2342 = vadd.f32 %v806, %v1830
        %v2343 = vadd.f32 %v807, %v1831
        %v2344 = vadd.f32 %v808, %v1832
        %v2345 = vadd.f32 %v809, %v1833
        %v2346 = vadd.f32 %v810, %v1834
        %v2347 = vadd.f32 %v811, %v1835
        %v2348 = vadd.f32 %v812, %v1836
        %v2349 = vadd.f32 %v813, %v1837
        %v2350 = vadd.f32 %v814, %v1838
        %v2351 = vadd.f32 %v815, %v1839
        %v2352 = vadd.f32 %v816, %v1840
        %v2353 = vadd.f32 %v817, %v1841
        %v2354 = vadd.f32 %v818, %v1842
        %v2355 = vadd.f32 %v819, %v1843
        %v2356 = vadd.f32 %v820, %v1844
        %v2357 = vadd.f32 %v821, %v1845
        %v2358 = vadd.f32 %v822, %v1846
        %v2359 = vadd.f32 %v823, %v1847
        %v2360 = vadd.f32 %v824, %v1848
        %v2361 = vadd.f32 %v825, %v1849
        %v2362 = vadd.f32 %v826, %v1850
        %v2363 = vadd.f32 %v827, %v1851
        %v2364 = vadd.f32 %v828, %v1852
        %v2365 = vadd.f32 %v829, %v1853
        %v2366 = vadd.f32 %v830, %v1854
        %v2367 = vadd.f32 %v831, %v1855
        %v2368 = vadd.f32 %v832, %v1856
        %v2369 = vadd.f32 %v833, %v1857
        %v2370 = vadd.f32 %v834, %v1858
        %v2371 = vadd.f32 %v835, %v1859
        %v2372 = vadd.f32 %v836, %v1860
        %v2373 = vadd.f32 %v837, %v1861
        %v2374 = vadd.f32 %v838, %v1862
        %v2375 = vadd.f32 %v839, %v1863
        %v2376 = vadd.f32 %v840, %v1864
        %v2377 = vadd.f32 %v841, %v1865
        %v2378 = vadd.f32 %v842, %v1866
        %v2379 = vadd.f32 %v843, %v1867
        %v2380 = vadd.f32 %v844, %v1868
        %v2381 = vadd.f32 %v845, %v1869
        %v2382 = vadd.f32 %v846, %v1870
        %v2383 = vadd.f32 %v847, %v1871
        %v2384 = vadd.f32 %v848, %v1872
        %v2385 = vadd.f32 %v849, %v1873
        %v2386 = vadd.f32 %v850, %v1874
        %v2387 = vadd.f32 %v851, %v1875
        %v2388 = vadd.f32 %v852, %v1876
        %v2389 = vadd.f32 %v853, %v1877
        %v2390 = vadd.f32 %v854, %v1878
        %v2391 = vadd.f32 %v855, %v1879
        %v2392 = vadd.f32 %v856, %v1880
        %v2393 = vadd.f32 %v857, %v1881
        %v2394 = vadd.f32 %v858, %v1882
        %v2395 = vadd.f32 %v859, %v1883
        %v2396 = vadd.f32 %v860, %v1884
        %v2397 = vadd.f32 %v861, %v1885
        %v2398 = vadd.f32 %v862, %v1886
        %v2399 = vadd.f32 %v863, %v1887
        %v2400 = vadd.f32 %v864, %v1888
        %v2401 = vadd.f32 %v865, %v1889
        %v2402 = vadd.f32 %v866, %v1890
        %v2403 = vadd.f32 %v867, %v1891
        %v2404 = vadd.f32 %v868, %v1892
        %v2405 = vadd.f32 %v869, %v1893
        %v2406 = vadd.f32 %v870, %v1894
        %v2407 = vadd.f32 %v871, %v1895
        %v2408 = vadd.f32 %v872, %v1896
        %v2409 = vadd.f32 %v873, %v1897
        %v2410 = vadd.f32 %v874, %v1898
        %v2411 = vadd.f32 %v875, %v1899
        %v2412 = vadd.f32 %v876, %v1900
        %v2413 = vadd.f32 %v877, %v1901
        %v2414 = vadd.f32 %v878, %v1902
        %v2415 = vadd.f32 %v879, %v1903
        %v2416 = vadd.f32 %v880, %v1904
        %v2417 = vadd.f32 %v881, %v1905
        %v2418 = vadd.f32 %v882, %v1906
        %v2419 = vadd.f32 %v883, %v1907
        %v2420 = vadd.f32 %v884, %v1908
        %v2421 = vadd.f32 %v885, %v1909
        %v2422 = vadd.f32 %v886, %v1910
        %v2423 = vadd.f32 %v887, %v1911
        %v2424 = vadd.f32 %v888, %v1912
        %v2425 = vadd.f32 %v889, %v1913
        %v2426 = vadd.f32 %v890, %v1914
        %v2427 = vadd.f32 %v891, %v1915
        %v2428 = vadd.f32 %v892, %v1916
        %v2429 = vadd.f32 %v893, %v1917
        %v2430 = vadd.f32 %v894, %v1918
        %v2431 = vadd.f32 %v895, %v1919
        %v2432 = vadd.f32 %v896, %v1920
        %v2433 = vadd.f32 %v897, %v1921
        %v2434 = vadd.f32 %v898, %v1922
        %v2435 = vadd.f32 %v899, %v1923
        %v2436 = vadd.f32 %v900, %v1924
        %v2437 = vadd.f32 %v901, %v1925
        %v2438 = vadd.f32 %v902, %v1926
        %v2439 = vadd.f32 %v903, %v1927
        %v2440 = vadd.f32 %v904, %v1928
        %v2441 = vadd.f32 %v905, %v1929
        %v2442 = vadd.f32 %v906, %v1930
        %v2443 = vadd.f32 %v907, %v1931
        %v2444 = vadd.f32 %v908, %v1932
        %v2445 = vadd.f32 %v909, %v1933
        %v2446 = vadd.f32 %v910, %v1934
        %v2447 = vadd.f32 %v911, %v1935
        %v2448 = vadd.f32 %v912, %v1936
        %v2449 = vadd.f32 %v913, %v1937
        %v2450 = vadd.f32 %v914, %v1938
        %v2451 = vadd.f32 %v915, %v1939
        %v2452 = vadd.f32 %v916, %v1940
        %v2453 = vadd.f32 %v917, %v1941
        %v2454 = vadd.f32 %v918, %v1942
        %v2455 = vadd.f32 %v919, %v1943
        %v2456 = vadd.f32 %v920, %v1944
        %v2457 = vadd.f32 %v921, %v1945
        %v2458 = vadd.f32 %v922, %v1946
        %v2459 = vadd.f32 %v923, %v1947
        %v2460 = vadd.f32 %v924, %v1948
        %v2461 = vadd.f32 %v925, %v1949
        %v2462 = vadd.f32 %v926, %v1950
        %v2463 = vadd.f32 %v927, %v1951
        %v2464 = vadd.f32 %v928, %v1952
        %v2465 = vadd.f32 %v929, %v1953
        %v2466 = vadd.f32 %v930, %v1954
        %v2467 = vadd.f32 %v931, %v1955
        %v2468 = vadd.f32 %v932, %v1956
        %v2469 = vadd.f32 %v933, %v1957
        %v2470 = vadd.f32 %v934, %v1958
        %v2471 = vadd.f32 %v935, %v1959
        %v2472 = vadd.f32 %v936, %v1960
        %v2473 = vadd.f32 %v937, %v1961
        %v2474 = vadd.f32 %v938, %v1962
        %v2475 = vadd.f32 %v939, %v1963
        %v2476 = vadd.f32 %v940, %v1964
        %v2477 = vadd.f32 %v941, %v1965
        %v2478 = vadd.f32 %v942, %v1966
        %v2479 = vadd.f32 %v943, %v1967
        %v2480 = vadd.f32 %v944, %v1968
        %v2481 = vadd.f32 %v945, %v1969
        %v2482 = vadd.f32 %v946, %v1970
        %v2483 = vadd.f32 %v947, %v1971
        %v2484 = vadd.f32 %v948, %v1972
        %v2485 = vadd.f32 %v949, %v1973
        %v2486 = vadd.f32 %v950, %v1974
        %v2487 = vadd.f32 %v951, %v1975
        %v2488 = vadd.f32 %v952, %v1976
        %v2489 = vadd.f32 %v953, %v1977
        %v2490 = vadd.f32 %v954, %v1978
        %v2491 = vadd.f32 %v955, %v1979
        %v2492 = vadd.f32 %v956, %v1980
        %v2493 = vadd.f32 %v957, %v1981
        %v2494 = vadd.f32 %v958, %v1982
        %v2495 = vadd.f32 %v959, %v1983
        %v2496 = vadd.f32 %v960, %v1984
        %v2497 = vadd.f32 %v961, %v1985
        %v2498 = vadd.f32 %v962, %v1986
        %v2499 = vadd.f32 %v963, %v1987
        %v2500 = vadd.f32 %v964, %v1988
        %v2501 = vadd.f32 %v965, %v1989
        %v2502 = vadd.f32 %v966, %v1990
        %v2503 = vadd.f32 %v967, %v1991
        %v2504 = vadd.f32 %v968, %v1992
        %v2505 = vadd.f32 %v969, %v1993
        %v2506 = vadd.f32 %v970, %v1994
        %v2507 = vadd.f32 %v971, %v1995
        %v2508 = vadd.f32 %v972, %v1996
        %v2509 = vadd.f32 %v973, %v1997
        %v2510 = vadd.f32 %v974, %v1998
        %v2511 = vadd.f32 %v975, %v1999
        %v2512 = vadd.f32 %v976, %v2000
        %v2513 = vadd.f32 %v977, %v2001
        %v2514 = vadd.f32 %v978, %v2002
        %v2515 = vadd.f32 %v979, %v2003
        %v2516 = vadd.f32 %v980, %v2004
        %v2517 = vadd.f32 %v981, %v2005
        %v2518 = vadd.f32 %v982, %v2006
        %v2519 = vadd.f32 %v983, %v2007
        %v2520 = vadd.f32 %v984, %v2008
        %v2521 = vadd.f32 %v985, %v2009
        %v2522 = vadd.f32 %v986, %v2010
        %v2523 = vadd.f32 %v987, %v2011
        %v2524 = vadd.f32 %v988, %v2012
        %v2525 = vadd.f32 %v989, %v2013
        %v2526 = vadd.f32 %v990, %v2014
        %v2527 = vadd.f32 %v991, %v2015
        %v2528 = vadd.f32 %v992, %v2016
        %v2529 = vadd.f32 %v993, %v2017
        %v2530 = vadd.f32 %v994, %v2018
        %v2531 = vadd.f32 %v995, %v2019
        %v2532 = vadd.f32 %v996, %v2020
        %v2533 = vadd.f32 %v997, %v2021
        %v2534 = vadd.f32 %v998, %v2022
        %v2535 = vadd.f32 %v999, %v2023
        %v2536 = vadd.f32 %v1000, %v2024
        %v2537 = vadd.f32 %v1001, %v2025
        %v2538 = vadd.f32 %v1002, %v2026
        %v2539 = vadd.f32 %v1003, %v2027
        %v2540 = vadd.f32 %v1004, %v2028
        %v2541 = vadd.f32 %v1005, %v2029
        %v2542 = vadd.f32 %v1006, %v2030
        %v2543 = vadd.f32 %v1007, %v2031
        %v2544 = vadd.f32 %v1008, %v2032
        %v2545 = vadd.f32 %v1009, %v2033
        %v2546 = vadd.f32 %v1010, %v2034
        %v2547 = vadd.f32 %v1011, %v2035
        %v2548 = vadd.f32 %v1012, %v2036
        %v2549 = vadd.f32 %v1013, %v2037
        %v2550 = vadd.f32 %v1014, %v2038
        %v2551 = vadd.f32 %v1015, %v2039
        %v2552 = vadd.f32 %v1016, %v2040
        %v2553 = vadd.f32 %v1017, %v2041
        %v2554 = vadd.f32 %v1018, %v2042
        %v2555 = vadd.f32 %v1019, %v2043
        %v2556 = vadd.f32 %v1020, %v2044
        %v2557 = vadd.f32 %v1021, %v2045
        %v2558 = vadd.f32 %v1022, %v2046
        %v2559 = vadd.f32 %v1023, %v2047
        %v2560 = vadd.f32 %v1024, %v2048
        %v2561 = vadd.f32 %v1025, %v2049
        %v2562 = vadd.f32 %v1026, %v2050
        %v2563 = vadd.f32 %v1027, %v2051
        %v2564 = vadd.f32 %v1028, %v2052
        %v2565 = vadd.f32 %v1029, %v2053
        %v2566 = vadd.f32 %v1030, %v2054
        %v2567 = vadd.f32 %v1031, %v2055
        %v2568 = vadd.f32 %v1032, %v2056
        %v2569 = vadd.f32 %v1033, %v2057
        %v2570 = vadd.f32 %v1034, %v2058
        %v2571 = vadd.f32 %v1035, %v2059
        %v2572 = vadd.f32 %v1036, %v2060
        %v2573 = vadd.f32 %v1037, %v2061
        %v2574 = vadd.f32 %v1038, %v2062
        %v2575 = vadd.f32 %v1039, %v2063
        %v2576 = vadd.f32 %v1040, %v2064
        %v2577 = vadd.f32 %v1041, %v2065
        %v2578 = vadd.f32 %v1042, %v2066
        %v2579 = vadd.f32 %v1043, %v2067
        %v2580 = vadd.f32 %v1044, %v2068
        %v2581 = vadd.f32 %v1045, %v2069
        %v2582 = vadd.f32 %v1046, %v2070
        %v2583 = vadd.f32 %v1047, %v2071
        %v2584 = vadd.f32 %v1048, %v2072
        %v2585 = vadd.f32 %v1049, %v2073
        %v2586 = vadd.f32 %v1050, %v2074
        %v2587 = vadd.f32 %v1051, %v2075
        %v2588 = vadd.f32 %v1052, %v2076
        %v2589 = vadd.f32 %v1053, %v2077
        %v2590 = vadd.f32 %v1054, %v2078
        %v2591 = vadd.f32 %v1055, %v2079
        %v2592 = vadd.f32 %v1056, %v2080
        %v2593 = vadd.f32 %v1057, %v2081
        %v2594 = vadd.f32 %v1058, %v2082
        %v2595 = vadd.f32 %v1059, %v2083
        %v2596 = vadd.f32 %v1060, %v2084
        %v2597 = vadd.f32 %v1061, %v2085
        %v2598 = vadd.f32 %v1062, %v2086
        %v2599 = vadd.f32 %v1063, %v2087
        %v2600 = vadd.f32 %v1064, %v2088
        %v2601 = vadd.f32 %v1065, %v2089
        %v2602 = vadd.f32 %v1066, %v2090
        %v2603 = vadd.f32 %v1067, %v2091
        %v2604 = vadd.f32 %v1068, %v2092
        %v2605 = vadd.f32 %v1069, %v2093
        %v2606 = vadd.f32 %v1070, %v2094
        %v2607 = vadd.f32 %v1071, %v2095
        %v2608 = vadd.f32 %v1072, %v2096
        %v2609 = vadd.f32 %v1073, %v2097
        %v2610 = vadd.f32 %v1074, %v2098
        %v2611 = vadd.f32 %v1075, %v2099
        %v2612 = vadd.f32 %v1076, %v2100
        %v2613 = vadd.f32 %v1077, %v2101
        %v2614 = vadd.f32 %v1078, %v2102
        %v2615 = vadd.f32 %v1079, %v2103
        %v2616 = vadd.f32 %v1080, %v2104
        %v2617 = vadd.f32 %v1081, %v2105
        %v2618 = vadd.f32 %v1082, %v2106
        %v2619 = vadd.f32 %v1083, %v2107
        %v2620 = vadd.f32 %v1084, %v2108
        %v2621 = vadd.f32 %v1085, %v2109
        %v2622 = vadd.f32 %v1086, %v2110
        %v2623 = vadd.f32 %v1087, %v2111
        %v2624 = vadd.f32 %v1088, %v2112
        %v2625 = vadd.f32 %v1089, %v2113
        %v2626 = vadd.f32 %v1090, %v2114
        %v2627 = vadd.f32 %v1091, %v2115
        %v2628 = vadd.f32 %v1092, %v2116
        %v2629 = vadd.f32 %v1093, %v2117
        %v2630 = vadd.f32 %v1094, %v2118
        %v2631 = vadd.f32 %v1095, %v2119
        %v2632 = vadd.f32 %v1096, %v2120
        %v2633 = vadd.f32 %v1097, %v2121
        %v2634 = vadd.f32 %v1098, %v2122
        %v2635 = vadd.f32 %v1099, %v2123
        %v2636 = vadd.f32 %v1100, %v2124
        %v2637 = vadd.f32 %v1101, %v2125
        %v2638 = vadd.f32 %v1102, %v2126
        %v2639 = vadd.f32 %v1103, %v2127
        %v2640 = vadd.f32 %v1104, %v2128
        %v2641 = vadd.f32 %v1105, %v2129
        %v2642 = vadd.f32 %v1106, %v2130
        %v2643 = vadd.f32 %v1107, %v2131
        %v2644 = vadd.f32 %v1108, %v2132
        %v2645 = vadd.f32 %v1109, %v2133
        %v2646 = vadd.f32 %v1110, %v2134
        %v2647 = vadd.f32 %v1111, %v2135
        %v2648 = vadd.f32 %v1112, %v2136
        %v2649 = vadd.f32 %v1113, %v2137
        %v2650 = vadd.f32 %v1114, %v2138
        %v2651 = vadd.f32 %v1115, %v2139
        %v2652 = vadd.f32 %v1116, %v2140
        %v2653 = vadd.f32 %v1117, %v2141
        %v2654 = vadd.f32 %v1118, %v2142
        %v2655 = vadd.f32 %v1119, %v2143
        %v2656 = vadd.f32 %v1120, %v2144
        %v2657 = vadd.f32 %v1121, %v2145
        %v2658 = vadd.f32 %v1122, %v2146
        %v2659 = vadd.f32 %v1123, %v2147
        %v2660 = vadd.f32 %v1124, %v2148
        %v2661 = vadd.f32 %v1125, %v2149
        %v2662 = vadd.f32 %v1126, %v2150
        %v2663 = vadd.f32 %v1127, %v2151
        %v2664 = vadd.f32 %v1128, %v2152
        %v2665 = vadd.f32 %v1129, %v2153
        %v2666 = vadd.f32 %v1130, %v2154
        %v2667 = vadd.f32 %v1131, %v2155
        %v2668 = vadd.f32 %v1132, %v2156
        %v2669 = vadd.f32 %v1133, %v2157
        %v2670 = vadd.f32 %v1134, %v2158
        %v2671 = vadd.f32 %v1135, %v2159
        %v2672 = vadd.f32 %v1136, %v2160
        %v2673 = vadd.f32 %v1137, %v2161
        %v2674 = vadd.f32 %v1138, %v2162
        %v2675 = vadd.f32 %v1139, %v2163
        %v2676 = vadd.f32 %v1140, %v2164
        %v2677 = vadd.f32 %v1141, %v2165
        %v2678 = vadd.f32 %v1142, %v2166
        %v2679 = vadd.f32 %v1143, %v2167
        %v2680 = vadd.f32 %v1144, %v2168
        %v2681 = vadd.f32 %v1145, %v2169
        %v2682 = vadd.f32 %v1146, %v2170
        %v2683 = vadd.f32 %v1147, %v2171
        %v2684 = vadd.f32 %v1148, %v2172
        %v2685 = vadd.f32 %v1149, %v2173
        %v2686 = vadd.f32 %v1150, %v2174
        %v2687 = vadd.f32 %v1151, %v2175
        %v2688 = vadd.f32 %v1152, %v2176
        %v2689 = vadd.f32 %v1153, %v2177
        %v2690 = vadd.f32 %v1154, %v2178
        %v2691 = vadd.f32 %v1155, %v2179
        %v2692 = vadd.f32 %v1156, %v2180
        %v2693 = vadd.f32 %v1157, %v2181
        %v2694 = vadd.f32 %v1158, %v2182
        %v2695 = vadd.f32 %v1159, %v2183
        %v2696 = vadd.f32 %v1160, %v2184
        %v2697 = vadd.f32 %v1161, %v2185
        %v2698 = vadd.f32 %v1162, %v2186
        %v2699 = vadd.f32 %v1163, %v2187
        %v2700 = vadd.f32 %v1164, %v2188
        %v2701 = vadd.f32 %v1165, %v2189
        %v2702 = vadd.f32 %v1166, %v2190
        %v2703 = vadd.f32 %v1167, %v2191
        %v2704 = vadd.f32 %v1168, %v2192
        %v2705 = vadd.f32 %v1169, %v2193
        %v2706 = vadd.f32 %v1170, %v2194
        %v2707 = vadd.f32 %v1171, %v2195
        %v2708 = vadd.f32 %v1172, %v2196
        %v2709 = vadd.f32 %v1173, %v2197
        %v2710 = vadd.f32 %v1174, %v2198
        %v2711 = vadd.f32 %v1175, %v2199
        %v2712 = vadd.f32 %v1176, %v2200
        %v2713 = vadd.f32 %v1177, %v2201
        %v2714 = vadd.f32 %v1178, %v2202
        %v2715 = vadd.f32 %v1179, %v2203
        %v2716 = vadd.f32 %v1180, %v2204
        %v2717 = vadd.f32 %v1181, %v2205
        %v2718 = vadd.f32 %v1182, %v2206
        %v2719 = vadd.f32 %v1183, %v2207
        %v2720 = vadd.f32 %v1184, %v2208
        %v2721 = vadd.f32 %v1185, %v2209
        %v2722 = vadd.f32 %v1186, %v2210
        %v2723 = vadd.f32 %v1187, %v2211
        %v2724 = vadd.f32 %v1188, %v2212
        %v2725 = vadd.f32 %v1189, %v2213
        %v2726 = vadd.f32 %v1190, %v2214
        %v2727 = vadd.f32 %v1191, %v2215
        %v2728 = vadd.f32 %v1192, %v2216
        %v2729 = vadd.f32 %v1193, %v2217
        %v2730 = vadd.f32 %v1194, %v2218
        %v2731 = vadd.f32 %v1195, %v2219
        %v2732 = vadd.f32 %v1196, %v2220
        %v2733 = vadd.f32 %v1197, %v2221
        %v2734 = vadd.f32 %v1198, %v2222
        %v2735 = vadd.f32 %v1199, %v2223
        %v2736 = vadd.f32 %v1200, %v2224
        %v2737 = vadd.f32 %v1201, %v2225
        %v2738 = vadd.f32 %v1202, %v2226
        %v2739 = vadd.f32 %v1203, %v2227
        %v2740 = vadd.f32 %v1204, %v2228
        %v2741 = vadd.f32 %v1205, %v2229
        %v2742 = vadd.f32 %v1206, %v2230
        %v2743 = vadd.f32 %v1207, %v2231
        %v2744 = vadd.f32 %v1208, %v2232
        %v2745 = vadd.f32 %v1209, %v2233
        %2746 = vst [vmem:[%s177] sm:$0xff] %v2234
        %2747 = vst [vmem:[%s177 + $0x8] sm:$0xff] %v2235
        %2748 = vst [vmem:[%s177 + $0x10] sm:$0xff] %v2236
        %2749 = vst [vmem:[%s177 + $0x18] sm:$0xff] %v2237
        %2750 = vst [vmem:[%s177 + $0x20] sm:$0xff] %v2238
        %2751 = vst [vmem:[%s177 + $0x28] sm:$0xff] %v2239
        %2752 = vst [vmem:[%s177 + $0x30] sm:$0xff] %v2240
        %2753 = vst [vmem:[%s177 + $0x38] sm:$0xff] %v2241
        %2754 = vst [vmem:[%s177 + $0x40] sm:$0xff] %v2242
        %2755 = vst [vmem:[%s177 + $0x48] sm:$0xff] %v2243
        %2756 = vst [vmem:[%s177 + $0x50] sm:$0xff] %v2244
        %2757 = vst [vmem:[%s177 + $0x58] sm:$0xff] %v2245
        %2758 = vst [vmem:[%s177 + $0x60] sm:$0xff] %v2246
        %2759 = vst [vmem:[%s177 + $0x68] sm:$0xff] %v2247
        %2760 = vst [vmem:[%s177 + $0x70] sm:$0xff] %v2248
        %2761 = vst [vmem:[%s177 + $0x78] sm:$0xff] %v2249
        %2762 = vst [vmem:[%s177 + $0x80] sm:$0xff] %v2250
        %2763 = vst [vmem:[%s177 + $0x88] sm:$0xff] %v2251
        %2764 = vst [vmem:[%s177 + $0x90] sm:$0xff] %v2252
        %2765 = vst [vmem:[%s177 + $0x98] sm:$0xff] %v2253
        %2766 = vst [vmem:[%s177 + $0xa0] sm:$0xff] %v2254
        %2767 = vst [vmem:[%s177 + $0xa8] sm:$0xff] %v2255
        %2768 = vst [vmem:[%s177 + $0xb0] sm:$0xff] %v2256
        %2769 = vst [vmem:[%s177 + $0xb8] sm:$0xff] %v2257
        %2770 = vst [vmem:[%s177 + $0xc0] sm:$0xff] %v2258
        %2771 = vst [vmem:[%s177 + $0xc8] sm:$0xff] %v2259
        %2772 = vst [vmem:[%s177 + $0xd0] sm:$0xff] %v2260
        %2773 = vst [vmem:[%s177 + $0xd8] sm:$0xff] %v2261
        %2774 = vst [vmem:[%s177 + $0xe0] sm:$0xff] %v2262
        %2775 = vst [vmem:[%s177 + $0xe8] sm:$0xff] %v2263
        %2776 = vst [vmem:[%s177 + $0xf0] sm:$0xff] %v2264
        %2777 = vst [vmem:[%s177 + $0xf8] sm:$0xff] %v2265
        %2778 = vst [vmem:[%s177 + $0x100] sm:$0xff] %v2266
        %2779 = vst [vmem:[%s177 + $0x108] sm:$0xff] %v2267
        %2780 = vst [vmem:[%s177 + $0x110] sm:$0xff] %v2268
        %2781 = vst [vmem:[%s177 + $0x118] sm:$0xff] %v2269
        %2782 = vst [vmem:[%s177 + $0x120] sm:$0xff] %v2270
        %2783 = vst [vmem:[%s177 + $0x128] sm:$0xff] %v2271
        %2784 = vst [vmem:[%s177 + $0x130] sm:$0xff] %v2272
        %2785 = vst [vmem:[%s177 + $0x138] sm:$0xff] %v2273
        %2786 = vst [vmem:[%s177 + $0x140] sm:$0xff] %v2274
        %2787 = vst [vmem:[%s177 + $0x148] sm:$0xff] %v2275
        %2788 = vst [vmem:[%s177 + $0x150] sm:$0xff] %v2276
        %2789 = vst [vmem:[%s177 + $0x158] sm:$0xff] %v2277
        %2790 = vst [vmem:[%s177 + $0x160] sm:$0xff] %v2278
        %2791 = vst [vmem:[%s177 + $0x168] sm:$0xff] %v2279
        %2792 = vst [vmem:[%s177 + $0x170] sm:$0xff] %v2280
        %2793 = vst [vmem:[%s177 + $0x178] sm:$0xff] %v2281
        %2794 = vst [vmem:[%s177 + $0x180] sm:$0xff] %v2282
        %2795 = vst [vmem:[%s177 + $0x188] sm:$0xff] %v2283
        %2796 = vst [vmem:[%s177 + $0x190] sm:$0xff] %v2284
        %2797 = vst [vmem:[%s177 + $0x198] sm:$0xff] %v2285
        %2798 = vst [vmem:[%s177 + $0x1a0] sm:$0xff] %v2286
        %2799 = vst [vmem:[%s177 + $0x1a8] sm:$0xff] %v2287
        %2800 = vst [vmem:[%s177 + $0x1b0] sm:$0xff] %v2288
        %2801 = vst [vmem:[%s177 + $0x1b8] sm:$0xff] %v2289
        %2802 = vst [vmem:[%s177 + $0x1c0] sm:$0xff] %v2290
        %2803 = vst [vmem:[%s177 + $0x1c8] sm:$0xff] %v2291
        %2804 = vst [vmem:[%s177 + $0x1d0] sm:$0xff] %v2292
        %2805 = vst [vmem:[%s177 + $0x1d8] sm:$0xff] %v2293
        %2806 = vst [vmem:[%s177 + $0x1e0] sm:$0xff] %v2294
        %2807 = vst [vmem:[%s177 + $0x1e8] sm:$0xff] %v2295
        %2808 = vst [vmem:[%s177 + $0x1f0] sm:$0xff] %v2296
        %2809 = vst [vmem:[%s177 + $0x1f8] sm:$0xff] %v2297
        %2810 = vst [vmem:[%s177 + $0x200] sm:$0xff] %v2298
        %2811 = vst [vmem:[%s177 + $0x208] sm:$0xff] %v2299
        %2812 = vst [vmem:[%s177 + $0x210] sm:$0xff] %v2300
        %2813 = vst [vmem:[%s177 + $0x218] sm:$0xff] %v2301
        %2814 = vst [vmem:[%s177 + $0x220] sm:$0xff] %v2302
        %2815 = vst [vmem:[%s177 + $0x228] sm:$0xff] %v2303
        %2816 = vst [vmem:[%s177 + $0x230] sm:$0xff] %v2304
        %2817 = vst [vmem:[%s177 + $0x238] sm:$0xff] %v2305
        %2818 = vst [vmem:[%s177 + $0x240] sm:$0xff] %v2306
        %2819 = vst [vmem:[%s177 + $0x248] sm:$0xff] %v2307
        %2820 = vst [vmem:[%s177 + $0x250] sm:$0xff] %v2308
        %2821 = vst [vmem:[%s177 + $0x258] sm:$0xff] %v2309
        %2822 = vst [vmem:[%s177 + $0x260] sm:$0xff] %v2310
        %2823 = vst [vmem:[%s177 + $0x268] sm:$0xff] %v2311
        %2824 = vst [vmem:[%s177 + $0x270] sm:$0xff] %v2312
        %2825 = vst [vmem:[%s177 + $0x278] sm:$0xff] %v2313
        %2826 = vst [vmem:[%s177 + $0x280] sm:$0xff] %v2314
        %2827 = vst [vmem:[%s177 + $0x288] sm:$0xff] %v2315
        %2828 = vst [vmem:[%s177 + $0x290] sm:$0xff] %v2316
        %2829 = vst [vmem:[%s177 + $0x298] sm:$0xff] %v2317
        %2830 = vst [vmem:[%s177 + $0x2a0] sm:$0xff] %v2318
        %2831 = vst [vmem:[%s177 + $0x2a8] sm:$0xff] %v2319
        %2832 = vst [vmem:[%s177 + $0x2b0] sm:$0xff] %v2320
        %2833 = vst [vmem:[%s177 + $0x2b8] sm:$0xff] %v2321
        %2834 = vst [vmem:[%s177 + $0x2c0] sm:$0xff] %v2322
        %2835 = vst [vmem:[%s177 + $0x2c8] sm:$0xff] %v2323
        %2836 = vst [vmem:[%s177 + $0x2d0] sm:$0xff] %v2324
        %2837 = vst [vmem:[%s177 + $0x2d8] sm:$0xff] %v2325
        %2838 = vst [vmem:[%s177 + $0x2e0] sm:$0xff] %v2326
        %2839 = vst [vmem:[%s177 + $0x2e8] sm:$0xff] %v2327
        %2840 = vst [vmem:[%s177 + $0x2f0] sm:$0xff] %v2328
        %2841 = vst [vmem:[%s177 + $0x2f8] sm:$0xff] %v2329
        %2842 = vst [vmem:[%s177 + $0x300] sm:$0xff] %v2330
        %2843 = vst [vmem:[%s177 + $0x308] sm:$0xff] %v2331
        %2844 = vst [vmem:[%s177 + $0x310] sm:$0xff] %v2332
        %2845 = vst [vmem:[%s177 + $0x318] sm:$0xff] %v2333
        %2846 = vst [vmem:[%s177 + $0x320] sm:$0xff] %v2334
        %2847 = vst [vmem:[%s177 + $0x328] sm:$0xff] %v2335
        %2848 = vst [vmem:[%s177 + $0x330] sm:$0xff] %v2336
        %2849 = vst [vmem:[%s177 + $0x338] sm:$0xff] %v2337
        %2850 = vst [vmem:[%s177 + $0x340] sm:$0xff] %v2338
        %2851 = vst [vmem:[%s177 + $0x348] sm:$0xff] %v2339
        %2852 = vst [vmem:[%s177 + $0x350] sm:$0xff] %v2340
        %2853 = vst [vmem:[%s177 + $0x358] sm:$0xff] %v2341
        %2854 = vst [vmem:[%s177 + $0x360] sm:$0xff] %v2342
        %2855 = vst [vmem:[%s177 + $0x368] sm:$0xff] %v2343
        %2856 = vst [vmem:[%s177 + $0x370] sm:$0xff] %v2344
        %2857 = vst [vmem:[%s177 + $0x378] sm:$0xff] %v2345
        %2858 = vst [vmem:[%s177 + $0x380] sm:$0xff] %v2346
        %2859 = vst [vmem:[%s177 + $0x388] sm:$0xff] %v2347
        %2860 = vst [vmem:[%s177 + $0x390] sm:$0xff] %v2348
        %2861 = vst [vmem:[%s177 + $0x398] sm:$0xff] %v2349
        %2862 = vst [vmem:[%s177 + $0x3a0] sm:$0xff] %v2350
        %2863 = vst [vmem:[%s177 + $0x3a8] sm:$0xff] %v2351
        %2864 = vst [vmem:[%s177 + $0x3b0] sm:$0xff] %v2352
        %2865 = vst [vmem:[%s177 + $0x3b8] sm:$0xff] %v2353
        %2866 = vst [vmem:[%s177 + $0x3c0] sm:$0xff] %v2354
        %2867 = vst [vmem:[%s177 + $0x3c8] sm:$0xff] %v2355
        %2868 = vst [vmem:[%s177 + $0x3d0] sm:$0xff] %v2356
        %2869 = vst [vmem:[%s177 + $0x3d8] sm:$0xff] %v2357
        %2870 = vst [vmem:[%s177 + $0x3e0] sm:$0xff] %v2358
        %2871 = vst [vmem:[%s177 + $0x3e8] sm:$0xff] %v2359
        %2872 = vst [vmem:[%s177 + $0x3f0] sm:$0xff] %v2360
        %2873 = vst [vmem:[%s177 + $0x3f8] sm:$0xff] %v2361
        %2874 = vst [vmem:[%s177 + $0x400] sm:$0xff] %v2362
        %2875 = vst [vmem:[%s177 + $0x408] sm:$0xff] %v2363
        %2876 = vst [vmem:[%s177 + $0x410] sm:$0xff] %v2364
        %2877 = vst [vmem:[%s177 + $0x418] sm:$0xff] %v2365
        %2878 = vst [vmem:[%s177 + $0x420] sm:$0xff] %v2366
        %2879 = vst [vmem:[%s177 + $0x428] sm:$0xff] %v2367
        %2880 = vst [vmem:[%s177 + $0x430] sm:$0xff] %v2368
        %2881 = vst [vmem:[%s177 + $0x438] sm:$0xff] %v2369
        %2882 = vst [vmem:[%s177 + $0x440] sm:$0xff] %v2370
        %2883 = vst [vmem:[%s177 + $0x448] sm:$0xff] %v2371
        %2884 = vst [vmem:[%s177 + $0x450] sm:$0xff] %v2372
        %2885 = vst [vmem:[%s177 + $0x458] sm:$0xff] %v2373
        %2886 = vst [vmem:[%s177 + $0x460] sm:$0xff] %v2374
        %2887 = vst [vmem:[%s177 + $0x468] sm:$0xff] %v2375
        %2888 = vst [vmem:[%s177 + $0x470] sm:$0xff] %v2376
        %2889 = vst [vmem:[%s177 + $0x478] sm:$0xff] %v2377
        %2890 = vst [vmem:[%s177 + $0x480] sm:$0xff] %v2378
        %2891 = vst [vmem:[%s177 + $0x488] sm:$0xff] %v2379
        %2892 = vst [vmem:[%s177 + $0x490] sm:$0xff] %v2380
        %2893 = vst [vmem:[%s177 + $0x498] sm:$0xff] %v2381
        %2894 = vst [vmem:[%s177 + $0x4a0] sm:$0xff] %v2382
        %2895 = vst [vmem:[%s177 + $0x4a8] sm:$0xff] %v2383
        %2896 = vst [vmem:[%s177 + $0x4b0] sm:$0xff] %v2384
        %2897 = vst [vmem:[%s177 + $0x4b8] sm:$0xff] %v2385
        %2898 = vst [vmem:[%s177 + $0x4c0] sm:$0xff] %v2386
        %2899 = vst [vmem:[%s177 + $0x4c8] sm:$0xff] %v2387
        %2900 = vst [vmem:[%s177 + $0x4d0] sm:$0xff] %v2388
        %2901 = vst [vmem:[%s177 + $0x4d8] sm:$0xff] %v2389
        %2902 = vst [vmem:[%s177 + $0x4e0] sm:$0xff] %v2390
        %2903 = vst [vmem:[%s177 + $0x4e8] sm:$0xff] %v2391
        %2904 = vst [vmem:[%s177 + $0x4f0] sm:$0xff] %v2392
        %2905 = vst [vmem:[%s177 + $0x4f8] sm:$0xff] %v2393
        %2906 = vst [vmem:[%s177 + $0x500] sm:$0xff] %v2394
        %2907 = vst [vmem:[%s177 + $0x508] sm:$0xff] %v2395
        %2908 = vst [vmem:[%s177 + $0x510] sm:$0xff] %v2396
        %2909 = vst [vmem:[%s177 + $0x518] sm:$0xff] %v2397
        %2910 = vst [vmem:[%s177 + $0x520] sm:$0xff] %v2398
        %2911 = vst [vmem:[%s177 + $0x528] sm:$0xff] %v2399
        %2912 = vst [vmem:[%s177 + $0x530] sm:$0xff] %v2400
        %2913 = vst [vmem:[%s177 + $0x538] sm:$0xff] %v2401
        %2914 = vst [vmem:[%s177 + $0x540] sm:$0xff] %v2402
        %2915 = vst [vmem:[%s177 + $0x548] sm:$0xff] %v2403
        %2916 = vst [vmem:[%s177 + $0x550] sm:$0xff] %v2404
        %2917 = vst [vmem:[%s177 + $0x558] sm:$0xff] %v2405
        %2918 = vst [vmem:[%s177 + $0x560] sm:$0xff] %v2406
        %2919 = vst [vmem:[%s177 + $0x568] sm:$0xff] %v2407
        %2920 = vst [vmem:[%s177 + $0x570] sm:$0xff] %v2408
        %2921 = vst [vmem:[%s177 + $0x578] sm:$0xff] %v2409
        %2922 = vst [vmem:[%s177 + $0x580] sm:$0xff] %v2410
        %2923 = vst [vmem:[%s177 + $0x588] sm:$0xff] %v2411
        %2924 = vst [vmem:[%s177 + $0x590] sm:$0xff] %v2412
        %2925 = vst [vmem:[%s177 + $0x598] sm:$0xff] %v2413
        %2926 = vst [vmem:[%s177 + $0x5a0] sm:$0xff] %v2414
        %2927 = vst [vmem:[%s177 + $0x5a8] sm:$0xff] %v2415
        %2928 = vst [vmem:[%s177 + $0x5b0] sm:$0xff] %v2416
        %2929 = vst [vmem:[%s177 + $0x5b8] sm:$0xff] %v2417
        %2930 = vst [vmem:[%s177 + $0x5c0] sm:$0xff] %v2418
        %2931 = vst [vmem:[%s177 + $0x5c8] sm:$0xff] %v2419
        %2932 = vst [vmem:[%s177 + $0x5d0] sm:$0xff] %v2420
        %2933 = vst [vmem:[%s177 + $0x5d8] sm:$0xff] %v2421
        %2934 = vst [vmem:[%s177 + $0x5e0] sm:$0xff] %v2422
        %2935 = vst [vmem:[%s177 + $0x5e8] sm:$0xff] %v2423
        %2936 = vst [vmem:[%s177 + $0x5f0] sm:$0xff] %v2424
        %2937 = vst [vmem:[%s177 + $0x5f8] sm:$0xff] %v2425
        %2938 = vst [vmem:[%s177 + $0x600] sm:$0xff] %v2426
        %2939 = vst [vmem:[%s177 + $0x608] sm:$0xff] %v2427
        %2940 = vst [vmem:[%s177 + $0x610] sm:$0xff] %v2428
        %2941 = vst [vmem:[%s177 + $0x618] sm:$0xff] %v2429
        %2942 = vst [vmem:[%s177 + $0x620] sm:$0xff] %v2430
        %2943 = vst [vmem:[%s177 + $0x628] sm:$0xff] %v2431
        %2944 = vst [vmem:[%s177 + $0x630] sm:$0xff] %v2432
        %2945 = vst [vmem:[%s177 + $0x638] sm:$0xff] %v2433
        %2946 = vst [vmem:[%s177 + $0x640] sm:$0xff] %v2434
        %2947 = vst [vmem:[%s177 + $0x648] sm:$0xff] %v2435
        %2948 = vst [vmem:[%s177 + $0x650] sm:$0xff] %v2436
        %2949 = vst [vmem:[%s177 + $0x658] sm:$0xff] %v2437
        %2950 = vst [vmem:[%s177 + $0x660] sm:$0xff] %v2438
        %2951 = vst [vmem:[%s177 + $0x668] sm:$0xff] %v2439
        %2952 = vst [vmem:[%s177 + $0x670] sm:$0xff] %v2440
        %2953 = vst [vmem:[%s177 + $0x678] sm:$0xff] %v2441
        %2954 = vst [vmem:[%s177 + $0x680] sm:$0xff] %v2442
        %2955 = vst [vmem:[%s177 + $0x688] sm:$0xff] %v2443
        %2956 = vst [vmem:[%s177 + $0x690] sm:$0xff] %v2444
        %2957 = vst [vmem:[%s177 + $0x698] sm:$0xff] %v2445
        %2958 = vst [vmem:[%s177 + $0x6a0] sm:$0xff] %v2446
        %2959 = vst [vmem:[%s177 + $0x6a8] sm:$0xff] %v2447
        %2960 = vst [vmem:[%s177 + $0x6b0] sm:$0xff] %v2448
        %2961 = vst [vmem:[%s177 + $0x6b8] sm:$0xff] %v2449
        %2962 = vst [vmem:[%s177 + $0x6c0] sm:$0xff] %v2450
        %2963 = vst [vmem:[%s177 + $0x6c8] sm:$0xff] %v2451
        %2964 = vst [vmem:[%s177 + $0x6d0] sm:$0xff] %v2452
        %2965 = vst [vmem:[%s177 + $0x6d8] sm:$0xff] %v2453
        %2966 = vst [vmem:[%s177 + $0x6e0] sm:$0xff] %v2454
        %2967 = vst [vmem:[%s177 + $0x6e8] sm:$0xff] %v2455
        %2968 = vst [vmem:[%s177 + $0x6f0] sm:$0xff] %v2456
        %2969 = vst [vmem:[%s177 + $0x6f8] sm:$0xff] %v2457
        %2970 = vst [vmem:[%s177 + $0x700] sm:$0xff] %v2458
        %2971 = vst [vmem:[%s177 + $0x708] sm:$0xff] %v2459
        %2972 = vst [vmem:[%s177 + $0x710] sm:$0xff] %v2460
        %2973 = vst [vmem:[%s177 + $0x718] sm:$0xff] %v2461
        %2974 = vst [vmem:[%s177 + $0x720] sm:$0xff] %v2462
        %2975 = vst [vmem:[%s177 + $0x728] sm:$0xff] %v2463
        %2976 = vst [vmem:[%s177 + $0x730] sm:$0xff] %v2464
        %2977 = vst [vmem:[%s177 + $0x738] sm:$0xff] %v2465
        %2978 = vst [vmem:[%s177 + $0x740] sm:$0xff] %v2466
        %2979 = vst [vmem:[%s177 + $0x748] sm:$0xff] %v2467
        %2980 = vst [vmem:[%s177 + $0x750] sm:$0xff] %v2468
        %2981 = vst [vmem:[%s177 + $0x758] sm:$0xff] %v2469
        %2982 = vst [vmem:[%s177 + $0x760] sm:$0xff] %v2470
        %2983 = vst [vmem:[%s177 + $0x768] sm:$0xff] %v2471
        %2984 = vst [vmem:[%s177 + $0x770] sm:$0xff] %v2472
        %2985 = vst [vmem:[%s177 + $0x778] sm:$0xff] %v2473
        %2986 = vst [vmem:[%s177 + $0x780] sm:$0xff] %v2474
        %2987 = vst [vmem:[%s177 + $0x788] sm:$0xff] %v2475
        %2988 = vst [vmem:[%s177 + $0x790] sm:$0xff] %v2476
        %2989 = vst [vmem:[%s177 + $0x798] sm:$0xff] %v2477
        %2990 = vst [vmem:[%s177 + $0x7a0] sm:$0xff] %v2478
        %2991 = vst [vmem:[%s177 + $0x7a8] sm:$0xff] %v2479
        %2992 = vst [vmem:[%s177 + $0x7b0] sm:$0xff] %v2480
        %2993 = vst [vmem:[%s177 + $0x7b8] sm:$0xff] %v2481
        %2994 = vst [vmem:[%s177 + $0x7c0] sm:$0xff] %v2482
        %2995 = vst [vmem:[%s177 + $0x7c8] sm:$0xff] %v2483
        %2996 = vst [vmem:[%s177 + $0x7d0] sm:$0xff] %v2484
        %2997 = vst [vmem:[%s177 + $0x7d8] sm:$0xff] %v2485
        %2998 = vst [vmem:[%s177 + $0x7e0] sm:$0xff] %v2486
        %2999 = vst [vmem:[%s177 + $0x7e8] sm:$0xff] %v2487
        %3000 = vst [vmem:[%s177 + $0x7f0] sm:$0xff] %v2488
        %3001 = vst [vmem:[%s177 + $0x7f8] sm:$0xff] %v2489
        %3002 = vst [vmem:[%s177 + $0x800] sm:$0xff] %v2490
        %3003 = vst [vmem:[%s177 + $0x808] sm:$0xff] %v2491
        %3004 = vst [vmem:[%s177 + $0x810] sm:$0xff] %v2492
        %3005 = vst [vmem:[%s177 + $0x818] sm:$0xff] %v2493
        %3006 = vst [vmem:[%s177 + $0x820] sm:$0xff] %v2494
        %3007 = vst [vmem:[%s177 + $0x828] sm:$0xff] %v2495
        %3008 = vst [vmem:[%s177 + $0x830] sm:$0xff] %v2496
        %3009 = vst [vmem:[%s177 + $0x838] sm:$0xff] %v2497
        %3010 = vst [vmem:[%s177 + $0x840] sm:$0xff] %v2498
        %3011 = vst [vmem:[%s177 + $0x848] sm:$0xff] %v2499
        %3012 = vst [vmem:[%s177 + $0x850] sm:$0xff] %v2500
        %3013 = vst [vmem:[%s177 + $0x858] sm:$0xff] %v2501
        %3014 = vst [vmem:[%s177 + $0x860] sm:$0xff] %v2502
        %3015 = vst [vmem:[%s177 + $0x868] sm:$0xff] %v2503
        %3016 = vst [vmem:[%s177 + $0x870] sm:$0xff] %v2504
        %3017 = vst [vmem:[%s177 + $0x878] sm:$0xff] %v2505
        %3018 = vst [vmem:[%s177 + $0x880] sm:$0xff] %v2506
        %3019 = vst [vmem:[%s177 + $0x888] sm:$0xff] %v2507
        %3020 = vst [vmem:[%s177 + $0x890] sm:$0xff] %v2508
        %3021 = vst [vmem:[%s177 + $0x898] sm:$0xff] %v2509
        %3022 = vst [vmem:[%s177 + $0x8a0] sm:$0xff] %v2510
        %3023 = vst [vmem:[%s177 + $0x8a8] sm:$0xff] %v2511
        %3024 = vst [vmem:[%s177 + $0x8b0] sm:$0xff] %v2512
        %3025 = vst [vmem:[%s177 + $0x8b8] sm:$0xff] %v2513
        %3026 = vst [vmem:[%s177 + $0x8c0] sm:$0xff] %v2514
        %3027 = vst [vmem:[%s177 + $0x8c8] sm:$0xff] %v2515
        %3028 = vst [vmem:[%s177 + $0x8d0] sm:$0xff] %v2516
        %3029 = vst [vmem:[%s177 + $0x8d8] sm:$0xff] %v2517
        %3030 = vst [vmem:[%s177 + $0x8e0] sm:$0xff] %v2518
        %3031 = vst [vmem:[%s177 + $0x8e8] sm:$0xff] %v2519
        %3032 = vst [vmem:[%s177 + $0x8f0] sm:$0xff] %v2520
        %3033 = vst [vmem:[%s177 + $0x8f8] sm:$0xff] %v2521
        %3034 = vst [vmem:[%s177 + $0x900] sm:$0xff] %v2522
        %3035 = vst [vmem:[%s177 + $0x908] sm:$0xff] %v2523
        %3036 = vst [vmem:[%s177 + $0x910] sm:$0xff] %v2524
        %3037 = vst [vmem:[%s177 + $0x918] sm:$0xff] %v2525
        %3038 = vst [vmem:[%s177 + $0x920] sm:$0xff] %v2526
        %3039 = vst [vmem:[%s177 + $0x928] sm:$0xff] %v2527
        %3040 = vst [vmem:[%s177 + $0x930] sm:$0xff] %v2528
        %3041 = vst [vmem:[%s177 + $0x938] sm:$0xff] %v2529
        %3042 = vst [vmem:[%s177 + $0x940] sm:$0xff] %v2530
        %3043 = vst [vmem:[%s177 + $0x948] sm:$0xff] %v2531
        %3044 = vst [vmem:[%s177 + $0x950] sm:$0xff] %v2532
        %3045 = vst [vmem:[%s177 + $0x958] sm:$0xff] %v2533
        %3046 = vst [vmem:[%s177 + $0x960] sm:$0xff] %v2534
        %3047 = vst [vmem:[%s177 + $0x968] sm:$0xff] %v2535
        %3048 = vst [vmem:[%s177 + $0x970] sm:$0xff] %v2536
        %3049 = vst [vmem:[%s177 + $0x978] sm:$0xff] %v2537
        %3050 = vst [vmem:[%s177 + $0x980] sm:$0xff] %v2538
        %3051 = vst [vmem:[%s177 + $0x988] sm:$0xff] %v2539
        %3052 = vst [vmem:[%s177 + $0x990] sm:$0xff] %v2540
        %3053 = vst [vmem:[%s177 + $0x998] sm:$0xff] %v2541
        %3054 = vst [vmem:[%s177 + $0x9a0] sm:$0xff] %v2542
        %3055 = vst [vmem:[%s177 + $0x9a8] sm:$0xff] %v2543
        %3056 = vst [vmem:[%s177 + $0x9b0] sm:$0xff] %v2544
        %3057 = vst [vmem:[%s177 + $0x9b8] sm:$0xff] %v2545
        %3058 = vst [vmem:[%s177 + $0x9c0] sm:$0xff] %v2546
        %3059 = vst [vmem:[%s177 + $0x9c8] sm:$0xff] %v2547
        %3060 = vst [vmem:[%s177 + $0x9d0] sm:$0xff] %v2548
        %3061 = vst [vmem:[%s177 + $0x9d8] sm:$0xff] %v2549
        %3062 = vst [vmem:[%s177 + $0x9e0] sm:$0xff] %v2550
        %3063 = vst [vmem:[%s177 + $0x9e8] sm:$0xff] %v2551
        %3064 = vst [vmem:[%s177 + $0x9f0] sm:$0xff] %v2552
        %3065 = vst [vmem:[%s177 + $0x9f8] sm:$0xff] %v2553
        %3066 = vst [vmem:[%s177 + $0xa00] sm:$0xff] %v2554
        %3067 = vst [vmem:[%s177 + $0xa08] sm:$0xff] %v2555
        %3068 = vst [vmem:[%s177 + $0xa10] sm:$0xff] %v2556
        %3069 = vst [vmem:[%s177 + $0xa18] sm:$0xff] %v2557
        %3070 = vst [vmem:[%s177 + $0xa20] sm:$0xff] %v2558
        %3071 = vst [vmem:[%s177 + $0xa28] sm:$0xff] %v2559
        %3072 = vst [vmem:[%s177 + $0xa30] sm:$0xff] %v2560
        %3073 = vst [vmem:[%s177 + $0xa38] sm:$0xff] %v2561
        %3074 = vst [vmem:[%s177 + $0xa40] sm:$0xff] %v2562
        %3075 = vst [vmem:[%s177 + $0xa48] sm:$0xff] %v2563
        %3076 = vst [vmem:[%s177 + $0xa50] sm:$0xff] %v2564
        %3077 = vst [vmem:[%s177 + $0xa58] sm:$0xff] %v2565
        %3078 = vst [vmem:[%s177 + $0xa60] sm:$0xff] %v2566
        %3079 = vst [vmem:[%s177 + $0xa68] sm:$0xff] %v2567
        %3080 = vst [vmem:[%s177 + $0xa70] sm:$0xff] %v2568
        %3081 = vst [vmem:[%s177 + $0xa78] sm:$0xff] %v2569
        %3082 = vst [vmem:[%s177 + $0xa80] sm:$0xff] %v2570
        %3083 = vst [vmem:[%s177 + $0xa88] sm:$0xff] %v2571
        %3084 = vst [vmem:[%s177 + $0xa90] sm:$0xff] %v2572
        %3085 = vst [vmem:[%s177 + $0xa98] sm:$0xff] %v2573
        %3086 = vst [vmem:[%s177 + $0xaa0] sm:$0xff] %v2574
        %3087 = vst [vmem:[%s177 + $0xaa8] sm:$0xff] %v2575
        %3088 = vst [vmem:[%s177 + $0xab0] sm:$0xff] %v2576
        %3089 = vst [vmem:[%s177 + $0xab8] sm:$0xff] %v2577
        %3090 = vst [vmem:[%s177 + $0xac0] sm:$0xff] %v2578
        %3091 = vst [vmem:[%s177 + $0xac8] sm:$0xff] %v2579
        %3092 = vst [vmem:[%s177 + $0xad0] sm:$0xff] %v2580
        %3093 = vst [vmem:[%s177 + $0xad8] sm:$0xff] %v2581
        %3094 = vst [vmem:[%s177 + $0xae0] sm:$0xff] %v2582
        %3095 = vst [vmem:[%s177 + $0xae8] sm:$0xff] %v2583
        %3096 = vst [vmem:[%s177 + $0xaf0] sm:$0xff] %v2584
        %3097 = vst [vmem:[%s177 + $0xaf8] sm:$0xff] %v2585
        %3098 = vst [vmem:[%s177 + $0xb00] sm:$0xff] %v2586
        %3099 = vst [vmem:[%s177 + $0xb08] sm:$0xff] %v2587
        %3100 = vst [vmem:[%s177 + $0xb10] sm:$0xff] %v2588
        %3101 = vst [vmem:[%s177 + $0xb18] sm:$0xff] %v2589
        %3102 = vst [vmem:[%s177 + $0xb20] sm:$0xff] %v2590
        %3103 = vst [vmem:[%s177 + $0xb28] sm:$0xff] %v2591
        %3104 = vst [vmem:[%s177 + $0xb30] sm:$0xff] %v2592
        %3105 = vst [vmem:[%s177 + $0xb38] sm:$0xff] %v2593
        %3106 = vst [vmem:[%s177 + $0xb40] sm:$0xff] %v2594
        %3107 = vst [vmem:[%s177 + $0xb48] sm:$0xff] %v2595
        %3108 = vst [vmem:[%s177 + $0xb50] sm:$0xff] %v2596
        %3109 = vst [vmem:[%s177 + $0xb58] sm:$0xff] %v2597
        %3110 = vst [vmem:[%s177 + $0xb60] sm:$0xff] %v2598
        %3111 = vst [vmem:[%s177 + $0xb68] sm:$0xff] %v2599
        %3112 = vst [vmem:[%s177 + $0xb70] sm:$0xff] %v2600
        %3113 = vst [vmem:[%s177 + $0xb78] sm:$0xff] %v2601
        %3114 = vst [vmem:[%s177 + $0xb80] sm:$0xff] %v2602
        %3115 = vst [vmem:[%s177 + $0xb88] sm:$0xff] %v2603
        %3116 = vst [vmem:[%s177 + $0xb90] sm:$0xff] %v2604
        %3117 = vst [vmem:[%s177 + $0xb98] sm:$0xff] %v2605
        %3118 = vst [vmem:[%s177 + $0xba0] sm:$0xff] %v2606
        %3119 = vst [vmem:[%s177 + $0xba8] sm:$0xff] %v2607
        %3120 = vst [vmem:[%s177 + $0xbb0] sm:$0xff] %v2608
        %3121 = vst [vmem:[%s177 + $0xbb8] sm:$0xff] %v2609
        %3122 = vst [vmem:[%s177 + $0xbc0] sm:$0xff] %v2610
        %3123 = vst [vmem:[%s177 + $0xbc8] sm:$0xff] %v2611
        %3124 = vst [vmem:[%s177 + $0xbd0] sm:$0xff] %v2612
        %3125 = vst [vmem:[%s177 + $0xbd8] sm:$0xff] %v2613
        %3126 = vst [vmem:[%s177 + $0xbe0] sm:$0xff] %v2614
        %3127 = vst [vmem:[%s177 + $0xbe8] sm:$0xff] %v2615
        %3128 = vst [vmem:[%s177 + $0xbf0] sm:$0xff] %v2616
        %3129 = vst [vmem:[%s177 + $0xbf8] sm:$0xff] %v2617
        %3130 = vst [vmem:[%s177 + $0xc00] sm:$0xff] %v2618
        %3131 = vst [vmem:[%s177 + $0xc08] sm:$0xff] %v2619
        %3132 = vst [vmem:[%s177 + $0xc10] sm:$0xff] %v2620
        %3133 = vst [vmem:[%s177 + $0xc18] sm:$0xff] %v2621
        %3134 = vst [vmem:[%s177 + $0xc20] sm:$0xff] %v2622
        %3135 = vst [vmem:[%s177 + $0xc28] sm:$0xff] %v2623
        %3136 = vst [vmem:[%s177 + $0xc30] sm:$0xff] %v2624
        %3137 = vst [vmem:[%s177 + $0xc38] sm:$0xff] %v2625
        %3138 = vst [vmem:[%s177 + $0xc40] sm:$0xff] %v2626
        %3139 = vst [vmem:[%s177 + $0xc48] sm:$0xff] %v2627
        %3140 = vst [vmem:[%s177 + $0xc50] sm:$0xff] %v2628
        %3141 = vst [vmem:[%s177 + $0xc58] sm:$0xff] %v2629
        %3142 = vst [vmem:[%s177 + $0xc60] sm:$0xff] %v2630
        %3143 = vst [vmem:[%s177 + $0xc68] sm:$0xff] %v2631
        %3144 = vst [vmem:[%s177 + $0xc70] sm:$0xff] %v2632
        %3145 = vst [vmem:[%s177 + $0xc78] sm:$0xff] %v2633
        %3146 = vst [vmem:[%s177 + $0xc80] sm:$0xff] %v2634
        %3147 = vst [vmem:[%s177 + $0xc88] sm:$0xff] %v2635
        %3148 = vst [vmem:[%s177 + $0xc90] sm:$0xff] %v2636
        %3149 = vst [vmem:[%s177 + $0xc98] sm:$0xff] %v2637
        %3150 = vst [vmem:[%s177 + $0xca0] sm:$0xff] %v2638
        %3151 = vst [vmem:[%s177 + $0xca8] sm:$0xff] %v2639
        %3152 = vst [vmem:[%s177 + $0xcb0] sm:$0xff] %v2640
        %3153 = vst [vmem:[%s177 + $0xcb8] sm:$0xff] %v2641
        %3154 = vst [vmem:[%s177 + $0xcc0] sm:$0xff] %v2642
        %3155 = vst [vmem:[%s177 + $0xcc8] sm:$0xff] %v2643
        %3156 = vst [vmem:[%s177 + $0xcd0] sm:$0xff] %v2644
        %3157 = vst [vmem:[%s177 + $0xcd8] sm:$0xff] %v2645
        %3158 = vst [vmem:[%s177 + $0xce0] sm:$0xff] %v2646
        %3159 = vst [vmem:[%s177 + $0xce8] sm:$0xff] %v2647
        %3160 = vst [vmem:[%s177 + $0xcf0] sm:$0xff] %v2648
        %3161 = vst [vmem:[%s177 + $0xcf8] sm:$0xff] %v2649
        %3162 = vst [vmem:[%s177 + $0xd00] sm:$0xff] %v2650
        %3163 = vst [vmem:[%s177 + $0xd08] sm:$0xff] %v2651
        %3164 = vst [vmem:[%s177 + $0xd10] sm:$0xff] %v2652
        %3165 = vst [vmem:[%s177 + $0xd18] sm:$0xff] %v2653
        %3166 = vst [vmem:[%s177 + $0xd20] sm:$0xff] %v2654
        %3167 = vst [vmem:[%s177 + $0xd28] sm:$0xff] %v2655
        %3168 = vst [vmem:[%s177 + $0xd30] sm:$0xff] %v2656
        %3169 = vst [vmem:[%s177 + $0xd38] sm:$0xff] %v2657
        %3170 = vst [vmem:[%s177 + $0xd40] sm:$0xff] %v2658
        %3171 = vst [vmem:[%s177 + $0xd48] sm:$0xff] %v2659
        %3172 = vst [vmem:[%s177 + $0xd50] sm:$0xff] %v2660
        %3173 = vst [vmem:[%s177 + $0xd58] sm:$0xff] %v2661
        %3174 = vst [vmem:[%s177 + $0xd60] sm:$0xff] %v2662
        %3175 = vst [vmem:[%s177 + $0xd68] sm:$0xff] %v2663
        %3176 = vst [vmem:[%s177 + $0xd70] sm:$0xff] %v2664
        %3177 = vst [vmem:[%s177 + $0xd78] sm:$0xff] %v2665
        %3178 = vst [vmem:[%s177 + $0xd80] sm:$0xff] %v2666
        %3179 = vst [vmem:[%s177 + $0xd88] sm:$0xff] %v2667
        %3180 = vst [vmem:[%s177 + $0xd90] sm:$0xff] %v2668
        %3181 = vst [vmem:[%s177 + $0xd98] sm:$0xff] %v2669
        %3182 = vst [vmem:[%s177 + $0xda0] sm:$0xff] %v2670
        %3183 = vst [vmem:[%s177 + $0xda8] sm:$0xff] %v2671
        %3184 = vst [vmem:[%s177 + $0xdb0] sm:$0xff] %v2672
        %3185 = vst [vmem:[%s177 + $0xdb8] sm:$0xff] %v2673
        %3186 = vst [vmem:[%s177 + $0xdc0] sm:$0xff] %v2674
        %3187 = vst [vmem:[%s177 + $0xdc8] sm:$0xff] %v2675
        %3188 = vst [vmem:[%s177 + $0xdd0] sm:$0xff] %v2676
        %3189 = vst [vmem:[%s177 + $0xdd8] sm:$0xff] %v2677
        %3190 = vst [vmem:[%s177 + $0xde0] sm:$0xff] %v2678
        %3191 = vst [vmem:[%s177 + $0xde8] sm:$0xff] %v2679
        %3192 = vst [vmem:[%s177 + $0xdf0] sm:$0xff] %v2680
        %3193 = vst [vmem:[%s177 + $0xdf8] sm:$0xff] %v2681
        %3194 = vst [vmem:[%s177 + $0xe00] sm:$0xff] %v2682
        %3195 = vst [vmem:[%s177 + $0xe08] sm:$0xff] %v2683
        %3196 = vst [vmem:[%s177 + $0xe10] sm:$0xff] %v2684
        %3197 = vst [vmem:[%s177 + $0xe18] sm:$0xff] %v2685
        %3198 = vst [vmem:[%s177 + $0xe20] sm:$0xff] %v2686
        %3199 = vst [vmem:[%s177 + $0xe28] sm:$0xff] %v2687
        %3200 = vst [vmem:[%s177 + $0xe30] sm:$0xff] %v2688
        %3201 = vst [vmem:[%s177 + $0xe38] sm:$0xff] %v2689
        %3202 = vst [vmem:[%s177 + $0xe40] sm:$0xff] %v2690
        %3203 = vst [vmem:[%s177 + $0xe48] sm:$0xff] %v2691
        %3204 = vst [vmem:[%s177 + $0xe50] sm:$0xff] %v2692
        %3205 = vst [vmem:[%s177 + $0xe58] sm:$0xff] %v2693
        %3206 = vst [vmem:[%s177 + $0xe60] sm:$0xff] %v2694
        %3207 = vst [vmem:[%s177 + $0xe68] sm:$0xff] %v2695
        %3208 = vst [vmem:[%s177 + $0xe70] sm:$0xff] %v2696
        %3209 = vst [vmem:[%s177 + $0xe78] sm:$0xff] %v2697
        %3210 = vst [vmem:[%s177 + $0xe80] sm:$0xff] %v2698
        %3211 = vst [vmem:[%s177 + $0xe88] sm:$0xff] %v2699
        %3212 = vst [vmem:[%s177 + $0xe90] sm:$0xff] %v2700
        %3213 = vst [vmem:[%s177 + $0xe98] sm:$0xff] %v2701
        %3214 = vst [vmem:[%s177 + $0xea0] sm:$0xff] %v2702
        %3215 = vst [vmem:[%s177 + $0xea8] sm:$0xff] %v2703
        %3216 = vst [vmem:[%s177 + $0xeb0] sm:$0xff] %v2704
        %3217 = vst [vmem:[%s177 + $0xeb8] sm:$0xff] %v2705
        %3218 = vst [vmem:[%s177 + $0xec0] sm:$0xff] %v2706
        %3219 = vst [vmem:[%s177 + $0xec8] sm:$0xff] %v2707
        %3220 = vst [vmem:[%s177 + $0xed0] sm:$0xff] %v2708
        %3221 = vst [vmem:[%s177 + $0xed8] sm:$0xff] %v2709
        %3222 = vst [vmem:[%s177 + $0xee0] sm:$0xff] %v2710
        %3223 = vst [vmem:[%s177 + $0xee8] sm:$0xff] %v2711
        %3224 = vst [vmem:[%s177 + $0xef0] sm:$0xff] %v2712
        %3225 = vst [vmem:[%s177 + $0xef8] sm:$0xff] %v2713
        %3226 = vst [vmem:[%s177 + $0xf00] sm:$0xff] %v2714
        %3227 = vst [vmem:[%s177 + $0xf08] sm:$0xff] %v2715
        %3228 = vst [vmem:[%s177 + $0xf10] sm:$0xff] %v2716
        %3229 = vst [vmem:[%s177 + $0xf18] sm:$0xff] %v2717
        %3230 = vst [vmem:[%s177 + $0xf20] sm:$0xff] %v2718
        %3231 = vst [vmem:[%s177 + $0xf28] sm:$0xff] %v2719
        %3232 = vst [vmem:[%s177 + $0xf30] sm:$0xff] %v2720
        %3233 = vst [vmem:[%s177 + $0xf38] sm:$0xff] %v2721
        %3234 = vst [vmem:[%s177 + $0xf40] sm:$0xff] %v2722
        %3235 = vst [vmem:[%s177 + $0xf48] sm:$0xff] %v2723
        %3236 = vst [vmem:[%s177 + $0xf50] sm:$0xff] %v2724
        %3237 = vst [vmem:[%s177 + $0xf58] sm:$0xff] %v2725
        %3238 = vst [vmem:[%s177 + $0xf60] sm:$0xff] %v2726
        %3239 = vst [vmem:[%s177 + $0xf68] sm:$0xff] %v2727
        %3240 = vst [vmem:[%s177 + $0xf70] sm:$0xff] %v2728
        %3241 = vst [vmem:[%s177 + $0xf78] sm:$0xff] %v2729
        %3242 = vst [vmem:[%s177 + $0xf80] sm:$0xff] %v2730
        %3243 = vst [vmem:[%s177 + $0xf88] sm:$0xff] %v2731
        %3244 = vst [vmem:[%s177 + $0xf90] sm:$0xff] %v2732
        %3245 = vst [vmem:[%s177 + $0xf98] sm:$0xff] %v2733
        %3246 = vst [vmem:[%s177 + $0xfa0] sm:$0xff] %v2734
        %3247 = vst [vmem:[%s177 + $0xfa8] sm:$0xff] %v2735
        %3248 = vst [vmem:[%s177 + $0xfb0] sm:$0xff] %v2736
        %3249 = vst [vmem:[%s177 + $0xfb8] sm:$0xff] %v2737
        %3250 = vst [vmem:[%s177 + $0xfc0] sm:$0xff] %v2738
        %3251 = vst [vmem:[%s177 + $0xfc8] sm:$0xff] %v2739
        %3252 = vst [vmem:[%s177 + $0xfd0] sm:$0xff] %v2740
        %3253 = vst [vmem:[%s177 + $0xfd8] sm:$0xff] %v2741
        %3254 = vst [vmem:[%s177 + $0xfe0] sm:$0xff] %v2742
        %3255 = vst [vmem:[%s177 + $0xfe8] sm:$0xff] %v2743
        %3256 = vst [vmem:[%s177 + $0xff0] sm:$0xff] %v2744
        %3257 = vst [vmem:[%s177 + $0xff8] sm:$0xff] %v2745
        %s3258 = sand.u32 %s79, 1
        %s3259 = scalar_lea.sflag [#allocation4], %s3258
        %s3260 = sand.u32 %s79, 1
        %s3261 = smul.addr %s3260, 4096
        %s3262 = scalar_lea.vmem [#allocation5], %s3261
        // Predicated region
        $region33: #{tpu_custom_call.1} parent=27 // pred_check
          %p3263 = pneg %p89
        $region34: #{tpu_custom_call.1} parent=27 // pred_check_branch
          %3265 = sbr.rel (%p3263) target = $region36
        $region35: #{tpu_custom_call.1} parent=27 // pred_region
          %s3266 = smul.u32 512, %s19
          %s3268 = ssub.s32 65536, 65536
          %3269 = vsyncadd %s3259, %s3268
          %s3270 = smul.addr %s3266, 128
          %s3271 = scalar_lea.hbm %s2, %s3270
          %s3272 = sshll.u32 %s3262, 4
          %s3273 = int_to_ptr.vmem [resolvable:$true] %s3272
          %3278 = dma.vmem_to_hbm [thread:$0]  %s3273, 65536, %s3271, %s3259, 128, 128, 8
        $region36: #{tpu_custom_call.1} parent=27 // pred_fallthru
          _
      $region28: #{tpu_custom_call.1} parent=5 // pred_fallthru
        _
      %p3279 = scmp.le.s32.totalorder 2, %s14
      // Predicated region
      $region37: #{tpu_custom_call.1} parent=5 // pred_check
        %p3280 = pneg %p3279
      $region38: #{tpu_custom_call.1} parent=5 // pred_check_branch
        %3282 = sbr.rel (%p3280) target = $region40
      $region39: #{tpu_custom_call.1} parent=5 // pred_region
        %s3283 = ssub.s32 %s14, 2
        // Predicated region
        $region41: #{tpu_custom_call.1} parent=39 // pred_check
          %p3284 = pneg %p95
        $region42: #{tpu_custom_call.1} parent=39 // pred_check_branch
          %3286 = sbr.rel (%p3284) target = $region44
        $region43: #{tpu_custom_call.1} parent=39 // pred_region
          %s3287 = sand.u32 %s80, 1
          %s3288 = scalar_lea.sflag [#allocation4], %s3287
          %s3289 = sand.u32 %s80, 1
          %s3290 = smul.addr %s3289, 4096
          %s3291 = scalar_lea.vmem [#allocation5], %s3290
          %3292 = dma.done %s3288, 65536
        $region44: #{tpu_custom_call.1} parent=39 // pred_fallthru
          _
      $region40: #{tpu_custom_call.1} parent=5 // pred_fallthru
        _
    $region6: #{tpu_custom_call.1} parent=1 // loop_footer
      %s18 = sadd.s32 1, %s14
    $region7: #{tpu_custom_call.1} parent=1 // loop_footer_branch
      %13 = sbr.rel target = $region3
    $region8: #{tpu_custom_call.1} parent=1 // loop_exit
      _
    %3293 = vsyncpa [#allocation3], 1
    %s3294 = scalar_lea.sflag [#allocation3], 1
    %3295 = vsyncpa %s3294, 1
    %3296 = vsyncpa [#allocation4], 1
    %s3297 = scalar_lea.sflag [#allocation4], 1
    %3298 = vsyncpa %s3297, 1

</llo_original>
